<compile_context>
chip_gen: v7x
topology: tpu7x:2x2x1
jax: 0.10.0
libtpu: 0.0.40
codegen_flags: <defaults>
</compile_context>

<pallas_src>
import functools

import jax
import jax.numpy as jnp
from jax import lax
from jax.experimental import pallas as pl
from jax.experimental.pallas import tpu as pltpu

BN_EPS = 1e-5
LINEAR_TK = 2048                     # K tile for the (fallback) K-tiled linear
RESIDENT_W_BYTES = 8 * 1024 * 1024   # bf16 weight budget for resident linears
VMEM_LIMIT = 32 * 1024 * 1024        # safe on v5e/v6e (128 MiB) and v7x (64 MiB)


def _round_up(x, m):
    return ((x + m - 1) // m) * m


# ----------------------------- Pallas kernels ------------------------------ #

def conv_fused_kernel(yprev_ref, scale_ref, shift_ref, w_ref, mask_ref,
                      y_ref, stats_ref, patches_ref, *, wp, apply_bn):
    """[previous layer's BN+ReLU] + 3x3 same-conv (one K=9*Cin MXU dot)
    + one-pass BN batch statistics for THIS layer.

    yprev_ref : (Bb, Cin, Qpad) bf16  previous layer's pre-BN output (or the
                zero-padded input image for the first layer), channel-major,
                spatial flattened row-major on the padded (H+2)x(W+2) grid,
                lane-padded to Qpad (multiple of 128).
    scale_ref : (Cin, 1) f32   gamma * rsqrt(var + eps) of the previous layer.
    shift_ref : (Cin, 1) f32   beta - mean * scale (unused if not apply_bn).
    w_ref     : (Cout, 9*Cin) bf16  conv weights, tap-major [(ky,kx), cin].
    mask_ref  : (1, Qpad) f32  1.0 at valid interior pixels else 0.0.
    y_ref     : (Bb, Cout, Qpad) bf16  this layer's pre-BN conv output
                (full-width lane-dense stores; invalid lanes hold don't-care
                finite values that downstream masking ignores).
    stats_ref : (1, Cout, 2) f32  [sum, sum_sq] over this block's valid pixels.
    patches_ref: (9*Cin, Qpad) bf16 VMEM scratch (im2col tile, reused per b).
    """
    bb, cin, qpad = yprev_ref.shape
    cout = y_ref.shape[1]
    mask = mask_ref[...]                                   # (1, Qpad) f32
    x = yprev_ref[...].astype(jnp.float32)                 # (Bb, Cin, Qpad)
    if apply_bn:
        x = jnp.maximum(x * scale_ref[...] + shift_ref[...], 0.0)
    a = (x * mask).astype(jnp.bfloat16)                    # zero at pad/tail
    w = w_ref[...]                                         # (Cout, 9*Cin)

    s_tot = jnp.zeros((cout, 1), jnp.float32)
    ss_tot = jnp.zeros((cout, 1), jnp.float32)
    for b in range(bb):                                    # static unroll
        ab = a[b]                                          # (Cin, Qpad)
        for t in range(9):
            ky, kx = divmod(t, 3)
            sh = (ky - 1) * wp + (kx - 1)                  # in [-(wp+1), wp+1]
            # tap[p] = a[p + sh]; valid outputs never hit the roll wraparound.
            tap = ab if sh == 0 else jnp.roll(ab, -sh, axis=1)
            patches_ref[t * cin:(t + 1) * cin, :] = tap
        yb = jnp.dot(w, patches_ref[...],
                     preferred_element_type=jnp.float32)   # (Cout, Qpad) f32
        y_ref[b] = yb.astype(y_ref.dtype)                  # full-width store
        ym = yb * mask                                     # zero invalid lanes
        s_tot = s_tot + jnp.sum(ym, axis=1, keepdims=True)
        ss_tot = ss_tot + jnp.sum(ym * yb, axis=1, keepdims=True)
    stats_ref[0, :, 0:1] = s_tot
    stats_ref[0, :, 1:2] = ss_tot


def bn_relu_flatten_kernel(y_ref, scale_ref, shift_ref, o_ref, *, h, w, wp):
    """Last conv layer's BN+ReLU, emitted directly as the lane-dense NCHW
    flatten (valid pixels only): o_ref is (Bb, C, H*W) with H*W % 128 == 0."""
    x = y_ref[...].astype(jnp.float32)                     # (Bb, C, Qpad)
    a = jnp.maximum(x * scale_ref[...] + shift_ref[...], 0.0)
    rows = [a[:, :, (r + 1) * wp + 1:(r + 1) * wp + 1 + w] for r in range(h)]
    o_ref[...] = jnp.concatenate(rows, axis=2).astype(o_ref.dtype)


def linear_resident_kernel(x_ref, w_ref, b_ref, o_ref, *, relu):
    """y = x @ w + b (optional ReLU) with the whole weight resident in VMEM."""
    y = jnp.dot(x_ref[...], w_ref[...], preferred_element_type=jnp.float32)
    y = y + b_ref[...]
    if relu:
        y = jnp.maximum(y, 0.0)
    o_ref[...] = y.astype(o_ref.dtype)


def linear_ktiled_kernel(x_ref, w_ref, b_ref, o_ref, acc_ref, *, relu):
    """Fallback for very large K: K-tiled y = x @ w + b, f32 VMEM accumulator."""
    k = pl.program_id(1)

    @pl.when(k == 0)
    def _init():
        acc_ref[...] = jnp.zeros_like(acc_ref)

    acc_ref[...] += jnp.dot(x_ref[...], w_ref[...],
                            preferred_element_type=jnp.float32)

    @pl.when(k == pl.num_programs(1) - 1)
    def _finish():
        y = acc_ref[...] + b_ref[...]
        if relu:
            y = jnp.maximum(y, 0.0)
        o_ref[...] = y.astype(o_ref.dtype)


# ------------------------------- wrappers ----------------------------------- #

def _valid_mask(h, w, qpad):
    hp, wp = h + 2, w + 2
    rows = (jnp.arange(hp) >= 1) & (jnp.arange(hp) <= h)
    cols = (jnp.arange(wp) >= 1) & (jnp.arange(wp) <= w)
    m = (rows[:, None] & cols[None, :]).astype(jnp.float32).reshape(1, hp * wp)
    return jnp.pad(m, ((0, 0), (0, qpad - hp * wp)))


def _pick_block_batch(batch, cin, cout, qpad, budget_bytes=4 * 1024 * 1024):
    """Block batch size: stay within a small VMEM budget (v7x: 64 MiB total,
    32 MiB scoped default) and keep >= 2 grid steps so both v7x TCs get work."""
    per_elem = 2 * 2 * (cin + cout) * qpad * 2   # double-buffered bf16 blocks
    bb = max(1, budget_bytes // max(per_elem, 1))
    if batch >= 2:
        bb = min(bb, batch // 2)
    bb = max(1, min(bb, batch))
    while batch % bb:
        bb -= 1
    return bb


def conv_layer(y_prev, scale, shift, w2, mask, *, apply_bn, wp):
    """One fused [prev BN+ReLU] + Conv(3x3, pad=1) + BN-stats layer."""
    B, cin, qpad = y_prev.shape
    cout = w2.shape[0]
    bb = _pick_block_batch(B, cin, cout, qpad)
    nb = B // bb
    flops = 2 * B * cout * 9 * cin * qpad
    bytes_accessed = (B * (cin + cout) * qpad + cout * 9 * cin) * 2 + 4 * qpad
    return pl.pallas_call(
        functools.partial(conv_fused_kernel, wp=wp, apply_bn=apply_bn),
        grid=(nb,),
        in_specs=[
            pl.BlockSpec((bb, cin, qpad), lambda b: (b, 0, 0)),
            pl.BlockSpec((cin, 1), lambda b: (0, 0)),
            pl.BlockSpec((cin, 1), lambda b: (0, 0)),
            pl.BlockSpec((cout, 9 * cin), lambda b: (0, 0)),
            pl.BlockSpec((1, qpad), lambda b: (0, 0)),
        ],
        out_specs=(
            pl.BlockSpec((bb, cout, qpad), lambda b: (b, 0, 0)),
            pl.BlockSpec((1, cout, 2), lambda b: (b, 0, 0)),
        ),
        out_shape=(
            jax.ShapeDtypeStruct((B, cout, qpad), jnp.bfloat16),
            jax.ShapeDtypeStruct((nb, cout, 2), jnp.float32),
        ),
        scratch_shapes=[pltpu.VMEM((9 * cin, qpad), jnp.bfloat16)],
        compiler_params=pltpu.CompilerParams(
            dimension_semantics=("parallel",),
            vmem_limit_bytes=VMEM_LIMIT),
        cost_estimate=pl.CostEstimate(flops=flops, transcendentals=0,
                                      bytes_accessed=bytes_accessed),
    )(y_prev, scale, shift, w2, mask)


def _bn_finalize(stats, gamma, beta, count):
    """(Cout,)-sized BN finalize: training-mode batch stats, biased variance."""
    tot = jnp.sum(stats, axis=0)                  # (Cout, 2)
    mean = tot[:, 0] / count
    var = jnp.maximum(tot[:, 1] / count - mean * mean, 0.0)
    scale = gamma * lax.rsqrt(var + BN_EPS)
    shift = beta - mean * scale
    return scale.reshape(-1, 1), shift.reshape(-1, 1)


def bn_relu_flatten(y, scale, shift, *, h, w):
    B, C, qpad = y.shape
    wp = w + 2
    bb = _pick_block_batch(B, C, C, qpad)
    nb = B // bb
    return pl.pallas_call(
        functools.partial(bn_relu_flatten_kernel, h=h, w=w, wp=wp),
        grid=(nb,),
        in_specs=[
            pl.BlockSpec((bb, C, qpad), lambda b: (b, 0, 0)),
            pl.BlockSpec((C, 1), lambda b: (0, 0)),
            pl.BlockSpec((C, 1), lambda b: (0, 0)),
        ],
        out_specs=pl.BlockSpec((bb, C, h * w), lambda b: (b, 0, 0)),
        out_shape=jax.ShapeDtypeStruct((B, C, h * w), jnp.bfloat16),
        compiler_params=pltpu.CompilerParams(
            dimension_semantics=("parallel",),
            vmem_limit_bytes=VMEM_LIMIT),
    )(y, scale, shift)


def linear(x, w, b, *, relu, out_dtype):
    """y = x @ w + b; w/b arrive bf16/f32 and lane-padded (N % 128 == 0)."""
    B, K = x.shape
    npad = w.shape[1]
    x = x.astype(jnp.bfloat16)
    bm = B  # single batch block (pad/tile to sublane multiples as B grows)
    nb = B // bm
    flops = 2 * B * K * npad
    if int(w.size) * 2 <= RESIDENT_W_BYTES:
        return pl.pallas_call(
            functools.partial(linear_resident_kernel, relu=relu),
            grid=(nb,),
            in_specs=[
                pl.BlockSpec((bm, K), lambda i: (i, 0)),
                pl.BlockSpec((K, npad), lambda i: (0, 0)),
                pl.BlockSpec((1, npad), lambda i: (0, 0)),
            ],
            out_specs=pl.BlockSpec((bm, npad), lambda i: (i, 0)),
            out_shape=jax.ShapeDtypeStruct((B, npad), out_dtype),
            compiler_params=pltpu.CompilerParams(
                dimension_semantics=("parallel",),
                vmem_limit_bytes=VMEM_LIMIT),
            cost_estimate=pl.CostEstimate(
                flops=flops, transcendentals=0,
                bytes_accessed=(B * K + K * npad) * 2 + B * npad * 4),
        )(x, w, b)
    # Fallback: K-tiled accumulation when the weight is too big to keep resident.
    tk = LINEAR_TK
    kp = _round_up(K, tk)
    if kp != K:  # zero-pad K so the grid tiles exactly (zeros are inert)
        x = jnp.pad(x, ((0, 0), (0, kp - K)))
        w = jnp.pad(w, ((0, kp - K), (0, 0)))
    nk = kp // tk
    return pl.pallas_call(
        functools.partial(linear_ktiled_kernel, relu=relu),
        grid=(nb, nk),
        in_specs=[
            pl.BlockSpec((bm, tk), lambda i, k: (i, k)),
            pl.BlockSpec((tk, npad), lambda i, k: (k, 0)),
            pl.BlockSpec((1, npad), lambda i, k: (0, 0)),
        ],
        out_specs=pl.BlockSpec((bm, npad), lambda i, k: (i, 0)),
        out_shape=jax.ShapeDtypeStruct((B, npad), out_dtype),
        scratch_shapes=[pltpu.VMEM((bm, npad), jnp.float32)],
        compiler_params=pltpu.CompilerParams(
            dimension_semantics=("parallel", "arbitrary"),
            vmem_limit_bytes=VMEM_LIMIT),
        cost_estimate=pl.CostEstimate(
            flops=flops, transcendentals=0,
            bytes_accessed=(B * kp + kp * npad) * 2 + B * npad * 4),
    )(x, w, b)


# ------------------------------ parameters ---------------------------------- #

def init_params(key, in_size, out_classes, channels, hidden_dims):
    """Deterministic synthetic parameters with torch-convention layouts."""
    cin, h, w = in_size
    params = {"convs": [], "linears": []}
    cur = cin
    for c in channels:
        key, k = jax.random.split(key)
        params["convs"].append({
            # torch Conv2d weight layout (Cout, Cin, kh, kw).  The conv bias is
            # omitted: training-mode BatchNorm's mean subtraction cancels it.
            "w": jax.random.normal(k, (c, cur, 3, 3), jnp.float32) * 0.05,
            "gamma": jnp.ones((c,), jnp.float32),
            "beta": jnp.zeros((c,), jnp.float32),
        })
        cur = c
    # _make_feature_extractor never appends a MaxPool -> spatial size unchanged.
    starting_num_features = channels[-1] * h * w
    dims = [starting_num_features] + list(hidden_dims) + [out_classes]
    for i in range(len(dims) - 1):
        key, k = jax.random.split(key)
        params["linears"].append({
            "w": jax.random.normal(k, (dims[i], dims[i + 1]), jnp.float32) * 0.05,
            "b": jnp.zeros((dims[i + 1],), jnp.float32),
        })
    return params


def prepare_params(params):
    """One-time prep: tap-major bf16 conv weights; linear weights/bias padded
    to 128-lane multiples with the padded dims chained through the stack."""
    prepped = {"convs": [], "linears": []}
    for p in params["convs"]:
        cout, cin = p["w"].shape[:2]
        # (Cout, Cin, 3, 3) -> (Cout, 3, 3, Cin) -> (Cout, 9*Cin), tap-major.
        w2 = jnp.transpose(p["w"], (0, 2, 3, 1)).reshape(cout, 9 * cin)
        prepped["convs"].append({
            "w2": w2.astype(jnp.bfloat16),
            "gamma": p["gamma"].astype(jnp.float32),
            "beta": p["beta"].astype(jnp.float32),
        })
    kpad = None
    for i, p in enumerate(params["linears"]):
        K, N = p["w"].shape
        kin = K if i == 0 else kpad          # chain padded dims between layers
        npad = _round_up(N, 128)
        w = jnp.zeros((kin, npad), jnp.float32).at[:K, :N].set(p["w"])
        b = jnp.zeros((1, npad), jnp.float32).at[:, :N].set(p["b"].reshape(1, -1))
        prepped["linears"].append({"w": w.astype(jnp.bfloat16), "b": b})
        kpad = npad
    return prepped


# -------------------------------- forward ----------------------------------- #

def basic_conv_net_forward(params, x_nchw, *, out_classes):
    B, cin, H, W = x_nchw.shape
    hp, wp = H + 2, W + 2
    q = hp * wp
    qpad = _round_up(q, 128)
    mask = _valid_mask(H, W, qpad)  # (1, Qpad) f32, constant

    # Layer-0 activation in the canonical channel-major, lane-dense layout
    # (zero-padded grid, spatial flattened row-major, tail-padded to Qpad).
    # This touches only B*Cin*Q elements once; folding it in-kernel would need
    # an in-kernel (Hp,Wp)->(Hp*Wp) relayout that isn't worth the risk here.
    xe = jnp.pad(x_nchw.astype(jnp.bfloat16), ((0, 0), (0, 0), (1, 1), (1, 1)))
    xe = jnp.pad(xe.reshape(B, cin, q), ((0, 0), (0, 0), (0, qpad - q)))

    y = xe
    scale = jnp.ones((cin, 1), jnp.float32)   # identity prologue for layer 0
    shift = jnp.zeros((cin, 1), jnp.float32)
    apply_bn = False
    cnt = float(B * H * W)
    for p in params["convs"]:
        y, stats = conv_layer(y, scale, shift, p["w2"], mask,
                              apply_bn=apply_bn, wp=wp)
        scale, shift = _bn_finalize(stats, p["gamma"], p["beta"], cnt)
        apply_bn = True

    # Last conv layer: BN + ReLU + NCHW flatten emitted lane-dense in-kernel;
    # reshape below is a contiguous collapse (== torch features.view(B, -1)).
    C = y.shape[1]
    feats = bn_relu_flatten(y, scale, shift, h=H, w=W)     # (B, C, H*W) bf16
    feats = feats.reshape(B, C * H * W)

    n_lin = len(params["linears"])
    for i, p in enumerate(params["linears"]):
        last = i == n_lin - 1
        feats = linear(feats, p["w"], p["b"], relu=not last,
                       out_dtype=jnp.float32 if last else jnp.bfloat16)
    return feats[:, :out_classes]    # drop the final layer's lane padding


# ------------------------------ reference ----------------------------------- #

def reference_forward(raw_params, x):
    """Pure-JAX f32 reference matching the torch module in training mode."""
    y = x
    for p in raw_params["convs"]:
        y = lax.conv_general_dilated(
            y, p["w"], window_strides=(1, 1), padding=((1, 1), (1, 1)),
            dimension_numbers=("NCHW", "OIHW", "NCHW"))
        mean = jnp.mean(y, axis=(0, 2, 3), keepdims=True)
        var = jnp.mean(jnp.square(y - mean), axis=(0, 2, 3), keepdims=True)
        y = (y - mean) * lax.rsqrt(var + BN_EPS)
        y = y * p["gamma"].reshape(1, -1, 1, 1) + p["beta"].reshape(1, -1, 1, 1)
        y = jnp.maximum(y, 0.0)
    feats = y.reshape(y.shape[0], -1)
    n = len(raw_params["linears"])
    for i, p in enumerate(raw_params["linears"]):
        feats = feats @ p["w"] + p["b"]
        if i < n - 1:
            feats = jnp.maximum(feats, 0.0)
    return feats


if __name__ == "__main__":
    # Config consistent with the module: in_size=(4,16,16), channels=[8,16],
    # pool_every=2 (unused: no pool layers are ever built), hidden_dims=[32],
    # out_classes=10, batch=2.
    in_size = (4, 16, 16)
    channels = [8, 16]
    hidden_dims = [32]
    out_classes = 10
    batch = 2

    key = jax.random.PRNGKey(0)
    key, kx = jax.random.split(key)
    x = jax.random.normal(kx, (batch,) + in_size, jnp.float32)  # NCHW

    raw_params = init_params(key, in_size, out_classes, channels, hidden_dims)
    params = prepare_params(raw_params)

    fwd = jax.jit(functools.partial(basic_conv_net_forward,
                                    out_classes=out_classes))
    out = fwd(params, x)
    jax.block_until_ready(out)
    assert out.shape == (batch, out_classes), out.shape
    assert bool(jnp.all(jnp.isfinite(out)))

    # Pure-JAX f32 reference check (loose tolerance: bf16 matmul operands and
    # bf16-stored pre-BN intermediates in the kernel path).
    ref = reference_forward(raw_params, x)
    assert bool(jnp.allclose(out, ref, atol=1e-1, rtol=1e-1)), (
        float(jnp.max(jnp.abs(out - ref))))
    print("KERNEL_OK")
</pallas_src>

<mosaic_0001>
module attributes {stable_mosaic.version = 11 : i64} {
  func.func @conv_fused_kernel(%arg0: i32, %arg1: memref<1x4x384xbf16, #tpu.memory_space<vmem>>, %arg2: memref<4x1xf32, #tpu.memory_space<vmem>>, %arg3: memref<4x1xf32, #tpu.memory_space<vmem>>, %arg4: memref<8x36xbf16, #tpu.memory_space<vmem>>, %arg5: memref<1x384xf32, #tpu.memory_space<vmem>>, %arg6: memref<1x8x384xbf16, #tpu.memory_space<vmem>>, %arg7: memref<1x8x2xf32, #tpu.memory_space<vmem>>, %arg8: memref<36x384xbf16, #tpu.memory_space<vmem>>) attributes {dimension_semantics = [#tpu.dimension_semantics<parallel>], iteration_bounds = array<i64: 2>, scalar_prefetch = 0 : i64, scratch_operands = 1 : i64, tpu.core_type = #tpu.core_type<tc>, window_params = [{transform_indices = @transform_0, window_bounds = array<i64: 1, 4, 384>}, {pipeline_mode = #tpu.pipeline_mode<synchronous>, transform_indices = @transform_1, window_bounds = array<i64: 4, 1>}, {pipeline_mode = #tpu.pipeline_mode<synchronous>, transform_indices = @transform_2, window_bounds = array<i64: 4, 1>}, {pipeline_mode = #tpu.pipeline_mode<synchronous>, transform_indices = @transform_3, window_bounds = array<i64: 8, 36>}, {pipeline_mode = #tpu.pipeline_mode<synchronous>, transform_indices = @transform_4, window_bounds = array<i64: 1, 384>}, {transform_indices = @transform_5, window_bounds = array<i64: 1, 8, 384>}, {transform_indices = @transform_6, window_bounds = array<i64: 1, 8, 2>}]} {
    %c0 = arith.constant 0 : index
    %c0_0 = arith.constant 0 : index
    %0 = vector.load %arg5[%c0, %c0_0] : memref<1x384xf32, #tpu.memory_space<vmem>>, vector<1x384xf32>
    %c0_1 = arith.constant 0 : index
    %c0_2 = arith.constant 0 : index
    %c0_3 = arith.constant 0 : index
    %1 = vector.load %arg1[%c0_1, %c0_2, %c0_3] : memref<1x4x384xbf16, #tpu.memory_space<vmem>>, vector<1x4x384xbf16>
    %2 = arith.extf %1 : vector<1x4x384xbf16> to vector<1x4x384xf32>
    %3 = vector.shape_cast %0 : vector<1x384xf32> to vector<1x1x384xf32>
    %4 = vector.broadcast %3 : vector<1x1x384xf32> to vector<1x4x384xf32>
    %5 = arith.mulf %2, %4 : vector<1x4x384xf32>
    %6 = arith.truncf %5 : vector<1x4x384xf32> to vector<1x4x384xbf16>
    %c0_4 = arith.constant 0 : index
    %c0_5 = arith.constant 0 : index
    %7 = vector.load %arg4[%c0_4, %c0_5] : memref<8x36xbf16, #tpu.memory_space<vmem>>, vector<8x36xbf16>
    %cst = arith.constant 0.000000e+00 : f32
    %8 = vector.broadcast %cst : f32 to vector<8x1xf32>
    %cst_6 = arith.constant 0.000000e+00 : f32
    %9 = vector.broadcast %cst_6 : f32 to vector<8x1xf32>
    %10 = vector.shape_cast %6 : vector<1x4x384xbf16> to vector<4x384xbf16>
    %11 = vector.extract_strided_slice %10 {offsets = [0, 365], sizes = [4, 19], strides = [1, 1]} : vector<4x384xbf16> to vector<4x19xbf16>
    %12 = vector.extract_strided_slice %10 {offsets = [0, 0], sizes = [4, 365], strides = [1, 1]} : vector<4x384xbf16> to vector<4x365xbf16>
    %13 = tpu.concatenate %11, %12 in 1 : vector<4x19xbf16>, vector<4x365xbf16> -> vector<4x384xbf16>
    %c0_7 = arith.constant 0 : index
    %c0_8 = arith.constant 0 : index
    %14 = vector.load %arg8[%c0_7, %c0_8] : memref<36x384xbf16, #tpu.memory_space<vmem>>, vector<4x384xbf16>
    tpu.vector_store %arg8[%c0_7, %c0_8], %13 {strides = array<i32>} : memref<36x384xbf16, #tpu.memory_space<vmem>>, vector<4x384xbf16>,
    %15 = vector.extract_strided_slice %10 {offsets = [0, 366], sizes = [4, 18], strides = [1, 1]} : vector<4x384xbf16> to vector<4x18xbf16>
    %16 = vector.extract_strided_slice %10 {offsets = [0, 0], sizes = [4, 366], strides = [1, 1]} : vector<4x384xbf16> to vector<4x366xbf16>
    %17 = tpu.concatenate %15, %16 in 1 : vector<4x18xbf16>, vector<4x366xbf16> -> vector<4x384xbf16>
    %c4 = arith.constant 4 : index
    %c0_9 = arith.constant 0 : index
    %18 = vector.load %arg8[%c4, %c0_9] : memref<36x384xbf16, #tpu.memory_space<vmem>>, vector<4x384xbf16>
    tpu.vector_store %arg8[%c4, %c0_9], %17 {strides = array<i32>} : memref<36x384xbf16, #tpu.memory_space<vmem>>, vector<4x384xbf16>,
    %19 = vector.extract_strided_slice %10 {offsets = [0, 367], sizes = [4, 17], strides = [1, 1]} : vector<4x384xbf16> to vector<4x17xbf16>
    %20 = vector.extract_strided_slice %10 {offsets = [0, 0], sizes = [4, 367], strides = [1, 1]} : vector<4x384xbf16> to vector<4x367xbf16>
    %21 = tpu.concatenate %19, %20 in 1 : vector<4x17xbf16>, vector<4x367xbf16> -> vector<4x384xbf16>
    %c8 = arith.constant 8 : index
    %c0_10 = arith.constant 0 : index
    %22 = vector.load %arg8[%c8, %c0_10] : memref<36x384xbf16, #tpu.memory_space<vmem>>, vector<4x384xbf16>
    tpu.vector_store %arg8[%c8, %c0_10], %21 {strides = array<i32>} : memref<36x384xbf16, #tpu.memory_space<vmem>>, vector<4x384xbf16>,
    %23 = vector.extract_strided_slice %10 {offsets = [0, 383], sizes = [4, 1], strides = [1, 1]} : vector<4x384xbf16> to vector<4x1xbf16>
    %24 = vector.extract_strided_slice %10 {offsets = [0, 0], sizes = [4, 383], strides = [1, 1]} : vector<4x384xbf16> to vector<4x383xbf16>
    %25 = tpu.concatenate %23, %24 in 1 : vector<4x1xbf16>, vector<4x383xbf16> -> vector<4x384xbf16>
    %c12 = arith.constant 12 : index
    %c0_11 = arith.constant 0 : index
    %26 = vector.load %arg8[%c12, %c0_11] : memref<36x384xbf16, #tpu.memory_space<vmem>>, vector<4x384xbf16>
    tpu.vector_store %arg8[%c12, %c0_11], %25 {strides = array<i32>} : memref<36x384xbf16, #tpu.memory_space<vmem>>, vector<4x384xbf16>,
    %c16 = arith.constant 16 : index
    %c0_12 = arith.constant 0 : index
    %27 = vector.load %arg8[%c16, %c0_12] : memref<36x384xbf16, #tpu.memory_space<vmem>>, vector<4x384xbf16>
    tpu.vector_store %arg8[%c16, %c0_12], %10 {strides = array<i32>} : memref<36x384xbf16, #tpu.memory_space<vmem>>, vector<4x384xbf16>,
    %28 = vector.extract_strided_slice %10 {offsets = [0, 1], sizes = [4, 383], strides = [1, 1]} : vector<4x384xbf16> to vector<4x383xbf16>
    %29 = vector.extract_strided_slice %10 {offsets = [0, 0], sizes = [4, 1], strides = [1, 1]} : vector<4x384xbf16> to vector<4x1xbf16>
    %30 = tpu.concatenate %28, %29 in 1 : vector<4x383xbf16>, vector<4x1xbf16> -> vector<4x384xbf16>
    %c20 = arith.constant 20 : index
    %c0_13 = arith.constant 0 : index
    %31 = vector.load %arg8[%c20, %c0_13] : memref<36x384xbf16, #tpu.memory_space<vmem>>, vector<4x384xbf16>
    tpu.vector_store %arg8[%c20, %c0_13], %30 {strides = array<i32>} : memref<36x384xbf16, #tpu.memory_space<vmem>>, vector<4x384xbf16>,
    %32 = vector.extract_strided_slice %10 {offsets = [0, 17], sizes = [4, 367], strides = [1, 1]} : vector<4x384xbf16> to vector<4x367xbf16>
    %33 = vector.extract_strided_slice %10 {offsets = [0, 0], sizes = [4, 17], strides = [1, 1]} : vector<4x384xbf16> to vector<4x17xbf16>
    %34 = tpu.concatenate %32, %33 in 1 : vector<4x367xbf16>, vector<4x17xbf16> -> vector<4x384xbf16>
    %c24 = arith.constant 24 : index
    %c0_14 = arith.constant 0 : index
    %35 = vector.load %arg8[%c24, %c0_14] : memref<36x384xbf16, #tpu.memory_space<vmem>>, vector<4x384xbf16>
    tpu.vector_store %arg8[%c24, %c0_14], %34 {strides = array<i32>} : memref<36x384xbf16, #tpu.memory_space<vmem>>, vector<4x384xbf16>,
    %36 = vector.extract_strided_slice %10 {offsets = [0, 18], sizes = [4, 366], strides = [1, 1]} : vector<4x384xbf16> to vector<4x366xbf16>
    %37 = vector.extract_strided_slice %10 {offsets = [0, 0], sizes = [4, 18], strides = [1, 1]} : vector<4x384xbf16> to vector<4x18xbf16>
    %38 = tpu.concatenate %36, %37 in 1 : vector<4x366xbf16>, vector<4x18xbf16> -> vector<4x384xbf16>
    %c28 = arith.constant 28 : index
    %c0_15 = arith.constant 0 : index
    %39 = vector.load %arg8[%c28, %c0_15] : memref<36x384xbf16, #tpu.memory_space<vmem>>, vector<4x384xbf16>
    tpu.vector_store %arg8[%c28, %c0_15], %38 {strides = array<i32>} : memref<36x384xbf16, #tpu.memory_space<vmem>>, vector<4x384xbf16>,
    %40 = vector.extract_strided_slice %10 {offsets = [0, 19], sizes = [4, 365], strides = [1, 1]} : vector<4x384xbf16> to vector<4x365xbf16>
    %41 = vector.extract_strided_slice %10 {offsets = [0, 0], sizes = [4, 19], strides = [1, 1]} : vector<4x384xbf16> to vector<4x19xbf16>
    %42 = tpu.concatenate %40, %41 in 1 : vector<4x365xbf16>, vector<4x19xbf16> -> vector<4x384xbf16>
    %c32 = arith.constant 32 : index
    %c0_16 = arith.constant 0 : index
    %43 = vector.load %arg8[%c32, %c0_16] : memref<36x384xbf16, #tpu.memory_space<vmem>>, vector<4x384xbf16>
    tpu.vector_store %arg8[%c32, %c0_16], %42 {strides = array<i32>} : memref<36x384xbf16, #tpu.memory_space<vmem>>, vector<4x384xbf16>,
    %c0_17 = arith.constant 0 : index
    %c0_18 = arith.constant 0 : index
    %44 = vector.load %arg8[%c0_17, %c0_18] : memref<36x384xbf16, #tpu.memory_space<vmem>>, vector<36x384xbf16>
    %cst_19 = arith.constant dense<0.000000e+00> : vector<8x384xf32>
    %45 = tpu.matmul %7, %44, %cst_19 {dimension_numbers = #tpu.dot_dimension_numbers<[1], [0], [0], [1], [0, 0, 1, 1], [], []>} : vector<8x36xbf16>, vector<36x384xbf16>, vector<8x384xf32> -> vector<8x384xf32>
    %46 = arith.truncf %45 : vector<8x384xf32> to vector<8x384xbf16>
    %c0_20 = arith.constant 0 : index
    %c0_21 = arith.constant 0 : index
    %c0_22 = arith.constant 0 : index
    %47 = vector.load %arg6[%c0_20, %c0_21, %c0_22] : memref<1x8x384xbf16, #tpu.memory_space<vmem>>, vector<1x8x384xbf16>
    %48 = vector.shape_cast %47 : vector<1x8x384xbf16> to vector<8x384xbf16>
    %49 = vector.shape_cast %46 : vector<8x384xbf16> to vector<1x8x384xbf16>
    tpu.vector_store %arg6[%c0_20, %c0_21, %c0_22], %49 {strides = array<i32>} : memref<1x8x384xbf16, #tpu.memory_space<vmem>>, vector<1x8x384xbf16>,
    %50 = vector.broadcast %0 : vector<1x384xf32> to vector<8x384xf32>
    %51 = arith.mulf %45, %50 : vector<8x384xf32>
    %cst_23 = arith.constant dense<0.000000e+00> : vector<8xf32>
    %52 = vector.multi_reduction <add>, %51, %cst_23 [1] : vector<8x384xf32> to vector<8xf32>
    %53 = vector.shape_cast %52 : vector<8xf32> to vector<8x1xf32>
    %54 = arith.addf %8, %53 : vector<8x1xf32>
    %55 = arith.mulf %51, %45 : vector<8x384xf32>
    %cst_24 = arith.constant dense<0.000000e+00> : vector<8xf32>
    %56 = vector.multi_reduction <add>, %55, %cst_24 [1] : vector<8x384xf32> to vector<8xf32>
    %57 = vector.shape_cast %56 : vector<8xf32> to vector<8x1xf32>
    %58 = arith.addf %9, %57 : vector<8x1xf32>
    %c0_25 = arith.constant 0 : index
    %c0_26 = arith.constant 0 : index
    %c0_27 = arith.constant 0 : index
    %59 = vector.load %arg7[%c0_25, %c0_26, %c0_27] : memref<1x8x2xf32, #tpu.memory_space<vmem>>, vector<1x8x1xf32>
    %60 = vector.shape_cast %59 : vector<1x8x1xf32> to vector<8x1xf32>
    %61 = vector.shape_cast %54 : vector<8x1xf32> to vector<1x8x1xf32>
    tpu.vector_store %arg7[%c0_25, %c0_26, %c0_27], %61 {strides = array<i32>} : memref<1x8x2xf32, #tpu.memory_space<vmem>>, vector<1x8x1xf32>,
    %c0_28 = arith.constant 0 : index
    %c0_29 = arith.constant 0 : index
    %c1 = arith.constant 1 : index
    %62 = vector.load %arg7[%c0_28, %c0_29, %c1] : memref<1x8x2xf32, #tpu.memory_space<vmem>>, vector<1x8x1xf32>
    %63 = vector.shape_cast %62 : vector<1x8x1xf32> to vector<8x1xf32>
    %64 = vector.shape_cast %58 : vector<8x1xf32> to vector<1x8x1xf32>
    tpu.vector_store %arg7[%c0_28, %c0_29, %c1], %64 {strides = array<i32>} : memref<1x8x2xf32, #tpu.memory_space<vmem>>, vector<1x8x1xf32>,
    return
  }
  func.func @transform_0(%arg0: i32) -> (i32, i32, i32) {
    %c0_i32 = arith.constant 0 : i32
    %c0_i32_0 = arith.constant 0 : i32
    %c0_i32_1 = arith.constant 0 : i32
    return %arg0, %c0_i32, %c0_i32_0 : i32, i32, i32
  }
  func.func @transform_1(%arg0: i32) -> (i32, i32) {
    %c0_i32 = arith.constant 0 : i32
    %c0_i32_0 = arith.constant 0 : i32
    %c0_i32_1 = arith.constant 0 : i32
    return %c0_i32, %c0_i32_0 : i32, i32
  }
  func.func @transform_2(%arg0: i32) -> (i32, i32) {
    %c0_i32 = arith.constant 0 : i32
    %c0_i32_0 = arith.constant 0 : i32
    %c0_i32_1 = arith.constant 0 : i32
    return %c0_i32, %c0_i32_0 : i32, i32
  }
  func.func @transform_3(%arg0: i32) -> (i32, i32) {
    %c0_i32 = arith.constant 0 : i32
    %c0_i32_0 = arith.constant 0 : i32
    %c0_i32_1 = arith.constant 0 : i32
    return %c0_i32, %c0_i32_0 : i32, i32
  }
  func.func @transform_4(%arg0: i32) -> (i32, i32) {
    %c0_i32 = arith.constant 0 : i32
    %c0_i32_0 = arith.constant 0 : i32
    %c0_i32_1 = arith.constant 0 : i32
    return %c0_i32, %c0_i32_0 : i32, i32
  }
  func.func @transform_5(%arg0: i32) -> (i32, i32, i32) {
    %c0_i32 = arith.constant 0 : i32
    %c0_i32_0 = arith.constant 0 : i32
    %c0_i32_1 = arith.constant 0 : i32
    return %arg0, %c0_i32, %c0_i32_0 : i32, i32, i32
  }
  func.func @transform_6(%arg0: i32) -> (i32, i32, i32) {
    %c0_i32 = arith.constant 0 : i32
    %c0_i32_0 = arith.constant 0 : i32
    %c0_i32_1 = arith.constant 0 : i32
    return %arg0, %c0_i32, %c0_i32_0 : i32, i32, i32
  }
}

module attributes {stable_mosaic.version = 11 : i64} {
  func.func @bn_relu_flatten_kernel(%arg0: i32, %arg1: memref<1x16x384xbf16, #tpu.memory_space<vmem>>, %arg2: memref<16x1xf32, #tpu.memory_space<vmem>>, %arg3: memref<16x1xf32, #tpu.memory_space<vmem>>, %arg4: memref<1x16x256xbf16, #tpu.memory_space<vmem>>) attributes {dimension_semantics = [#tpu.dimension_semantics<parallel>], iteration_bounds = array<i64: 2>, scalar_prefetch = 0 : i64, scratch_operands = 0 : i64, tpu.core_type = #tpu.core_type<tc>, window_params = [{transform_indices = @transform_0, window_bounds = array<i64: 1, 16, 384>}, {pipeline_mode = #tpu.pipeline_mode<synchronous>, transform_indices = @transform_1, window_bounds = array<i64: 16, 1>}, {pipeline_mode = #tpu.pipeline_mode<synchronous>, transform_indices = @transform_2, window_bounds = array<i64: 16, 1>}, {transform_indices = @transform_3, window_bounds = array<i64: 1, 16, 256>}]} {
    %c0 = arith.constant 0 : index
    %c0_0 = arith.constant 0 : index
    %c0_1 = arith.constant 0 : index
    %0 = vector.load %arg1[%c0, %c0_0, %c0_1] : memref<1x16x384xbf16, #tpu.memory_space<vmem>>, vector<1x16x384xbf16>
    %1 = arith.extf %0 : vector<1x16x384xbf16> to vector<1x16x384xf32>
    %c0_2 = arith.constant 0 : index
    %c0_3 = arith.constant 0 : index
    %2 = vector.load %arg2[%c0_2, %c0_3] : memref<16x1xf32, #tpu.memory_space<vmem>>, vector<16x1xf32>
    %3 = vector.shape_cast %2 : vector<16x1xf32> to vector<1x16x1xf32>
    %4 = vector.broadcast %3 : vector<1x16x1xf32> to vector<1x16x384xf32>
    %5 = arith.mulf %1, %4 : vector<1x16x384xf32>
    %c0_4 = arith.constant 0 : index
    %c0_5 = arith.constant 0 : index
    %6 = vector.load %arg3[%c0_4, %c0_5] : memref<16x1xf32, #tpu.memory_space<vmem>>, vector<16x1xf32>
    %7 = vector.shape_cast %6 : vector<16x1xf32> to vector<1x16x1xf32>
    %8 = vector.broadcast %7 : vector<1x16x1xf32> to vector<1x16x384xf32>
    %9 = arith.addf %5, %8 : vector<1x16x384xf32>
    %cst = arith.constant 0.000000e+00 : f32
    %10 = vector.broadcast %cst : f32 to vector<1x16x384xf32>
    %11 = arith.maximumf %9, %10 : vector<1x16x384xf32>
    %12 = vector.extract_strided_slice %11 {offsets = [0, 0, 19], sizes = [1, 16, 16], strides = [1, 1, 1]} : vector<1x16x384xf32> to vector<1x16x16xf32>
    %13 = vector.extract_strided_slice %11 {offsets = [0, 0, 37], sizes = [1, 16, 16], strides = [1, 1, 1]} : vector<1x16x384xf32> to vector<1x16x16xf32>
    %14 = vector.extract_strided_slice %11 {offsets = [0, 0, 55], sizes = [1, 16, 16], strides = [1, 1, 1]} : vector<1x16x384xf32> to vector<1x16x16xf32>
    %15 = vector.extract_strided_slice %11 {offsets = [0, 0, 73], sizes = [1, 16, 16], strides = [1, 1, 1]} : vector<1x16x384xf32> to vector<1x16x16xf32>
    %16 = vector.extract_strided_slice %11 {offsets = [0, 0, 91], sizes = [1, 16, 16], strides = [1, 1, 1]} : vector<1x16x384xf32> to vector<1x16x16xf32>
    %17 = vector.extract_strided_slice %11 {offsets = [0, 0, 109], sizes = [1, 16, 16], strides = [1, 1, 1]} : vector<1x16x384xf32> to vector<1x16x16xf32>
    %18 = vector.extract_strided_slice %11 {offsets = [0, 0, 127], sizes = [1, 16, 16], strides = [1, 1, 1]} : vector<1x16x384xf32> to vector<1x16x16xf32>
    %19 = vector.extract_strided_slice %11 {offsets = [0, 0, 145], sizes = [1, 16, 16], strides = [1, 1, 1]} : vector<1x16x384xf32> to vector<1x16x16xf32>
    %20 = vector.extract_strided_slice %11 {offsets = [0, 0, 163], sizes = [1, 16, 16], strides = [1, 1, 1]} : vector<1x16x384xf32> to vector<1x16x16xf32>
    %21 = vector.extract_strided_slice %11 {offsets = [0, 0, 181], sizes = [1, 16, 16], strides = [1, 1, 1]} : vector<1x16x384xf32> to vector<1x16x16xf32>
    %22 = vector.extract_strided_slice %11 {offsets = [0, 0, 199], sizes = [1, 16, 16], strides = [1, 1, 1]} : vector<1x16x384xf32> to vector<1x16x16xf32>
    %23 = vector.extract_strided_slice %11 {offsets = [0, 0, 217], sizes = [1, 16, 16], strides = [1, 1, 1]} : vector<1x16x384xf32> to vector<1x16x16xf32>
    %24 = vector.extract_strided_slice %11 {offsets = [0, 0, 235], sizes = [1, 16, 16], strides = [1, 1, 1]} : vector<1x16x384xf32> to vector<1x16x16xf32>
    %25 = vector.extract_strided_slice %11 {offsets = [0, 0, 253], sizes = [1, 16, 16], strides = [1, 1, 1]} : vector<1x16x384xf32> to vector<1x16x16xf32>
    %26 = vector.extract_strided_slice %11 {offsets = [0, 0, 271], sizes = [1, 16, 16], strides = [1, 1, 1]} : vector<1x16x384xf32> to vector<1x16x16xf32>
    %27 = vector.extract_strided_slice %11 {offsets = [0, 0, 289], sizes = [1, 16, 16], strides = [1, 1, 1]} : vector<1x16x384xf32> to vector<1x16x16xf32>
    %28 = tpu.concatenate %12, %13, %14, %15, %16, %17, %18, %19, %20, %21, %22, %23, %24, %25, %26, %27 in 2 : vector<1x16x16xf32>, vector<1x16x16xf32>, vector<1x16x16xf32>, vector<1x16x16xf32>, vector<1x16x16xf32>, vector<1x16x16xf32>, vector<1x16x16xf32>, vector<1x16x16xf32>, vector<1x16x16xf32>, vector<1x16x16xf32>, vector<1x16x16xf32>, vector<1x16x16xf32>, vector<1x16x16xf32>, vector<1x16x16xf32>, vector<1x16x16xf32>, vector<1x16x16xf32> -> vector<1x16x256xf32>
    %29 = arith.truncf %28 : vector<1x16x256xf32> to vector<1x16x256xbf16>
    %c0_6 = arith.constant 0 : index
    %c0_7 = arith.constant 0 : index
    %c0_8 = arith.constant 0 : index
    %30 = vector.load %arg4[%c0_6, %c0_7, %c0_8] : memref<1x16x256xbf16, #tpu.memory_space<vmem>>, vector<1x16x256xbf16>
    tpu.vector_store %arg4[%c0_6, %c0_7, %c0_8], %29 {strides = array<i32>} : memref<1x16x256xbf16, #tpu.memory_space<vmem>>, vector<1x16x256xbf16>,
    return
  }
  func.func @transform_0(%arg0: i32) -> (i32, i32, i32) {
    %c0_i32 = arith.constant 0 : i32
    %c0_i32_0 = arith.constant 0 : i32
    %c0_i32_1 = arith.constant 0 : i32
    return %arg0, %c0_i32, %c0_i32_0 : i32, i32, i32
  }
  func.func @transform_1(%arg0: i32) -> (i32, i32) {
    %c0_i32 = arith.constant 0 : i32
    %c0_i32_0 = arith.constant 0 : i32
    %c0_i32_1 = arith.constant 0 : i32
    return %c0_i32, %c0_i32_0 : i32, i32
  }
  func.func @transform_2(%arg0: i32) -> (i32, i32) {
    %c0_i32 = arith.constant 0 : i32
    %c0_i32_0 = arith.constant 0 : i32
    %c0_i32_1 = arith.constant 0 : i32
    return %c0_i32, %c0_i32_0 : i32, i32
  }
  func.func @transform_3(%arg0: i32) -> (i32, i32, i32) {
    %c0_i32 = arith.constant 0 : i32
    %c0_i32_0 = arith.constant 0 : i32
    %c0_i32_1 = arith.constant 0 : i32
    return %arg0, %c0_i32, %c0_i32_0 : i32, i32, i32
  }
}

module attributes {stable_mosaic.version = 11 : i64} {
  func.func @conv_fused_kernel(%arg0: i32, %arg1: memref<1x8x384xbf16, #tpu.memory_space<vmem>>, %arg2: memref<8x1xf32, #tpu.memory_space<vmem>>, %arg3: memref<8x1xf32, #tpu.memory_space<vmem>>, %arg4: memref<16x72xbf16, #tpu.memory_space<vmem>>, %arg5: memref<1x384xf32, #tpu.memory_space<vmem>>, %arg6: memref<1x16x384xbf16, #tpu.memory_space<vmem>>, %arg7: memref<1x16x2xf32, #tpu.memory_space<vmem>>, %arg8: memref<72x384xbf16, #tpu.memory_space<vmem>>) attributes {dimension_semantics = [#tpu.dimension_semantics<parallel>], iteration_bounds = array<i64: 2>, scalar_prefetch = 0 : i64, scratch_operands = 1 : i64, tpu.core_type = #tpu.core_type<tc>, window_params = [{transform_indices = @transform_0, window_bounds = array<i64: 1, 8, 384>}, {pipeline_mode = #tpu.pipeline_mode<synchronous>, transform_indices = @transform_1, window_bounds = array<i64: 8, 1>}, {pipeline_mode = #tpu.pipeline_mode<synchronous>, transform_indices = @transform_2, window_bounds = array<i64: 8, 1>}, {pipeline_mode = #tpu.pipeline_mode<synchronous>, transform_indices = @transform_3, window_bounds = array<i64: 16, 72>}, {pipeline_mode = #tpu.pipeline_mode<synchronous>, transform_indices = @transform_4, window_bounds = array<i64: 1, 384>}, {transform_indices = @transform_5, window_bounds = array<i64: 1, 16, 384>}, {transform_indices = @transform_6, window_bounds = array<i64: 1, 16, 2>}]} {
    %c0 = arith.constant 0 : index
    %c0_0 = arith.constant 0 : index
    %0 = vector.load %arg5[%c0, %c0_0] : memref<1x384xf32, #tpu.memory_space<vmem>>, vector<1x384xf32>
    %c0_1 = arith.constant 0 : index
    %c0_2 = arith.constant 0 : index
    %c0_3 = arith.constant 0 : index
    %1 = vector.load %arg1[%c0_1, %c0_2, %c0_3] : memref<1x8x384xbf16, #tpu.memory_space<vmem>>, vector<1x8x384xbf16>
    %2 = arith.extf %1 : vector<1x8x384xbf16> to vector<1x8x384xf32>
    %c0_4 = arith.constant 0 : index
    %c0_5 = arith.constant 0 : index
    %3 = vector.load %arg2[%c0_4, %c0_5] : memref<8x1xf32, #tpu.memory_space<vmem>>, vector<8x1xf32>
    %4 = vector.shape_cast %3 : vector<8x1xf32> to vector<1x8x1xf32>
    %5 = vector.broadcast %4 : vector<1x8x1xf32> to vector<1x8x384xf32>
    %6 = arith.mulf %2, %5 : vector<1x8x384xf32>
    %c0_6 = arith.constant 0 : index
    %c0_7 = arith.constant 0 : index
    %7 = vector.load %arg3[%c0_6, %c0_7] : memref<8x1xf32, #tpu.memory_space<vmem>>, vector<8x1xf32>
    %8 = vector.shape_cast %7 : vector<8x1xf32> to vector<1x8x1xf32>
    %9 = vector.broadcast %8 : vector<1x8x1xf32> to vector<1x8x384xf32>
    %10 = arith.addf %6, %9 : vector<1x8x384xf32>
    %cst = arith.constant 0.000000e+00 : f32
    %11 = vector.broadcast %cst : f32 to vector<1x8x384xf32>
    %12 = arith.maximumf %10, %11 : vector<1x8x384xf32>
    %13 = vector.shape_cast %0 : vector<1x384xf32> to vector<1x1x384xf32>
    %14 = vector.broadcast %13 : vector<1x1x384xf32> to vector<1x8x384xf32>
    %15 = arith.mulf %12, %14 : vector<1x8x384xf32>
    %16 = arith.truncf %15 : vector<1x8x384xf32> to vector<1x8x384xbf16>
    %c0_8 = arith.constant 0 : index
    %c0_9 = arith.constant 0 : index
    %17 = vector.load %arg4[%c0_8, %c0_9] : memref<16x72xbf16, #tpu.memory_space<vmem>>, vector<16x72xbf16>
    %cst_10 = arith.constant 0.000000e+00 : f32
    %18 = vector.broadcast %cst_10 : f32 to vector<16x1xf32>
    %cst_11 = arith.constant 0.000000e+00 : f32
    %19 = vector.broadcast %cst_11 : f32 to vector<16x1xf32>
    %20 = vector.shape_cast %16 : vector<1x8x384xbf16> to vector<8x384xbf16>
    %21 = vector.extract_strided_slice %20 {offsets = [0, 365], sizes = [8, 19], strides = [1, 1]} : vector<8x384xbf16> to vector<8x19xbf16>
    %22 = vector.extract_strided_slice %20 {offsets = [0, 0], sizes = [8, 365], strides = [1, 1]} : vector<8x384xbf16> to vector<8x365xbf16>
    %23 = tpu.concatenate %21, %22 in 1 : vector<8x19xbf16>, vector<8x365xbf16> -> vector<8x384xbf16>
    %c0_12 = arith.constant 0 : index
    %c0_13 = arith.constant 0 : index
    %24 = vector.load %arg8[%c0_12, %c0_13] : memref<72x384xbf16, #tpu.memory_space<vmem>>, vector<8x384xbf16>
    tpu.vector_store %arg8[%c0_12, %c0_13], %23 {strides = array<i32>} : memref<72x384xbf16, #tpu.memory_space<vmem>>, vector<8x384xbf16>,
    %25 = vector.extract_strided_slice %20 {offsets = [0, 366], sizes = [8, 18], strides = [1, 1]} : vector<8x384xbf16> to vector<8x18xbf16>
    %26 = vector.extract_strided_slice %20 {offsets = [0, 0], sizes = [8, 366], strides = [1, 1]} : vector<8x384xbf16> to vector<8x366xbf16>
    %27 = tpu.concatenate %25, %26 in 1 : vector<8x18xbf16>, vector<8x366xbf16> -> vector<8x384xbf16>
    %c8 = arith.constant 8 : index
    %c0_14 = arith.constant 0 : index
    %28 = vector.load %arg8[%c8, %c0_14] : memref<72x384xbf16, #tpu.memory_space<vmem>>, vector<8x384xbf16>
    tpu.vector_store %arg8[%c8, %c0_14], %27 {strides = array<i32>} : memref<72x384xbf16, #tpu.memory_space<vmem>>, vector<8x384xbf16>,
    %29 = vector.extract_strided_slice %20 {offsets = [0, 367], sizes = [8, 17], strides = [1, 1]} : vector<8x384xbf16> to vector<8x17xbf16>
    %30 = vector.extract_strided_slice %20 {offsets = [0, 0], sizes = [8, 367], strides = [1, 1]} : vector<8x384xbf16> to vector<8x367xbf16>
    %31 = tpu.concatenate %29, %30 in 1 : vector<8x17xbf16>, vector<8x367xbf16> -> vector<8x384xbf16>
    %c16 = arith.constant 16 : index
    %c0_15 = arith.constant 0 : index
    %32 = vector.load %arg8[%c16, %c0_15] : memref<72x384xbf16, #tpu.memory_space<vmem>>, vector<8x384xbf16>
    tpu.vector_store %arg8[%c16, %c0_15], %31 {strides = array<i32>} : memref<72x384xbf16, #tpu.memory_space<vmem>>, vector<8x384xbf16>,
    %33 = vector.extract_strided_slice %20 {offsets = [0, 383], sizes = [8, 1], strides = [1, 1]} : vector<8x384xbf16> to vector<8x1xbf16>
    %34 = vector.extract_strided_slice %20 {offsets = [0, 0], sizes = [8, 383], strides = [1, 1]} : vector<8x384xbf16> to vector<8x383xbf16>
    %35 = tpu.concatenate %33, %34 in 1 : vector<8x1xbf16>, vector<8x383xbf16> -> vector<8x384xbf16>
    %c24 = arith.constant 24 : index
    %c0_16 = arith.constant 0 : index
    %36 = vector.load %arg8[%c24, %c0_16] : memref<72x384xbf16, #tpu.memory_space<vmem>>, vector<8x384xbf16>
    tpu.vector_store %arg8[%c24, %c0_16], %35 {strides = array<i32>} : memref<72x384xbf16, #tpu.memory_space<vmem>>, vector<8x384xbf16>,
    %c32 = arith.constant 32 : index
    %c0_17 = arith.constant 0 : index
    %37 = vector.load %arg8[%c32, %c0_17] : memref<72x384xbf16, #tpu.memory_space<vmem>>, vector<8x384xbf16>
    tpu.vector_store %arg8[%c32, %c0_17], %20 {strides = array<i32>} : memref<72x384xbf16, #tpu.memory_space<vmem>>, vector<8x384xbf16>,
    %38 = vector.extract_strided_slice %20 {offsets = [0, 1], sizes = [8, 383], strides = [1, 1]} : vector<8x384xbf16> to vector<8x383xbf16>
    %39 = vector.extract_strided_slice %20 {offsets = [0, 0], sizes = [8, 1], strides = [1, 1]} : vector<8x384xbf16> to vector<8x1xbf16>
    %40 = tpu.concatenate %38, %39 in 1 : vector<8x383xbf16>, vector<8x1xbf16> -> vector<8x384xbf16>
    %c40 = arith.constant 40 : index
    %c0_18 = arith.constant 0 : index
    %41 = vector.load %arg8[%c40, %c0_18] : memref<72x384xbf16, #tpu.memory_space<vmem>>, vector<8x384xbf16>
    tpu.vector_store %arg8[%c40, %c0_18], %40 {strides = array<i32>} : memref<72x384xbf16, #tpu.memory_space<vmem>>, vector<8x384xbf16>,
    %42 = vector.extract_strided_slice %20 {offsets = [0, 17], sizes = [8, 367], strides = [1, 1]} : vector<8x384xbf16> to vector<8x367xbf16>
    %43 = vector.extract_strided_slice %20 {offsets = [0, 0], sizes = [8, 17], strides = [1, 1]} : vector<8x384xbf16> to vector<8x17xbf16>
    %44 = tpu.concatenate %42, %43 in 1 : vector<8x367xbf16>, vector<8x17xbf16> -> vector<8x384xbf16>
    %c48 = arith.constant 48 : index
    %c0_19 = arith.constant 0 : index
    %45 = vector.load %arg8[%c48, %c0_19] : memref<72x384xbf16, #tpu.memory_space<vmem>>, vector<8x384xbf16>
    tpu.vector_store %arg8[%c48, %c0_19], %44 {strides = array<i32>} : memref<72x384xbf16, #tpu.memory_space<vmem>>, vector<8x384xbf16>,
    %46 = vector.extract_strided_slice %20 {offsets = [0, 18], sizes = [8, 366], strides = [1, 1]} : vector<8x384xbf16> to vector<8x366xbf16>
    %47 = vector.extract_strided_slice %20 {offsets = [0, 0], sizes = [8, 18], strides = [1, 1]} : vector<8x384xbf16> to vector<8x18xbf16>
    %48 = tpu.concatenate %46, %47 in 1 : vector<8x366xbf16>, vector<8x18xbf16> -> vector<8x384xbf16>
    %c56 = arith.constant 56 : index
    %c0_20 = arith.constant 0 : index
    %49 = vector.load %arg8[%c56, %c0_20] : memref<72x384xbf16, #tpu.memory_space<vmem>>, vector<8x384xbf16>
    tpu.vector_store %arg8[%c56, %c0_20], %48 {strides = array<i32>} : memref<72x384xbf16, #tpu.memory_space<vmem>>, vector<8x384xbf16>,
    %50 = vector.extract_strided_slice %20 {offsets = [0, 19], sizes = [8, 365], strides = [1, 1]} : vector<8x384xbf16> to vector<8x365xbf16>
    %51 = vector.extract_strided_slice %20 {offsets = [0, 0], sizes = [8, 19], strides = [1, 1]} : vector<8x384xbf16> to vector<8x19xbf16>
    %52 = tpu.concatenate %50, %51 in 1 : vector<8x365xbf16>, vector<8x19xbf16> -> vector<8x384xbf16>
    %c64 = arith.constant 64 : index
    %c0_21 = arith.constant 0 : index
    %53 = vector.load %arg8[%c64, %c0_21] : memref<72x384xbf16, #tpu.memory_space<vmem>>, vector<8x384xbf16>
    tpu.vector_store %arg8[%c64, %c0_21], %52 {strides = array<i32>} : memref<72x384xbf16, #tpu.memory_space<vmem>>, vector<8x384xbf16>,
    %c0_22 = arith.constant 0 : index
    %c0_23 = arith.constant 0 : index
    %54 = vector.load %arg8[%c0_22, %c0_23] : memref<72x384xbf16, #tpu.memory_space<vmem>>, vector<72x384xbf16>
    %cst_24 = arith.constant dense<0.000000e+00> : vector<16x384xf32>
    %55 = tpu.matmul %17, %54, %cst_24 {dimension_numbers = #tpu.dot_dimension_numbers<[1], [0], [0], [1], [0, 0, 1, 1], [], []>} : vector<16x72xbf16>, vector<72x384xbf16>, vector<16x384xf32> -> vector<16x384xf32>
    %56 = arith.truncf %55 : vector<16x384xf32> to vector<16x384xbf16>
    %c0_25 = arith.constant 0 : index
    %c0_26 = arith.constant 0 : index
    %c0_27 = arith.constant 0 : index
    %57 = vector.load %arg6[%c0_25, %c0_26, %c0_27] : memref<1x16x384xbf16, #tpu.memory_space<vmem>>, vector<1x16x384xbf16>
    %58 = vector.shape_cast %57 : vector<1x16x384xbf16> to vector<16x384xbf16>
    %59 = vector.shape_cast %56 : vector<16x384xbf16> to vector<1x16x384xbf16>
    tpu.vector_store %arg6[%c0_25, %c0_26, %c0_27], %59 {strides = array<i32>} : memref<1x16x384xbf16, #tpu.memory_space<vmem>>, vector<1x16x384xbf16>,
    %60 = vector.broadcast %0 : vector<1x384xf32> to vector<16x384xf32>
    %61 = arith.mulf %55, %60 : vector<16x384xf32>
    %cst_28 = arith.constant dense<0.000000e+00> : vector<16xf32>
    %62 = vector.multi_reduction <add>, %61, %cst_28 [1] : vector<16x384xf32> to vector<16xf32>
    %63 = vector.shape_cast %62 : vector<16xf32> to vector<16x1xf32>
    %64 = arith.addf %18, %63 : vector<16x1xf32>
    %65 = arith.mulf %61, %55 : vector<16x384xf32>
    %cst_29 = arith.constant dense<0.000000e+00> : vector<16xf32>
    %66 = vector.multi_reduction <add>, %65, %cst_29 [1] : vector<16x384xf32> to vector<16xf32>
    %67 = vector.shape_cast %66 : vector<16xf32> to vector<16x1xf32>
    %68 = arith.addf %19, %67 : vector<16x1xf32>
    %c0_30 = arith.constant 0 : index
    %c0_31 = arith.constant 0 : index
    %c0_32 = arith.constant 0 : index
    %69 = vector.load %arg7[%c0_30, %c0_31, %c0_32] : memref<1x16x2xf32, #tpu.memory_space<vmem>>, vector<1x16x1xf32>
    %70 = vector.shape_cast %69 : vector<1x16x1xf32> to vector<16x1xf32>
    %71 = vector.shape_cast %64 : vector<16x1xf32> to vector<1x16x1xf32>
    tpu.vector_store %arg7[%c0_30, %c0_31, %c0_32], %71 {strides = array<i32>} : memref<1x16x2xf32, #tpu.memory_space<vmem>>, vector<1x16x1xf32>,
    %c0_33 = arith.constant 0 : index
    %c0_34 = arith.constant 0 : index
    %c1 = arith.constant 1 : index
    %72 = vector.load %arg7[%c0_33, %c0_34, %c1] : memref<1x16x2xf32, #tpu.memory_space<vmem>>, vector<1x16x1xf32>
    %73 = vector.shape_cast %72 : vector<1x16x1xf32> to vector<16x1xf32>
    %74 = vector.shape_cast %68 : vector<16x1xf32> to vector<1x16x1xf32>
    tpu.vector_store %arg7[%c0_33, %c0_34, %c1], %74 {strides = array<i32>} : memref<1x16x2xf32, #tpu.memory_space<vmem>>, vector<1x16x1xf32>,
    return
  }
  func.func @transform_0(%arg0: i32) -> (i32, i32, i32) {
    %c0_i32 = arith.constant 0 : i32
    %c0_i32_0 = arith.constant 0 : i32
    %c0_i32_1 = arith.constant 0 : i32
    return %arg0, %c0_i32, %c0_i32_0 : i32, i32, i32
  }
  func.func @transform_1(%arg0: i32) -> (i32, i32) {
    %c0_i32 = arith.constant 0 : i32
    %c0_i32_0 = arith.constant 0 : i32
    %c0_i32_1 = arith.constant 0 : i32
    return %c0_i32, %c0_i32_0 : i32, i32
  }
  func.func @transform_2(%arg0: i32) -> (i32, i32) {
    %c0_i32 = arith.constant 0 : i32
    %c0_i32_0 = arith.constant 0 : i32
    %c0_i32_1 = arith.constant 0 : i32
    return %c0_i32, %c0_i32_0 : i32, i32
  }
  func.func @transform_3(%arg0: i32) -> (i32, i32) {
    %c0_i32 = arith.constant 0 : i32
    %c0_i32_0 = arith.constant 0 : i32
    %c0_i32_1 = arith.constant 0 : i32
    return %c0_i32, %c0_i32_0 : i32, i32
  }
  func.func @transform_4(%arg0: i32) -> (i32, i32) {
    %c0_i32 = arith.constant 0 : i32
    %c0_i32_0 = arith.constant 0 : i32
    %c0_i32_1 = arith.constant 0 : i32
    return %c0_i32, %c0_i32_0 : i32, i32
  }
  func.func @transform_5(%arg0: i32) -> (i32, i32, i32) {
    %c0_i32 = arith.constant 0 : i32
    %c0_i32_0 = arith.constant 0 : i32
    %c0_i32_1 = arith.constant 0 : i32
    return %arg0, %c0_i32, %c0_i32_0 : i32, i32, i32
  }
  func.func @transform_6(%arg0: i32) -> (i32, i32, i32) {
    %c0_i32 = arith.constant 0 : i32
    %c0_i32_0 = arith.constant 0 : i32
    %c0_i32_1 = arith.constant 0 : i32
    return %arg0, %c0_i32, %c0_i32_0 : i32, i32, i32
  }
}

module attributes {stable_mosaic.version = 11 : i64} {
  func.func @linear_resident_kernel(%arg0: i32, %arg1: memref<2x4096xbf16, #tpu.memory_space<vmem>>, %arg2: memref<4096x128xbf16, #tpu.memory_space<vmem>>, %arg3: memref<1x128xf32, #tpu.memory_space<vmem>>, %arg4: memref<2x128xbf16, #tpu.memory_space<vmem>>) attributes {dimension_semantics = [#tpu.dimension_semantics<parallel>], iteration_bounds = array<i64: 1>, scalar_prefetch = 0 : i64, scratch_operands = 0 : i64, tpu.core_type = #tpu.core_type<tc>, window_params = [{transform_indices = @transform_0, window_bounds = array<i64: 2, 4096>}, {pipeline_mode = #tpu.pipeline_mode<synchronous>, transform_indices = @transform_1, window_bounds = array<i64: 4096, 128>}, {pipeline_mode = #tpu.pipeline_mode<synchronous>, transform_indices = @transform_2, window_bounds = array<i64: 1, 128>}, {transform_indices = @transform_3, window_bounds = array<i64: 2, 128>}]} {
    %c0 = arith.constant 0 : index
    %c0_0 = arith.constant 0 : index
    %0 = vector.load %arg1[%c0, %c0_0] : memref<2x4096xbf16, #tpu.memory_space<vmem>>, vector<2x4096xbf16>
    %c0_1 = arith.constant 0 : index
    %c0_2 = arith.constant 0 : index
    %1 = vector.load %arg2[%c0_1, %c0_2] : memref<4096x128xbf16, #tpu.memory_space<vmem>>, vector<4096x128xbf16>
    %cst = arith.constant dense<0.000000e+00> : vector<2x128xf32>
    %2 = tpu.matmul %0, %1, %cst {dimension_numbers = #tpu.dot_dimension_numbers<[1], [0], [0], [1], [0, 0, 1, 1], [], []>} : vector<2x4096xbf16>, vector<4096x128xbf16>, vector<2x128xf32> -> vector<2x128xf32>
    %c0_3 = arith.constant 0 : index
    %c0_4 = arith.constant 0 : index
    %3 = vector.load %arg3[%c0_3, %c0_4] : memref<1x128xf32, #tpu.memory_space<vmem>>, vector<1x128xf32>
    %4 = vector.broadcast %3 : vector<1x128xf32> to vector<2x128xf32>
    %5 = arith.addf %2, %4 : vector<2x128xf32>
    %cst_5 = arith.constant 0.000000e+00 : f32
    %6 = vector.broadcast %cst_5 : f32 to vector<2x128xf32>
    %7 = arith.maximumf %5, %6 : vector<2x128xf32>
    %8 = arith.truncf %7 : vector<2x128xf32> to vector<2x128xbf16>
    %c0_6 = arith.constant 0 : index
    %c0_7 = arith.constant 0 : index
    %9 = vector.load %arg4[%c0_6, %c0_7] : memref<2x128xbf16, #tpu.memory_space<vmem>>, vector<2x128xbf16>
    tpu.vector_store %arg4[%c0_6, %c0_7], %8 {strides = array<i32>} : memref<2x128xbf16, #tpu.memory_space<vmem>>, vector<2x128xbf16>,
    return
  }
  func.func @transform_0(%arg0: i32) -> (i32, i32) {
    %c0_i32 = arith.constant 0 : i32
    %c0_i32_0 = arith.constant 0 : i32
    return %arg0, %c0_i32 : i32, i32
  }
  func.func @transform_1(%arg0: i32) -> (i32, i32) {
    %c0_i32 = arith.constant 0 : i32
    %c0_i32_0 = arith.constant 0 : i32
    %c0_i32_1 = arith.constant 0 : i32
    return %c0_i32, %c0_i32_0 : i32, i32
  }
  func.func @transform_2(%arg0: i32) -> (i32, i32) {
    %c0_i32 = arith.constant 0 : i32
    %c0_i32_0 = arith.constant 0 : i32
    %c0_i32_1 = arith.constant 0 : i32
    return %c0_i32, %c0_i32_0 : i32, i32
  }
  func.func @transform_3(%arg0: i32) -> (i32, i32) {
    %c0_i32 = arith.constant 0 : i32
    %c0_i32_0 = arith.constant 0 : i32
    return %arg0, %c0_i32 : i32, i32
  }
}

module attributes {stable_mosaic.version = 11 : i64} {
  func.func @linear_resident_kernel(%arg0: i32, %arg1: memref<2x128xbf16, #tpu.memory_space<vmem>>, %arg2: memref<128x128xbf16, #tpu.memory_space<vmem>>, %arg3: memref<1x128xf32, #tpu.memory_space<vmem>>, %arg4: memref<2x128xf32, #tpu.memory_space<vmem>>) attributes {dimension_semantics = [#tpu.dimension_semantics<parallel>], iteration_bounds = array<i64: 1>, scalar_prefetch = 0 : i64, scratch_operands = 0 : i64, tpu.core_type = #tpu.core_type<tc>, window_params = [{transform_indices = @transform_0, window_bounds = array<i64: 2, 128>}, {pipeline_mode = #tpu.pipeline_mode<synchronous>, transform_indices = @transform_1, window_bounds = array<i64: 128, 128>}, {pipeline_mode = #tpu.pipeline_mode<synchronous>, transform_indices = @transform_2, window_bounds = array<i64: 1, 128>}, {transform_indices = @transform_3, window_bounds = array<i64: 2, 128>}]} {
    %c0 = arith.constant 0 : index
    %c0_0 = arith.constant 0 : index
    %0 = vector.load %arg1[%c0, %c0_0] : memref<2x128xbf16, #tpu.memory_space<vmem>>, vector<2x128xbf16>
    %c0_1 = arith.constant 0 : index
    %c0_2 = arith.constant 0 : index
    %1 = vector.load %arg2[%c0_1, %c0_2] : memref<128x128xbf16, #tpu.memory_space<vmem>>, vector<128x128xbf16>
    %cst = arith.constant dense<0.000000e+00> : vector<2x128xf32>
    %2 = tpu.matmul %0, %1, %cst {dimension_numbers = #tpu.dot_dimension_numbers<[1], [0], [0], [1], [0, 0, 1, 1], [], []>} : vector<2x128xbf16>, vector<128x128xbf16>, vector<2x128xf32> -> vector<2x128xf32>
    %c0_3 = arith.constant 0 : index
    %c0_4 = arith.constant 0 : index
    %3 = vector.load %arg3[%c0_3, %c0_4] : memref<1x128xf32, #tpu.memory_space<vmem>>, vector<1x128xf32>
    %4 = vector.broadcast %3 : vector<1x128xf32> to vector<2x128xf32>
    %5 = arith.addf %2, %4 : vector<2x128xf32>
    %c0_5 = arith.constant 0 : index
    %c0_6 = arith.constant 0 : index
    %6 = vector.load %arg4[%c0_5, %c0_6] : memref<2x128xf32, #tpu.memory_space<vmem>>, vector<2x128xf32>
    tpu.vector_store %arg4[%c0_5, %c0_6], %5 {strides = array<i32>} : memref<2x128xf32, #tpu.memory_space<vmem>>, vector<2x128xf32>,
    return
  }
  func.func @transform_0(%arg0: i32) -> (i32, i32) {
    %c0_i32 = arith.constant 0 : i32
    %c0_i32_0 = arith.constant 0 : i32
    return %arg0, %c0_i32 : i32, i32
  }
  func.func @transform_1(%arg0: i32) -> (i32, i32) {
    %c0_i32 = arith.constant 0 : i32
    %c0_i32_0 = arith.constant 0 : i32
    %c0_i32_1 = arith.constant 0 : i32
    return %c0_i32, %c0_i32_0 : i32, i32
  }
  func.func @transform_2(%arg0: i32) -> (i32, i32) {
    %c0_i32 = arith.constant 0 : i32
    %c0_i32_0 = arith.constant 0 : i32
    %c0_i32_1 = arith.constant 0 : i32
    return %c0_i32, %c0_i32_0 : i32, i32
  }
  func.func @transform_3(%arg0: i32) -> (i32, i32) {
    %c0_i32 = arith.constant 0 : i32
    %c0_i32_0 = arith.constant 0 : i32
    return %arg0, %c0_i32 : i32, i32
  }
}

</mosaic_0001>

<llo_original>
// kernel: basic_conv_net_forward.7
$region0: #{basic_conv_net_forward.7}
  #allocation0 [shape = 'u32[]', space=smem, size = 0x4, offset = 0x4, fixed_abs, tag = 'smem constant byte address 0x4 - core index']
  #allocation1 [shape = 'u32[144,128]{1,0:T(1,128)}', space=vmem, size = 0x12000, scoped, tag = 'internal scratch']
  %s0 = inlined_call_operand.vmem [shape: bf16[2,16,384], index: 0, kind: input, shape index: {}]
  %s1 = inlined_call_operand.vmem [shape: f32[16,1], index: 1, kind: input, shape index: {}]
  %s2 = inlined_call_operand.vmem [shape: f32[16,1], index: 2, kind: input, shape index: {}]
  %s3 = inlined_call_operand.vmem [shape: bf16[2,16,256], index: 3, kind: output, shape index: {}]
  %s4 = sld [smem:[#allocation0]]
  $region45: #{basic_conv_net_forward.7} parent=0
    _
  %s6 = ssub.s32 1, %s4
  %s7 = scalar_select 0, %s6, %s4
  loop: start=0, step=1, limit=4
  $region2: #{basic_conv_net_forward.7} parent=0 // loop_pre_header
    _
  $region3: #{basic_conv_net_forward.7} parent=0 // loop_header
    %s9 = sphi 0, %s13
    %p10 = scmp.ge.s32.totalorder %s9, 4
    %s19 = sphi 0, %s21
    %s22 = sphi 0, %s19
    %s23 = sphi 0, %s22
    %s39 = sphi 0, %s23
    %s43 = sphi 0, %s43
    %s45 = sphi 0, %s43
    %s46 = sphi 0, %s45
    %s60 = sphi 0, %s46
    %s64 = sphi 0, %s64
    %s66 = sphi 0, %s64
    %s67 = sphi 0, %s66
    %s81 = sphi 0, %s67
    %s87 = sphi 0, %s89
    %s90 = sphi 0, %s87
    %s91 = sphi 0, %s90
    %s107 = sphi 0, %s91
  $region4: #{basic_conv_net_forward.7} parent=0 // loop_header_branch
    %12 = sbr.rel (%p10) target = $region8
  $region5: #{basic_conv_net_forward.7} parent=0 // loop_body
    %s14 = ssub.s32 %s9, 1
    %s15 = ssub.s32 %s9, 2
    %s16 = sadd.s32 %s9, 1
    %s17 = ssub.s32 %s9, %s16
    %p18 = scmp.eq.s32.totalorder %s17, 0
    %s20 = sadd.s32 %s19, 1
    %s21 = scalar_select %p18, %s19, %s20
    %p24 = pneg %p18
    %p25 = scmp.eq.s32.totalorder %s9, 1
    %p26 = por %p24, %p25
    %p27 = scmp.ne.s32.totalorder %s19, %s22
    %p28 = scmp.eq.s32.totalorder %s9, 0
    %p29 = por %p27, %p28
    %p30 = scmp.ne.s32.totalorder %s19, %s22
    %p31 = scmp.eq.s32.totalorder %s14, 1
    %p32 = por %p30, %p31
    %p33 = scmp.ne.s32.totalorder %s22, %s23
    %p34 = scmp.eq.s32.totalorder %s14, 0
    %p35 = por %p33, %p34
    %p36 = scmp.ne.s32.totalorder %s22, %s23
    %p37 = scmp.eq.s32.totalorder %s15, 1
    %p38 = por %p36, %p37
    %p40 = scmp.ne.s32.totalorder %s23, %s39
    %p41 = scmp.eq.s32.totalorder %s15, 0
    %p42 = por %p40, %p41
    %s44 = sadd.s32 %s43, 1
    %p47 = scmp.eq.s32.totalorder %s9, 1
    %p48 = scmp.ne.s32.totalorder %s43, %s45
    %p49 = scmp.eq.s32.totalorder %s9, 0
    %p50 = por %p48, %p49
    %p51 = scmp.ne.s32.totalorder %s43, %s45
    %p52 = scmp.eq.s32.totalorder %s14, 1
    %p53 = por %p51, %p52
    %p54 = scmp.ne.s32.totalorder %s45, %s46
    %p55 = scmp.eq.s32.totalorder %s14, 0
    %p56 = por %p54, %p55
    %p57 = scmp.ne.s32.totalorder %s45, %s46
    %p58 = scmp.eq.s32.totalorder %s15, 1
    %p59 = por %p57, %p58
    %p61 = scmp.ne.s32.totalorder %s46, %s60
    %p62 = scmp.eq.s32.totalorder %s15, 0
    %p63 = por %p61, %p62
    %s65 = sadd.s32 %s64, 1
    %p68 = scmp.eq.s32.totalorder %s9, 1
    %p69 = scmp.ne.s32.totalorder %s64, %s66
    %p70 = scmp.eq.s32.totalorder %s9, 0
    %p71 = por %p69, %p70
    %p72 = scmp.ne.s32.totalorder %s64, %s66
    %p73 = scmp.eq.s32.totalorder %s14, 1
    %p74 = por %p72, %p73
    %p75 = scmp.ne.s32.totalorder %s66, %s67
    %p76 = scmp.eq.s32.totalorder %s14, 0
    %p77 = por %p75, %p76
    %p78 = scmp.ne.s32.totalorder %s66, %s67
    %p79 = scmp.eq.s32.totalorder %s15, 1
    %p80 = por %p78, %p79
    %p82 = scmp.ne.s32.totalorder %s67, %s81
    %p83 = scmp.eq.s32.totalorder %s15, 0
    %p84 = por %p82, %p83
    %s85 = ssub.s32 %s9, %s16
    %p86 = scmp.eq.s32.totalorder %s85, 0
    %s88 = sadd.s32 %s87, 1
    %s89 = scalar_select %p86, %s87, %s88
    %p92 = pneg %p86
    %p93 = scmp.eq.s32.totalorder %s9, 1
    %p94 = por %p92, %p93
    %p95 = scmp.ne.s32.totalorder %s87, %s90
    %p96 = scmp.eq.s32.totalorder %s9, 0
    %p97 = por %p95, %p96
    %p98 = scmp.ne.s32.totalorder %s87, %s90
    %p99 = scmp.eq.s32.totalorder %s14, 1
    %p100 = por %p98, %p99
    %p101 = scmp.ne.s32.totalorder %s90, %s91
    %p102 = scmp.eq.s32.totalorder %s14, 0
    %p103 = por %p101, %p102
    %p104 = scmp.ne.s32.totalorder %s90, %s91
    %p105 = scmp.eq.s32.totalorder %s15, 1
    %p106 = por %p104, %p105
    %p108 = scmp.ne.s32.totalorder %s91, %s107
    %p109 = scmp.eq.s32.totalorder %s15, 0
    %p110 = por %p108, %p109
    %p111 = scmp.le.s32.totalorder 1, %s9
    %p112 = scmp.lt.s32.totalorder %s9, 3
    %p113 = pnand %p111, %p112
    %p114 = pneg %p113
    // Predicated region
    $region9: #{basic_conv_net_forward.7} parent=5 // pred_check
      _
    $region10: #{basic_conv_net_forward.7} parent=5 // pred_check_branch
      %116 = sbr.rel (%p113) target = $region12
    $region11: #{basic_conv_net_forward.7} parent=5 // pred_region
      %s117 = ssub.s32 %s9, 1
      // Predicated region
      $region13: #{basic_conv_net_forward.7} parent=11 // pred_check
        %p118 = pneg %p56
      $region14: #{basic_conv_net_forward.7} parent=11 // pred_check_branch
        %120 = sbr.rel (%p118) target = $region16
      $region15: #{basic_conv_net_forward.7} parent=11 // pred_region
        _
      $region16: #{basic_conv_net_forward.7} parent=11 // pred_fallthru
        _
      // Predicated region
      $region17: #{basic_conv_net_forward.7} parent=11 // pred_check
        %p121 = pneg %p77
      $region18: #{basic_conv_net_forward.7} parent=11 // pred_check_branch
        %123 = sbr.rel (%p121) target = $region20
      $region19: #{basic_conv_net_forward.7} parent=11 // pred_region
        _
      $region20: #{basic_conv_net_forward.7} parent=11 // pred_fallthru
        _
    $region12: #{basic_conv_net_forward.7} parent=5 // pred_fallthru
      _
    %p124 = scmp.lt.s32.totalorder %s9, 2
    // Predicated region
    $region21: #{basic_conv_net_forward.7} parent=5 // pred_check
      %p125 = pneg %p124
    $region22: #{basic_conv_net_forward.7} parent=5 // pred_check_branch
      %127 = sbr.rel (%p125) target = $region24
    $region23: #{basic_conv_net_forward.7} parent=5 // pred_region
      // Predicated region
      $region25: #{basic_conv_net_forward.7} parent=23 // pred_check
        %p128 = pneg %p29
      $region26: #{basic_conv_net_forward.7} parent=23 // pred_check_branch
        %130 = sbr.rel (%p128) target = $region28
      $region27: #{basic_conv_net_forward.7} parent=23 // pred_region
        %p131 = scmp.lt.s32.totalorder %s9, 1
        %s132 = scalar_select %p131, %s9, 1
        %s133 = smul.addr %s132, 6
        %s134 = smul.addr %s133, 4
        %s135 = scalar_lea.vmem %s0, %s134
      $region28: #{basic_conv_net_forward.7} parent=23 // pred_fallthru
        _
    $region24: #{basic_conv_net_forward.7} parent=5 // pred_fallthru
      _
    %p136 = scmp.le.s32.totalorder 1, %s9
    %p137 = scmp.lt.s32.totalorder %s9, 3
    %p138 = pnand %p136, %p137
    %p139 = pneg %p138
    // Predicated region
    $region29: #{basic_conv_net_forward.7} parent=5 // pred_check
      _
    $region30: #{basic_conv_net_forward.7} parent=5 // pred_check_branch
      %141 = sbr.rel (%p138) target = $region32
    $region31: #{basic_conv_net_forward.7} parent=5 // pred_region
      %s142 = ssub.s32 %s9, 1
      %p143 = scmp.lt.s32.totalorder %s14, 1
      %s144 = scalar_select %p143, %s14, 1
      %s145 = smul.addr %s144, 6
      %s146 = smul.addr %s145, 4
      %s147 = scalar_lea.vmem %s0, %s146
      %p148 = pneg %p35
      %p149 = pneg %p32
      %p150 = pneg %p56
      %p151 = pneg %p53
      %p152 = pneg %p77
      %p153 = pneg %p74
      %p154 = pneg %p103
      %p155 = pneg %p100
      %p156 = scmp.lt.s32.totalorder %s14, 1
      %s157 = scalar_select %p156, %s14, 1
      %s158 = smul.addr %s157, 4
      %s159 = smul.addr %s158, 4
      %s160 = scalar_lea.vmem %s3, %s159
      %p161 = scmp.lt.s32.totalorder %s14, 1
      %s162 = scalar_select %p161, %s14, 1
      %s163 = smul.addr %s162, 6
      %s164 = smul.addr %s163, 4
      %s165 = scalar_lea.vmem %s0, %s164
      %p166 = scmp.lt.s32.totalorder %s14, 1
      %s167 = scalar_select %p166, %s14, 1
      %s168 = smul.addr %s167, 4
      %s169 = smul.addr %s168, 4
      %s170 = scalar_lea.vmem %s3, %s169
      %v171 = vld [vmem:[%s165] sm:$0xff]
      %v172 = vld [vmem:[%s165 + $0x8] sm:$0xf]
      %v173 = vld [vmem:[%s165 + $0xc] sm:$0xff]
      %v174 = vld [vmem:[%s165 + $0x14] sm:$0xf]
      %v175 = vunpack.c.l.bf16 %v171
      %v176 = vunpack.c.h.bf16 %v171
      %v177 = vunpack.c.l.bf16 %v172
      %v178 = vunpack.c.l.bf16 %v173
      %v179 = vunpack.c.h.bf16 %v173
      %v180 = vunpack.c.l.bf16 %v174
      %v181 = vld [vmem:[%s1] sm:$0xff]
      %v182 = vld [vmem:[%s1 + $0x8] sm:$0xff]
      %184 = vset.pattern.permute.xlu0 0
      %185 = vperm.xlu0 %184, %v181
      %v186 = vpop.permute.xlu0 %185
      %189 = vset.pattern.permute.xlu0 0
      %190 = vperm.xlu0 %189, %v182
      %v191 = vpop.permute.xlu0 %190
      %v193 = vmul.f32 %v175, %v186
      %v194 = vmul.f32 %v176, %v186
      %v195 = vmul.f32 %v177, %v186
      %v196 = vmul.f32 %v178, %v191
      %v197 = vmul.f32 %v179, %v191
      %v198 = vmul.f32 %v180, %v191
      %v199 = vld [vmem:[%s2] sm:$0xff]
      %v200 = vld [vmem:[%s2 + $0x8] sm:$0xff]
      %202 = vset.pattern.permute.xlu0 0
      %203 = vperm.xlu0 %202, %v199
      %v204 = vpop.permute.xlu0 %203
      %207 = vset.pattern.permute.xlu0 0
      %208 = vperm.xlu0 %207, %v200
      %v209 = vpop.permute.xlu0 %208
      %v211 = vadd.f32 %v193, %v204
      %v212 = vadd.f32 %v194, %v204
      %v213 = vadd.f32 %v195, %v204
      %v214 = vadd.f32 %v196, %v209
      %v215 = vadd.f32 %v197, %v209
      %v216 = vadd.f32 %v198, %v209
      %v217 = vmax.f32 %v211, 0.0
      %v218 = vmax.f32 %v212, 0.0
      %v219 = vmax.f32 %v213, 0.0
      %v220 = vmax.f32 %v214, 0.0
      %v221 = vmax.f32 %v215, 0.0
      %v222 = vmax.f32 %v216, 0.0
      %225 = vrot.lane.b32.xlu0 %v217, 109
      %v226 = vpop.permute.xlu0 %225
      %227 = vrot.lane.b32.xlu0 %v220, 109
      %v228 = vpop.permute.xlu0 %227
      %231 = vrot.lane.b32.xlu0 %v217, 107
      %v232 = vpop.permute.xlu0 %231
      %233 = vrot.lane.b32.xlu0 %v220, 107
      %v234 = vpop.permute.xlu0 %233
      %237 = vrot.lane.b32.xlu0 %v217, 105
      %v238 = vpop.permute.xlu0 %237
      %239 = vrot.lane.b32.xlu0 %v220, 105
      %v240 = vpop.permute.xlu0 %239
      %243 = vrot.lane.b32.xlu0 %v217, 103
      %v244 = vpop.permute.xlu0 %243
      %245 = vrot.lane.b32.xlu0 %v220, 103
      %v246 = vpop.permute.xlu0 %245
      %249 = vrot.lane.b32.xlu0 %v217, 101
      %v250 = vpop.permute.xlu0 %249
      %251 = vrot.lane.b32.xlu0 %v220, 101
      %v252 = vpop.permute.xlu0 %251
      %255 = vrot.lane.b32.xlu0 %v217, 99
      %v256 = vpop.permute.xlu0 %255
      %257 = vrot.lane.b32.xlu0 %v220, 99
      %v258 = vpop.permute.xlu0 %257
      %263 = vrot.lane.b32.xlu0 %v217, 97
      %v264 = vpop.permute.xlu0 %263
      %265 = vrot.lane.b32.xlu0 %v218, 97
      %v266 = vpop.permute.xlu0 %265
      %267 = vrot.lane.b32.xlu0 %v220, 97
      %v268 = vpop.permute.xlu0 %267
      %269 = vrot.lane.b32.xlu0 %v221, 97
      %v270 = vpop.permute.xlu0 %269
      %vm271 = vcmask 793600
      %v272 = vsel %vm271, %v264, %v266
      %v273 = vsel %vm271, %v268, %v270
      %276 = vrot.lane.b32.xlu0 %v218, 95
      %v277 = vpop.permute.xlu0 %276
      %278 = vrot.lane.b32.xlu0 %v221, 95
      %v279 = vpop.permute.xlu0 %278
      %282 = vrot.lane.b32.xlu0 %v218, 93
      %v283 = vpop.permute.xlu0 %282
      %284 = vrot.lane.b32.xlu0 %v221, 93
      %v285 = vpop.permute.xlu0 %284
      %288 = vrot.lane.b32.xlu0 %v218, 91
      %v289 = vpop.permute.xlu0 %288
      %290 = vrot.lane.b32.xlu0 %v221, 91
      %v291 = vpop.permute.xlu0 %290
      %294 = vrot.lane.b32.xlu0 %v218, 89
      %v295 = vpop.permute.xlu0 %294
      %296 = vrot.lane.b32.xlu0 %v221, 89
      %v297 = vpop.permute.xlu0 %296
      %300 = vrot.lane.b32.xlu0 %v218, 87
      %v301 = vpop.permute.xlu0 %300
      %302 = vrot.lane.b32.xlu0 %v221, 87
      %v303 = vpop.permute.xlu0 %302
      %306 = vrot.lane.b32.xlu0 %v218, 85
      %v307 = vpop.permute.xlu0 %306
      %308 = vrot.lane.b32.xlu0 %v221, 85
      %v309 = vpop.permute.xlu0 %308
      %314 = vrot.lane.b32.xlu0 %v218, 83
      %v315 = vpop.permute.xlu0 %314
      %316 = vrot.lane.b32.xlu0 %v219, 83
      %v317 = vpop.permute.xlu0 %316
      %318 = vrot.lane.b32.xlu0 %v221, 83
      %v319 = vpop.permute.xlu0 %318
      %320 = vrot.lane.b32.xlu0 %v222, 83
      %v321 = vpop.permute.xlu0 %320
      %vm322 = vcmask 678912
      %v323 = vsel %vm322, %v315, %v317
      %v324 = vsel %vm322, %v319, %v321
      %327 = vrot.lane.b32.xlu0 %v219, 81
      %v328 = vpop.permute.xlu0 %327
      %329 = vrot.lane.b32.xlu0 %v222, 81
      %v330 = vpop.permute.xlu0 %329
      %333 = vrot.lane.b32.xlu0 %v219, 79
      %v334 = vpop.permute.xlu0 %333
      %335 = vrot.lane.b32.xlu0 %v222, 79
      %v336 = vpop.permute.xlu0 %335
      %vm339 = vcmask 130048
      %v340 = vsel %vm339, %v226, %v232
      %v341 = vsel %vm339, %v228, %v234
      %vm342 = vcmask 261120
      %v343 = vsel %vm342, %v340, %v238
      %v344 = vsel %vm342, %v341, %v240
      %vm345 = vcmask 392192
      %v346 = vsel %vm345, %v343, %v244
      %v347 = vsel %vm345, %v344, %v246
      %vm348 = vcmask 523264
      %v349 = vsel %vm348, %v346, %v250
      %v350 = vsel %vm348, %v347, %v252
      %vm351 = vcmask 654336
      %v352 = vsel %vm351, %v349, %v256
      %v353 = vsel %vm351, %v350, %v258
      %vm354 = vcmask 785408
      %v355 = vsel %vm354, %v352, %v272
      %v356 = vsel %vm354, %v353, %v273
      %vm357 = vcmask 916480
      %v358 = vsel %vm357, %v355, %v277
      %v359 = vsel %vm357, %v356, %v279
      %v360 = vsel %vm339, %v283, %v289
      %v361 = vsel %vm339, %v285, %v291
      %v362 = vsel %vm342, %v360, %v295
      %v363 = vsel %vm342, %v361, %v297
      %v364 = vsel %vm345, %v362, %v301
      %v365 = vsel %vm345, %v363, %v303
      %v366 = vsel %vm348, %v364, %v307
      %v367 = vsel %vm348, %v365, %v309
      %v368 = vsel %vm351, %v366, %v323
      %v369 = vsel %vm351, %v367, %v324
      %v370 = vsel %vm354, %v368, %v328
      %v371 = vsel %vm354, %v369, %v330
      %v372 = vsel %vm357, %v370, %v334
      %v373 = vsel %vm357, %v371, %v336
      %v374 = vpack.c.bf16 %v359, %v358
      %v375 = vpack.c.bf16 %v373, %v372
      %v378 = vunpack.c.l.b16 %v374
      %v379 = vunpack.c.l.b16 %v375
      %v380 = vunpack.c.h.b16 %v374
      %v381 = vunpack.c.h.b16 %v375
      %v382 = vpack.c.b16 %v379, %v378
      %v383 = vpack.c.b16 %v381, %v380
      %386 = vst [vmem:[%s170] sm:$0xff] %v382
      %387 = vst [vmem:[%s170 + $0x8] sm:$0xff] %v383
      %p388 = scmp.lt.s32.totalorder %s14, 1
      %s389 = scalar_select %p388, %s14, 1
      %s390 = smul.addr %s389, 4
      %s391 = smul.addr %s390, 4
      %s392 = scalar_lea.vmem %s3, %s391
      // Predicated region
      $region33: #{basic_conv_net_forward.7} parent=31 // pred_check
        %p393 = pneg %p100
      $region34: #{basic_conv_net_forward.7} parent=31 // pred_check_branch
        %395 = sbr.rel (%p393) target = $region36
      $region35: #{basic_conv_net_forward.7} parent=31 // pred_region
        _
      $region36: #{basic_conv_net_forward.7} parent=31 // pred_fallthru
        _
    $region32: #{basic_conv_net_forward.7} parent=5 // pred_fallthru
      _
    %p396 = scmp.le.s32.totalorder 2, %s9
    // Predicated region
    $region37: #{basic_conv_net_forward.7} parent=5 // pred_check
      %p397 = pneg %p396
    $region38: #{basic_conv_net_forward.7} parent=5 // pred_check_branch
      %399 = sbr.rel (%p397) target = $region40
    $region39: #{basic_conv_net_forward.7} parent=5 // pred_region
      %s400 = ssub.s32 %s9, 2
      // Predicated region
      $region41: #{basic_conv_net_forward.7} parent=39 // pred_check
        %p401 = pneg %p106
      $region42: #{basic_conv_net_forward.7} parent=39 // pred_check_branch
        %403 = sbr.rel (%p401) target = $region44
      $region43: #{basic_conv_net_forward.7} parent=39 // pred_region
        %p404 = scmp.lt.s32.totalorder %s15, 1
        %s405 = scalar_select %p404, %s15, 1
        %s406 = smul.addr %s405, 4
        %s407 = smul.addr %s406, 4
        %s408 = scalar_lea.vmem %s3, %s407
      $region44: #{basic_conv_net_forward.7} parent=39 // pred_fallthru
        _
    $region40: #{basic_conv_net_forward.7} parent=5 // pred_fallthru
      _
  $region6: #{basic_conv_net_forward.7} parent=0 // loop_footer
    %s13 = sadd.s32 1, %s9
  $region7: #{basic_conv_net_forward.7} parent=0 // loop_footer_branch
    %8 = sbr.rel target = $region3
  $region8: #{basic_conv_net_forward.7} parent=0 // loop_exit
    _

// kernel: basic_conv_net_forward.5
$region0: #{basic_conv_net_forward.5}
  #allocation0 [shape = 'u32[]', space=smem, size = 0x4, offset = 0x4, fixed_abs, tag = 'smem constant byte address 0x4 - core index']
  #allocation1 [shape = 'u32[144,128]{1,0:T(1,128)}', space=vmem, size = 0x12000, scoped, tag = 'internal scratch']
  #allocation2 [shape = 'bf16[36,384]{1,0:T(8,128)(2,1)}', space=vmem, size = 0x7800, scoped, tag = 'scratch operand']
  %s0 = inlined_call_operand.vmem [shape: bf16[2,4,384], index: 0, kind: input, shape index: {}]
  %s1 = inlined_call_operand.vmem [shape: f32[4,1], index: 1, kind: input, shape index: {}]
  %s2 = inlined_call_operand.vmem [shape: f32[4,1], index: 2, kind: input, shape index: {}]
  %s3 = inlined_call_operand.vmem [shape: bf16[8,36], index: 3, kind: input, shape index: {}]
  %s4 = inlined_call_operand.vmem [shape: f32[1,384], index: 4, kind: input, shape index: {}]
  %s5 = inlined_call_operand.vmem [shape: bf16[2,8,384], index: 5, kind: output, shape index: {0}]
  %s6 = inlined_call_operand.vmem [shape: f32[2,8,2], index: 6, kind: output, shape index: {1}]
  %7 = xla_tuple %s5, %s6
  %s8 = sld [smem:[#allocation0]]
  $region61: #{basic_conv_net_forward.5} parent=0
    _
  %s10 = ssub.s32 1, %s8
  %s11 = scalar_select 0, %s10, %s8
  loop: start=0, step=1, limit=4
  $region2: #{basic_conv_net_forward.5} parent=0 // loop_pre_header
    _
  $region3: #{basic_conv_net_forward.5} parent=0 // loop_header
    %s13 = sphi 0, %s17
    %p14 = scmp.ge.s32.totalorder %s13, 4
    %s23 = sphi 0, %s25
    %s26 = sphi 0, %s23
    %s27 = sphi 0, %s26
    %s43 = sphi 0, %s27
    %s47 = sphi 0, %s47
    %s49 = sphi 0, %s47
    %s50 = sphi 0, %s49
    %s64 = sphi 0, %s50
    %s68 = sphi 0, %s68
    %s70 = sphi 0, %s68
    %s71 = sphi 0, %s70
    %s85 = sphi 0, %s71
    %s89 = sphi 0, %s89
    %s91 = sphi 0, %s89
    %s92 = sphi 0, %s91
    %s106 = sphi 0, %s92
    %s110 = sphi 0, %s110
    %s112 = sphi 0, %s110
    %s113 = sphi 0, %s112
    %s127 = sphi 0, %s113
    %s133 = sphi 0, %s135
    %s136 = sphi 0, %s133
    %s137 = sphi 0, %s136
    %s153 = sphi 0, %s137
    %s159 = sphi 0, %s161
    %s162 = sphi 0, %s159
    %s163 = sphi 0, %s162
    %s179 = sphi 0, %s163
  $region4: #{basic_conv_net_forward.5} parent=0 // loop_header_branch
    %16 = sbr.rel (%p14) target = $region8
  $region5: #{basic_conv_net_forward.5} parent=0 // loop_body
    %s18 = ssub.s32 %s13, 1
    %s19 = ssub.s32 %s13, 2
    %s20 = sadd.s32 %s13, 1
    %s21 = ssub.s32 %s13, %s20
    %p22 = scmp.eq.s32.totalorder %s21, 0
    %s24 = sadd.s32 %s23, 1
    %s25 = scalar_select %p22, %s23, %s24
    %p28 = pneg %p22
    %p29 = scmp.eq.s32.totalorder %s13, 1
    %p30 = por %p28, %p29
    %p31 = scmp.ne.s32.totalorder %s23, %s26
    %p32 = scmp.eq.s32.totalorder %s13, 0
    %p33 = por %p31, %p32
    %p34 = scmp.ne.s32.totalorder %s23, %s26
    %p35 = scmp.eq.s32.totalorder %s18, 1
    %p36 = por %p34, %p35
    %p37 = scmp.ne.s32.totalorder %s26, %s27
    %p38 = scmp.eq.s32.totalorder %s18, 0
    %p39 = por %p37, %p38
    %p40 = scmp.ne.s32.totalorder %s26, %s27
    %p41 = scmp.eq.s32.totalorder %s19, 1
    %p42 = por %p40, %p41
    %p44 = scmp.ne.s32.totalorder %s27, %s43
    %p45 = scmp.eq.s32.totalorder %s19, 0
    %p46 = por %p44, %p45
    %s48 = sadd.s32 %s47, 1
    %p51 = scmp.eq.s32.totalorder %s13, 1
    %p52 = scmp.ne.s32.totalorder %s47, %s49
    %p53 = scmp.eq.s32.totalorder %s13, 0
    %p54 = por %p52, %p53
    %p55 = scmp.ne.s32.totalorder %s47, %s49
    %p56 = scmp.eq.s32.totalorder %s18, 1
    %p57 = por %p55, %p56
    %p58 = scmp.ne.s32.totalorder %s49, %s50
    %p59 = scmp.eq.s32.totalorder %s18, 0
    %p60 = por %p58, %p59
    %p61 = scmp.ne.s32.totalorder %s49, %s50
    %p62 = scmp.eq.s32.totalorder %s19, 1
    %p63 = por %p61, %p62
    %p65 = scmp.ne.s32.totalorder %s50, %s64
    %p66 = scmp.eq.s32.totalorder %s19, 0
    %p67 = por %p65, %p66
    %s69 = sadd.s32 %s68, 1
    %p72 = scmp.eq.s32.totalorder %s13, 1
    %p73 = scmp.ne.s32.totalorder %s68, %s70
    %p74 = scmp.eq.s32.totalorder %s13, 0
    %p75 = por %p73, %p74
    %p76 = scmp.ne.s32.totalorder %s68, %s70
    %p77 = scmp.eq.s32.totalorder %s18, 1
    %p78 = por %p76, %p77
    %p79 = scmp.ne.s32.totalorder %s70, %s71
    %p80 = scmp.eq.s32.totalorder %s18, 0
    %p81 = por %p79, %p80
    %p82 = scmp.ne.s32.totalorder %s70, %s71
    %p83 = scmp.eq.s32.totalorder %s19, 1
    %p84 = por %p82, %p83
    %p86 = scmp.ne.s32.totalorder %s71, %s85
    %p87 = scmp.eq.s32.totalorder %s19, 0
    %p88 = por %p86, %p87
    %s90 = sadd.s32 %s89, 1
    %p93 = scmp.eq.s32.totalorder %s13, 1
    %p94 = scmp.ne.s32.totalorder %s89, %s91
    %p95 = scmp.eq.s32.totalorder %s13, 0
    %p96 = por %p94, %p95
    %p97 = scmp.ne.s32.totalorder %s89, %s91
    %p98 = scmp.eq.s32.totalorder %s18, 1
    %p99 = por %p97, %p98
    %p100 = scmp.ne.s32.totalorder %s91, %s92
    %p101 = scmp.eq.s32.totalorder %s18, 0
    %p102 = por %p100, %p101
    %p103 = scmp.ne.s32.totalorder %s91, %s92
    %p104 = scmp.eq.s32.totalorder %s19, 1
    %p105 = por %p103, %p104
    %p107 = scmp.ne.s32.totalorder %s92, %s106
    %p108 = scmp.eq.s32.totalorder %s19, 0
    %p109 = por %p107, %p108
    %s111 = sadd.s32 %s110, 1
    %p114 = scmp.eq.s32.totalorder %s13, 1
    %p115 = scmp.ne.s32.totalorder %s110, %s112
    %p116 = scmp.eq.s32.totalorder %s13, 0
    %p117 = por %p115, %p116
    %p118 = scmp.ne.s32.totalorder %s110, %s112
    %p119 = scmp.eq.s32.totalorder %s18, 1
    %p120 = por %p118, %p119
    %p121 = scmp.ne.s32.totalorder %s112, %s113
    %p122 = scmp.eq.s32.totalorder %s18, 0
    %p123 = por %p121, %p122
    %p124 = scmp.ne.s32.totalorder %s112, %s113
    %p125 = scmp.eq.s32.totalorder %s19, 1
    %p126 = por %p124, %p125
    %p128 = scmp.ne.s32.totalorder %s113, %s127
    %p129 = scmp.eq.s32.totalorder %s19, 0
    %p130 = por %p128, %p129
    %s131 = ssub.s32 %s13, %s20
    %p132 = scmp.eq.s32.totalorder %s131, 0
    %s134 = sadd.s32 %s133, 1
    %s135 = scalar_select %p132, %s133, %s134
    %p138 = pneg %p132
    %p139 = scmp.eq.s32.totalorder %s13, 1
    %p140 = por %p138, %p139
    %p141 = scmp.ne.s32.totalorder %s133, %s136
    %p142 = scmp.eq.s32.totalorder %s13, 0
    %p143 = por %p141, %p142
    %p144 = scmp.ne.s32.totalorder %s133, %s136
    %p145 = scmp.eq.s32.totalorder %s18, 1
    %p146 = por %p144, %p145
    %p147 = scmp.ne.s32.totalorder %s136, %s137
    %p148 = scmp.eq.s32.totalorder %s18, 0
    %p149 = por %p147, %p148
    %p150 = scmp.ne.s32.totalorder %s136, %s137
    %p151 = scmp.eq.s32.totalorder %s19, 1
    %p152 = por %p150, %p151
    %p154 = scmp.ne.s32.totalorder %s137, %s153
    %p155 = scmp.eq.s32.totalorder %s19, 0
    %p156 = por %p154, %p155
    %s157 = ssub.s32 %s13, %s20
    %p158 = scmp.eq.s32.totalorder %s157, 0
    %s160 = sadd.s32 %s159, 1
    %s161 = scalar_select %p158, %s159, %s160
    %p164 = pneg %p158
    %p165 = scmp.eq.s32.totalorder %s13, 1
    %p166 = por %p164, %p165
    %p167 = scmp.ne.s32.totalorder %s159, %s162
    %p168 = scmp.eq.s32.totalorder %s13, 0
    %p169 = por %p167, %p168
    %p170 = scmp.ne.s32.totalorder %s159, %s162
    %p171 = scmp.eq.s32.totalorder %s18, 1
    %p172 = por %p170, %p171
    %p173 = scmp.ne.s32.totalorder %s162, %s163
    %p174 = scmp.eq.s32.totalorder %s18, 0
    %p175 = por %p173, %p174
    %p176 = scmp.ne.s32.totalorder %s162, %s163
    %p177 = scmp.eq.s32.totalorder %s19, 1
    %p178 = por %p176, %p177
    %p180 = scmp.ne.s32.totalorder %s163, %s179
    %p181 = scmp.eq.s32.totalorder %s19, 0
    %p182 = por %p180, %p181
    %p183 = scmp.le.s32.totalorder 1, %s13
    %p184 = scmp.lt.s32.totalorder %s13, 3
    %p185 = pnand %p183, %p184
    %p186 = pneg %p185
    // Predicated region
    $region9: #{basic_conv_net_forward.5} parent=5 // pred_check
      _
    $region10: #{basic_conv_net_forward.5} parent=5 // pred_check_branch
      %188 = sbr.rel (%p185) target = $region12
    $region11: #{basic_conv_net_forward.5} parent=5 // pred_region
      %s189 = ssub.s32 %s13, 1
      // Predicated region
      $region13: #{basic_conv_net_forward.5} parent=11 // pred_check
        %p190 = pneg %p60
      $region14: #{basic_conv_net_forward.5} parent=11 // pred_check_branch
        %192 = sbr.rel (%p190) target = $region16
      $region15: #{basic_conv_net_forward.5} parent=11 // pred_region
        _
      $region16: #{basic_conv_net_forward.5} parent=11 // pred_fallthru
        _
      // Predicated region
      $region17: #{basic_conv_net_forward.5} parent=11 // pred_check
        %p193 = pneg %p81
      $region18: #{basic_conv_net_forward.5} parent=11 // pred_check_branch
        %195 = sbr.rel (%p193) target = $region20
      $region19: #{basic_conv_net_forward.5} parent=11 // pred_region
        _
      $region20: #{basic_conv_net_forward.5} parent=11 // pred_fallthru
        _
      // Predicated region
      $region21: #{basic_conv_net_forward.5} parent=11 // pred_check
        %p196 = pneg %p102
      $region22: #{basic_conv_net_forward.5} parent=11 // pred_check_branch
        %198 = sbr.rel (%p196) target = $region24
      $region23: #{basic_conv_net_forward.5} parent=11 // pred_region
        _
      $region24: #{basic_conv_net_forward.5} parent=11 // pred_fallthru
        _
      // Predicated region
      $region25: #{basic_conv_net_forward.5} parent=11 // pred_check
        %p199 = pneg %p123
      $region26: #{basic_conv_net_forward.5} parent=11 // pred_check_branch
        %201 = sbr.rel (%p199) target = $region28
      $region27: #{basic_conv_net_forward.5} parent=11 // pred_region
        _
      $region28: #{basic_conv_net_forward.5} parent=11 // pred_fallthru
        _
    $region12: #{basic_conv_net_forward.5} parent=5 // pred_fallthru
      _
    %p202 = scmp.lt.s32.totalorder %s13, 2
    // Predicated region
    $region29: #{basic_conv_net_forward.5} parent=5 // pred_check
      %p203 = pneg %p202
    $region30: #{basic_conv_net_forward.5} parent=5 // pred_check_branch
      %205 = sbr.rel (%p203) target = $region32
    $region31: #{basic_conv_net_forward.5} parent=5 // pred_region
      // Predicated region
      $region33: #{basic_conv_net_forward.5} parent=31 // pred_check
        %p206 = pneg %p33
      $region34: #{basic_conv_net_forward.5} parent=31 // pred_check_branch
        %208 = sbr.rel (%p206) target = $region36
      $region35: #{basic_conv_net_forward.5} parent=31 // pred_region
        %p209 = scmp.lt.s32.totalorder %s13, 1
        %s210 = scalar_select %p209, %s13, 1
        %s211 = smul.addr %s210, 3
        %s212 = smul.addr %s211, 2
        %s213 = scalar_lea.vmem %s0, %s212
      $region36: #{basic_conv_net_forward.5} parent=31 // pred_fallthru
        _
    $region32: #{basic_conv_net_forward.5} parent=5 // pred_fallthru
      _
    %p214 = scmp.le.s32.totalorder 1, %s13
    %p215 = scmp.lt.s32.totalorder %s13, 3
    %p216 = pnand %p214, %p215
    %p217 = pneg %p216
    // Predicated region
    $region37: #{basic_conv_net_forward.5} parent=5 // pred_check
      _
    $region38: #{basic_conv_net_forward.5} parent=5 // pred_check_branch
      %219 = sbr.rel (%p216) target = $region40
    $region39: #{basic_conv_net_forward.5} parent=5 // pred_region
      %s220 = ssub.s32 %s13, 1
      %p221 = scmp.lt.s32.totalorder %s18, 1
      %s222 = scalar_select %p221, %s18, 1
      %s223 = smul.addr %s222, 3
      %s224 = smul.addr %s223, 2
      %s225 = scalar_lea.vmem %s0, %s224
      %p226 = pneg %p39
      %p227 = pneg %p36
      %p228 = pneg %p60
      %p229 = pneg %p57
      %p230 = pneg %p81
      %p231 = pneg %p78
      %p232 = pneg %p102
      %p233 = pneg %p99
      %p234 = pneg %p123
      %p235 = pneg %p120
      %p236 = pneg %p149
      %p237 = pneg %p146
      %p238 = scmp.lt.s32.totalorder %s18, 1
      %s239 = scalar_select %p238, %s18, 1
      %s240 = smul.addr %s239, 3
      %s241 = smul.addr %s240, 4
      %s242 = scalar_lea.vmem %s5, %s241
      %p243 = pneg %p175
      %p244 = pneg %p172
      %p245 = scmp.lt.s32.totalorder %s18, 1
      %s246 = scalar_select %p245, %s18, 1
      %s247 = smul.addr %s246, 8
      %s248 = scalar_lea.vmem %s6, %s247
      %p249 = scmp.lt.s32.totalorder %s18, 1
      %s250 = scalar_select %p249, %s18, 1
      %s251 = smul.addr %s250, 3
      %s252 = smul.addr %s251, 2
      %s253 = scalar_lea.vmem %s0, %s252
      %p254 = scmp.lt.s32.totalorder %s18, 1
      %s255 = scalar_select %p254, %s18, 1
      %s256 = smul.addr %s255, 3
      %s257 = smul.addr %s256, 4
      %s258 = scalar_lea.vmem %s5, %s257
      %p259 = scmp.lt.s32.totalorder %s18, 1
      %s260 = scalar_select %p259, %s18, 1
      %s261 = smul.addr %s260, 8
      %s262 = scalar_lea.vmem %s6, %s261
      %v264 = vld [vmem:[%s4] sm:$0x7]
      %v265 = vld [vmem:[%s253] sm:$0x3f]
      %v266 = vunpack.c.l.bf16 %v265
      %v267 = vunpack.c.h.bf16 %v265
      %v269 = vlaneseq
      %v270 = vshrl.u32 %v269, 7
      %v271 = vsub.s32 0, %v270
      %v272 = vrot.slane %v264, %v271
      %v273 = vlaneseq
      %v274 = vshrl.u32 %v273, 7
      %v275 = vsub.s32 1, %v274
      %v276 = vrot.slane %v264, %v275
      %v277 = vlaneseq
      %v278 = vshrl.u32 %v277, 7
      %v279 = vsub.s32 2, %v278
      %v280 = vrot.slane %v264, %v279
      %v282 = vcombine.low %v272, %v276
      %v284 = vmul.f32 %v266, %v282
      %v285 = vmul.f32 %v267, %v280
      %v287 = vcombine.high %v284, %v284
      %v289 = vpack.c.bf16 %v284, %v284
      %v290 = vpack.c.bf16 %v287, %v287
      %v291 = vpack.c.bf16 %v285, %v285
      %v292 = vld [vmem:[%s3] sm:$0xf]
      %294 = vrot.lane.b32.xlu0 %v291, 19
      %v295 = vpop.permute.xlu0 %294
      %298 = vrot.lane.b32.xlu0 %v289, 19
      %v299 = vpop.permute.xlu0 %298
      %300 = vrot.lane.b32.xlu0 %v290, 19
      %v301 = vpop.permute.xlu0 %300
      %vm302 = vcmask 154624
      %v303 = vsel %vm302, %v299, %v301
      %v304 = vsel %vm302, %v301, %v295
      %vm305 = vcmask 154624
      %v308 = vsel %vm305, %v295, %v299
      %v310 = vunpack.c.l.b16 %v308
      %v311 = vunpack.c.l.b16 %v303
      %v312 = vunpack.c.l.b16 %v304
      %v313 = vpack.c.b16 %v311, %v310
      %v314 = vpack.c.b16 %v312, %v312
      %317 = vst [vmem:[#allocation2] sm:$0x33] %v313
      %318 = vst [vmem:[#allocation2 + $0x8] sm:$0x3] %v314
      %319 = vrot.lane.b32.xlu0 %v291, 18
      %v320 = vpop.permute.xlu0 %319
      %321 = vrot.lane.b32.xlu0 %v289, 18
      %v322 = vpop.permute.xlu0 %321
      %323 = vrot.lane.b32.xlu0 %v290, 18
      %v324 = vpop.permute.xlu0 %323
      %vm325 = vcmask 146432
      %v326 = vsel %vm325, %v322, %v324
      %v327 = vsel %vm325, %v324, %v320
      %vm328 = vcmask 146432
      %v331 = vsel %vm328, %v320, %v322
      %v333 = vunpack.c.l.b16 %v331
      %v334 = vunpack.c.l.b16 %v326
      %v335 = vunpack.c.l.b16 %v327
      %v336 = vpack.c.b16 %v334, %v333
      %v337 = vpack.c.b16 %v335, %v335
      %v338 = vrot.slane %v336, 6
      %v339 = vrot.slane %v337, 6
      %342 = vst [vmem:[#allocation2] sm:$0xcc] %v338
      %343 = vst [vmem:[#allocation2 + $0x8] sm:$0xc] %v339
      %344 = vrot.lane.b32.xlu0 %v291, 17
      %v345 = vpop.permute.xlu0 %344
      %346 = vrot.lane.b32.xlu0 %v289, 17
      %v347 = vpop.permute.xlu0 %346
      %348 = vrot.lane.b32.xlu0 %v290, 17
      %v349 = vpop.permute.xlu0 %348
      %vm350 = vcmask 138240
      %v351 = vsel %vm350, %v347, %v349
      %v352 = vsel %vm350, %v349, %v345
      %vm353 = vcmask 138240
      %v356 = vsel %vm353, %v345, %v347
      %v358 = vunpack.c.l.b16 %v356
      %v359 = vunpack.c.l.b16 %v351
      %v360 = vunpack.c.l.b16 %v352
      %v361 = vpack.c.b16 %v359, %v358
      %v362 = vpack.c.b16 %v360, %v360
      %365 = vst [vmem:[#allocation2 + $0xc] sm:$0x33] %v361
      %366 = vst [vmem:[#allocation2 + $0x14] sm:$0x3] %v362
      %367 = vrot.lane.b32.xlu0 %v291, 1
      %v368 = vpop.permute.xlu0 %367
      %369 = vrot.lane.b32.xlu0 %v289, 1
      %v370 = vpop.permute.xlu0 %369
      %371 = vrot.lane.b32.xlu0 %v290, 1
      %v372 = vpop.permute.xlu0 %371
      %vm373 = vcmask 7168
      %v374 = vsel %vm373, %v370, %v372
      %v375 = vsel %vm373, %v372, %v368
      %vm376 = vcmask 7168
      %v379 = vsel %vm376, %v368, %v370
      %v381 = vunpack.c.l.b16 %v379
      %v382 = vunpack.c.l.b16 %v374
      %v383 = vunpack.c.l.b16 %v375
      %v384 = vpack.c.b16 %v382, %v381
      %v385 = vpack.c.b16 %v383, %v383
      %v386 = vrot.slane %v384, 6
      %v387 = vrot.slane %v385, 6
      %390 = vst [vmem:[#allocation2 + $0xc] sm:$0xcc] %v386
      %391 = vst [vmem:[#allocation2 + $0x14] sm:$0xc] %v387
      %v392 = vunpack.c.l.b16 %v289
      %v393 = vunpack.c.l.b16 %v290
      %v394 = vunpack.c.l.b16 %v291
      %v395 = vpack.c.b16 %v393, %v392
      %v396 = vpack.c.b16 %v394, %v394
      %399 = vst [vmem:[#allocation2 + $0x18] sm:$0x33] %v395
      %400 = vst [vmem:[#allocation2 + $0x20] sm:$0x3] %v396
      %401 = vrot.lane.b32.xlu0 %v289, 127
      %v402 = vpop.permute.xlu0 %401
      %403 = vrot.lane.b32.xlu0 %v290, 127
      %v404 = vpop.permute.xlu0 %403
      %405 = vrot.lane.b32.xlu0 %v291, 127
      %v406 = vpop.permute.xlu0 %405
      %vm407 = vcmask 1039360
      %v408 = vsel %vm407, %v402, %v404
      %v409 = vsel %vm407, %v404, %v406
      %vm410 = vcmask 1039360
      %v413 = vsel %vm410, %v406, %v402
      %v415 = vunpack.c.l.b16 %v408
      %v416 = vunpack.c.l.b16 %v409
      %v417 = vunpack.c.l.b16 %v413
      %v418 = vpack.c.b16 %v416, %v415
      %v419 = vpack.c.b16 %v417, %v417
      %v420 = vrot.slane %v418, 6
      %v421 = vrot.slane %v419, 6
      %424 = vst [vmem:[#allocation2 + $0x18] sm:$0xcc] %v420
      %425 = vst [vmem:[#allocation2 + $0x20] sm:$0xc] %v421
      %426 = vrot.lane.b32.xlu0 %v289, 111
      %v427 = vpop.permute.xlu0 %426
      %428 = vrot.lane.b32.xlu0 %v290, 111
      %v429 = vpop.permute.xlu0 %428
      %430 = vrot.lane.b32.xlu0 %v291, 111
      %v431 = vpop.permute.xlu0 %430
      %vm432 = vcmask 908288
      %v433 = vsel %vm432, %v427, %v429
      %v434 = vsel %vm432, %v429, %v431
      %vm435 = vcmask 908288
      %v438 = vsel %vm435, %v431, %v427
      %v440 = vunpack.c.l.b16 %v433
      %v441 = vunpack.c.l.b16 %v434
      %v442 = vunpack.c.l.b16 %v438
      %v443 = vpack.c.b16 %v441, %v440
      %v444 = vpack.c.b16 %v442, %v442
      %447 = vst [vmem:[#allocation2 + $0x24] sm:$0x33] %v443
      %448 = vst [vmem:[#allocation2 + $0x2c] sm:$0x3] %v444
      %449 = vrot.lane.b32.xlu0 %v289, 110
      %v450 = vpop.permute.xlu0 %449
      %451 = vrot.lane.b32.xlu0 %v290, 110
      %v452 = vpop.permute.xlu0 %451
      %453 = vrot.lane.b32.xlu0 %v291, 110
      %v454 = vpop.permute.xlu0 %453
      %vm455 = vcmask 900096
      %v456 = vsel %vm455, %v450, %v452
      %v457 = vsel %vm455, %v452, %v454
      %vm458 = vcmask 900096
      %v461 = vsel %vm458, %v454, %v450
      %v463 = vunpack.c.l.b16 %v456
      %v464 = vunpack.c.l.b16 %v457
      %v465 = vunpack.c.l.b16 %v461
      %v466 = vpack.c.b16 %v464, %v463
      %v467 = vpack.c.b16 %v465, %v465
      %v468 = vrot.slane %v466, 6
      %v469 = vrot.slane %v467, 6
      %472 = vst [vmem:[#allocation2 + $0x24] sm:$0xcc] %v468
      %473 = vst [vmem:[#allocation2 + $0x2c] sm:$0xc] %v469
      %474 = vrot.lane.b32.xlu0 %v289, 109
      %v475 = vpop.permute.xlu0 %474
      %476 = vrot.lane.b32.xlu0 %v290, 109
      %v477 = vpop.permute.xlu0 %476
      %478 = vrot.lane.b32.xlu0 %v291, 109
      %v479 = vpop.permute.xlu0 %478
      %vm480 = vcmask 891904
      %v481 = vsel %vm480, %v475, %v477
      %v482 = vsel %vm480, %v477, %v479
      %vm483 = vcmask 891904
      %v486 = vsel %vm483, %v479, %v475
      %v488 = vunpack.c.l.b16 %v481
      %v489 = vunpack.c.l.b16 %v482
      %v490 = vunpack.c.l.b16 %v486
      %v491 = vpack.c.b16 %v489, %v488
      %v492 = vpack.c.b16 %v490, %v490
      %495 = vst [vmem:[#allocation2 + $0x30] sm:$0x33] %v491
      %496 = vst [vmem:[#allocation2 + $0x38] sm:$0x3] %v492
      %v497 = vld [vmem:[#allocation2] sm:$0xff]
      %v498 = vld [vmem:[#allocation2 + $0x8] sm:$0xf]
      %v499 = vld [vmem:[#allocation2 + $0xc] sm:$0xff]
      %v500 = vld [vmem:[#allocation2 + $0x14] sm:$0xf]
      %v501 = vld [vmem:[#allocation2 + $0x18] sm:$0xff]
      %v502 = vld [vmem:[#allocation2 + $0x20] sm:$0xf]
      %v503 = vld [vmem:[#allocation2 + $0x24] sm:$0xff]
      %v504 = vld [vmem:[#allocation2 + $0x2c] sm:$0xf]
      %v505 = vld [vmem:[#allocation2 + $0x30] sm:$0x33]
      %v506 = vld [vmem:[#allocation2 + $0x38] sm:$0x3]
      %v517 = vunpack.c.l.b16 %v497
      %v518 = vunpack.c.h.b16 %v497
      %v519 = vunpack.c.l.b16 %v498
      %v520 = vunpack.c.l.b16 %v499
      %v521 = vunpack.c.h.b16 %v499
      %v522 = vunpack.c.l.b16 %v500
      %v523 = vunpack.c.l.b16 %v501
      %v524 = vunpack.c.h.b16 %v501
      %v525 = vunpack.c.l.b16 %v502
      %v526 = vunpack.c.l.b16 %v503
      %v527 = vunpack.c.h.b16 %v503
      %v528 = vunpack.c.l.b16 %v504
      %v529 = vunpack.c.l.b16 %v505
      %v530 = vunpack.c.h.b16 %v505
      %v531 = vunpack.c.l.b16 %v506
      %v532 = vpack.c.b16 %v520, %v517
      %v533 = vpack.c.b16 %v521, %v518
      %v534 = vpack.c.b16 %v522, %v519
      %v535 = vpack.c.b16 %v526, %v523
      %v536 = vpack.c.b16 %v527, %v524
      %v537 = vpack.c.b16 %v528, %v525
      %v538 = vpack.c.b16 %v529, %v529
      %v539 = vpack.c.b16 %v530, %v530
      %v540 = vpack.c.b16 %v531, %v531
      %vm547 = vcmask 293888
      %v549 = vsel %vm547, %v292, 0
      %vm551 = vcmask 1041408
      %v553 = vsel %vm551, %v538, 0
      %v556 = vsel %vm551, %v539, 0
      %v559 = vsel %vm551, %v540, 0
      %561 = vmatprep.subr.bf16.mxu0 %v533
      %562 = vmatpush1.bf16.msra.mxu0 %v532
      %563 = vmatprep.subr.bf16.mxu0 %v536
      %564 = vmatpush1.bf16.msra.mxu0 %v535
      %565 = vmatprep.subr.bf16.mxu0 %v556
      %566 = vmatpush1.bf16.msra.mxu0 %v553
      %567 = vmatprep.subr.bf16.mxu0 0
      %568 = vmatpush1.bf16.msra.mxu0 0
      %569 = vmatprep.subr.bf16.mxu0 0
      %570 = vmatpush1.bf16.msra.mxu0 0
      %571 = vmatprep.subr.bf16.mxu0 0
      %572 = vmatpush1.bf16.msra.mxu0 0
      %573 = vmatprep.subr.bf16.mxu0 0
      %574 = vmatpush1.bf16.msra.mxu0 0
      %575 = vmatprep.subr.bf16.mxu0 0
      %576 = vmatpush1.bf16.msra.mxu0 0
      %577 = vmatprep.subr.bf16.mxu0 0
      %578 = vmatpush1.bf16.msra.mxu0 0
      %579 = vmatprep.subr.bf16.mxu0 0
      %580 = vmatpush1.bf16.msra.mxu0 0
      %581 = vmatprep.subr.bf16.mxu0 0
      %582 = vmatpush1.bf16.msra.mxu0 0
      %583 = vmatprep.subr.bf16.mxu0 0
      %584 = vmatpush1.bf16.msra.mxu0 0
      %585 = vmatprep.subr.bf16.mxu0 0
      %586 = vmatpush1.bf16.msra.mxu0 0
      %587 = vmatprep.subr.bf16.mxu0 0
      %588 = vmatpush1.bf16.msra.mxu0 0
      %589 = vmatprep.subr.bf16.mxu0 0
      %590 = vmatpush1.bf16.msra.mxu0 0
      %591 = vmatprep.subr.bf16.mxu0 0
      %592 = vmatpush1.bf16.msra.mxu0 0
      %593 = vmatprep.mubr.bf16.mxu0 0
      %594 = vmatmul.mubr.bf16.gmra.mrb[0].mxu0 %v549
      %v595 = vpop.f32.mrb[0].mxu0
      %v596 = vadd.f32 0.0, %v595
      %v597 = vpop.f32.mrb[0].mxu0
      %v598 = vadd.f32 0.0, %v597
      %v599 = vpop.f32.mrb[0].mxu0
      %v600 = vpop.f32.mrb[0].mxu0
      %601 = vdwg.mxu0
      %602 = vmatprep.subr.bf16.mxu0 0
      %603 = vmatpush1.bf16.msra.mxu0 %v534
      %604 = vmatprep.subr.bf16.mxu0 0
      %605 = vmatpush1.bf16.msra.mxu0 %v537
      %606 = vmatprep.subr.bf16.mxu0 0
      %607 = vmatpush1.bf16.msra.mxu0 %v559
      %608 = vmatprep.subr.bf16.mxu0 0
      %609 = vmatpush1.bf16.msra.mxu0 0
      %610 = vmatprep.subr.bf16.mxu0 0
      %611 = vmatpush1.bf16.msra.mxu0 0
      %612 = vmatprep.subr.bf16.mxu0 0
      %613 = vmatpush1.bf16.msra.mxu0 0
      %614 = vmatprep.subr.bf16.mxu0 0
      %615 = vmatpush1.bf16.msra.mxu0 0
      %616 = vmatprep.subr.bf16.mxu0 0
      %617 = vmatpush1.bf16.msra.mxu0 0
      %618 = vmatprep.subr.bf16.mxu0 0
      %619 = vmatpush1.bf16.msra.mxu0 0
      %620 = vmatprep.subr.bf16.mxu0 0
      %621 = vmatpush1.bf16.msra.mxu0 0
      %622 = vmatprep.subr.bf16.mxu0 0
      %623 = vmatpush1.bf16.msra.mxu0 0
      %624 = vmatprep.subr.bf16.mxu0 0
      %625 = vmatpush1.bf16.msra.mxu0 0
      %626 = vmatprep.subr.bf16.mxu0 0
      %627 = vmatpush1.bf16.msra.mxu0 0
      %628 = vmatprep.subr.bf16.mxu0 0
      %629 = vmatpush1.bf16.msra.mxu0 0
      %630 = vmatprep.subr.bf16.mxu0 0
      %631 = vmatpush1.bf16.msra.mxu0 0
      %632 = vmatprep.subr.bf16.mxu0 0
      %633 = vmatpush1.bf16.msra.mxu0 0
      %634 = vmatprep.mubr.bf16.mxu0 0
      %635 = vmatmul.mubr.bf16.gmra.mrb[0].mxu0 %v549
      %v636 = vpop.f32.mrb[0].mxu0
      %v637 = vadd.f32 0.0, %v636
      %v638 = vpop.f32.mrb[0].mxu0
      %v639 = vpop.f32.mrb[0].mxu0
      %v640 = vpop.f32.mrb[0].mxu0
      %641 = vdwg.mxu0
      %v642 = vpack.c.bf16 %v596, %v596
      %v643 = vpack.c.bf16 %v598, %v598
      %v644 = vpack.c.bf16 %v637, %v637
      %v648 = vunpack.c.l.b16 %v642
      %v649 = vunpack.c.l.b16 %v643
      %v650 = vunpack.c.l.b16 %v644
      %v651 = vpack.c.b16 %v649, %v648
      %v652 = vpack.c.b16 %v650, %v650
      %655 = vst [vmem:[%s258] sm:$0xff] %v651
      %656 = vst [vmem:[%s258 + $0x8] sm:$0xf] %v652
      %v659 = vmul.f32 %v596, %v272
      %v660 = vmul.f32 %v598, %v276
      %v661 = vmul.f32 %v637, %v280
      %v662 = vadd.f32 %v659, %v660
      %v663 = vadd.f32 %v662, %v661
      %664 = vadd.xlane.f32.xlu0 %v663
      %v665 = vpop.xlane.xlu0 %664
      %v666 = vadd.f32 %v665, 0.0
      %v667 = vmul.f32 %v659, %v596
      %v668 = vmul.f32 %v660, %v598
      %v669 = vmul.f32 %v661, %v637
      %v670 = vadd.f32 %v667, %v668
      %v671 = vadd.f32 %v670, %v669
      %672 = vadd.xlane.f32.xlu0 %v671
      %v673 = vpop.xlane.xlu0 %672
      %v674 = vadd.f32 %v673, 0.0
      %675 = vst.msk [vmem:[%s262] sm:$0xff] %vm376, %v666
      %vm676 = vcmask 15368
      %677 = vst.msk [vmem:[%s262] sm:$0xff] %vm676, %v674
      %p678 = scmp.lt.s32.totalorder %s18, 1
      %s679 = scalar_select %p678, %s18, 1
      %s680 = smul.addr %s679, 3
      %s681 = smul.addr %s680, 4
      %s682 = scalar_lea.vmem %s5, %s681
      %p683 = scmp.lt.s32.totalorder %s18, 1
      %s684 = scalar_select %p683, %s18, 1
      %s685 = smul.addr %s684, 8
      %s686 = scalar_lea.vmem %s6, %s685
      // Predicated region
      $region41: #{basic_conv_net_forward.5} parent=39 // pred_check
        %p687 = pneg %p146
      $region42: #{basic_conv_net_forward.5} parent=39 // pred_check_branch
        %689 = sbr.rel (%p687) target = $region44
      $region43: #{basic_conv_net_forward.5} parent=39 // pred_region
        _
      $region44: #{basic_conv_net_forward.5} parent=39 // pred_fallthru
        _
      // Predicated region
      $region45: #{basic_conv_net_forward.5} parent=39 // pred_check
        %p690 = pneg %p172
      $region46: #{basic_conv_net_forward.5} parent=39 // pred_check_branch
        %692 = sbr.rel (%p690) target = $region48
      $region47: #{basic_conv_net_forward.5} parent=39 // pred_region
        _
      $region48: #{basic_conv_net_forward.5} parent=39 // pred_fallthru
        _
    $region40: #{basic_conv_net_forward.5} parent=5 // pred_fallthru
      _
    %p693 = scmp.le.s32.totalorder 2, %s13
    // Predicated region
    $region49: #{basic_conv_net_forward.5} parent=5 // pred_check
      %p694 = pneg %p693
    $region50: #{basic_conv_net_forward.5} parent=5 // pred_check_branch
      %696 = sbr.rel (%p694) target = $region52
    $region51: #{basic_conv_net_forward.5} parent=5 // pred_region
      %s697 = ssub.s32 %s13, 2
      // Predicated region
      $region53: #{basic_conv_net_forward.5} parent=51 // pred_check
        %p698 = pneg %p152
      $region54: #{basic_conv_net_forward.5} parent=51 // pred_check_branch
        %700 = sbr.rel (%p698) target = $region56
      $region55: #{basic_conv_net_forward.5} parent=51 // pred_region
        %p701 = scmp.lt.s32.totalorder %s19, 1
        %s702 = scalar_select %p701, %s19, 1
        %s703 = smul.addr %s702, 3
        %s704 = smul.addr %s703, 4
        %s705 = scalar_lea.vmem %s5, %s704
      $region56: #{basic_conv_net_forward.5} parent=51 // pred_fallthru
        _
      // Predicated region
      $region57: #{basic_conv_net_forward.5} parent=51 // pred_check
        %p706 = pneg %p178
      $region58: #{basic_conv_net_forward.5} parent=51 // pred_check_branch
        %708 = sbr.rel (%p706) target = $region60
      $region59: #{basic_conv_net_forward.5} parent=51 // pred_region
        %p709 = scmp.lt.s32.totalorder %s19, 1
        %s710 = scalar_select %p709, %s19, 1
        %s711 = smul.addr %s710, 8
        %s712 = scalar_lea.vmem %s6, %s711
      $region60: #{basic_conv_net_forward.5} parent=51 // pred_fallthru
        _
    $region52: #{basic_conv_net_forward.5} parent=5 // pred_fallthru
      _
  $region6: #{basic_conv_net_forward.5} parent=0 // loop_footer
    %s17 = sadd.s32 1, %s13
  $region7: #{basic_conv_net_forward.5} parent=0 // loop_footer_branch
    %12 = sbr.rel target = $region3
  $region8: #{basic_conv_net_forward.5} parent=0 // loop_exit
    _

// kernel: basic_conv_net_forward.6
$region0: #{basic_conv_net_forward.6}
  #allocation0 [shape = 'u32[]', space=smem, size = 0x4, offset = 0x4, fixed_abs, tag = 'smem constant byte address 0x4 - core index']
  #allocation1 [shape = 'u32[144,128]{1,0:T(1,128)}', space=vmem, size = 0x12000, scoped, tag = 'internal scratch']
  #allocation2 [shape = 'bf16[72,384]{1,0:T(8,128)(2,1)}', space=vmem, size = 0xd800, scoped, tag = 'scratch operand']
  %s0 = inlined_call_operand.vmem [shape: bf16[2,8,384], index: 0, kind: input, shape index: {}]
  %s1 = inlined_call_operand.vmem [shape: f32[8,1], index: 1, kind: input, shape index: {}]
  %s2 = inlined_call_operand.vmem [shape: f32[8,1], index: 2, kind: input, shape index: {}]
  %s3 = inlined_call_operand.vmem [shape: bf16[16,72], index: 3, kind: input, shape index: {}]
  %s4 = inlined_call_operand.vmem [shape: f32[1,384], index: 4, kind: input, shape index: {}]
  %s5 = inlined_call_operand.vmem [shape: bf16[2,16,384], index: 5, kind: output, shape index: {0}]
  %s6 = inlined_call_operand.vmem [shape: f32[2,16,2], index: 6, kind: output, shape index: {1}]
  %7 = xla_tuple %s5, %s6
  %s8 = sld [smem:[#allocation0]]
  $region61: #{basic_conv_net_forward.6} parent=0
    _
  %s10 = ssub.s32 1, %s8
  %s11 = scalar_select 0, %s10, %s8
  loop: start=0, step=1, limit=4
  $region2: #{basic_conv_net_forward.6} parent=0 // loop_pre_header
    _
  $region3: #{basic_conv_net_forward.6} parent=0 // loop_header
    %s13 = sphi 0, %s17
    %p14 = scmp.ge.s32.totalorder %s13, 4
    %s23 = sphi 0, %s25
    %s26 = sphi 0, %s23
    %s27 = sphi 0, %s26
    %s43 = sphi 0, %s27
    %s47 = sphi 0, %s47
    %s49 = sphi 0, %s47
    %s50 = sphi 0, %s49
    %s64 = sphi 0, %s50
    %s68 = sphi 0, %s68
    %s70 = sphi 0, %s68
    %s71 = sphi 0, %s70
    %s85 = sphi 0, %s71
    %s89 = sphi 0, %s89
    %s91 = sphi 0, %s89
    %s92 = sphi 0, %s91
    %s106 = sphi 0, %s92
    %s110 = sphi 0, %s110
    %s112 = sphi 0, %s110
    %s113 = sphi 0, %s112
    %s127 = sphi 0, %s113
    %s133 = sphi 0, %s135
    %s136 = sphi 0, %s133
    %s137 = sphi 0, %s136
    %s153 = sphi 0, %s137
    %s159 = sphi 0, %s161
    %s162 = sphi 0, %s159
    %s163 = sphi 0, %s162
    %s179 = sphi 0, %s163
  $region4: #{basic_conv_net_forward.6} parent=0 // loop_header_branch
    %16 = sbr.rel (%p14) target = $region8
  $region5: #{basic_conv_net_forward.6} parent=0 // loop_body
    %s18 = ssub.s32 %s13, 1
    %s19 = ssub.s32 %s13, 2
    %s20 = sadd.s32 %s13, 1
    %s21 = ssub.s32 %s13, %s20
    %p22 = scmp.eq.s32.totalorder %s21, 0
    %s24 = sadd.s32 %s23, 1
    %s25 = scalar_select %p22, %s23, %s24
    %p28 = pneg %p22
    %p29 = scmp.eq.s32.totalorder %s13, 1
    %p30 = por %p28, %p29
    %p31 = scmp.ne.s32.totalorder %s23, %s26
    %p32 = scmp.eq.s32.totalorder %s13, 0
    %p33 = por %p31, %p32
    %p34 = scmp.ne.s32.totalorder %s23, %s26
    %p35 = scmp.eq.s32.totalorder %s18, 1
    %p36 = por %p34, %p35
    %p37 = scmp.ne.s32.totalorder %s26, %s27
    %p38 = scmp.eq.s32.totalorder %s18, 0
    %p39 = por %p37, %p38
    %p40 = scmp.ne.s32.totalorder %s26, %s27
    %p41 = scmp.eq.s32.totalorder %s19, 1
    %p42 = por %p40, %p41
    %p44 = scmp.ne.s32.totalorder %s27, %s43
    %p45 = scmp.eq.s32.totalorder %s19, 0
    %p46 = por %p44, %p45
    %s48 = sadd.s32 %s47, 1
    %p51 = scmp.eq.s32.totalorder %s13, 1
    %p52 = scmp.ne.s32.totalorder %s47, %s49
    %p53 = scmp.eq.s32.totalorder %s13, 0
    %p54 = por %p52, %p53
    %p55 = scmp.ne.s32.totalorder %s47, %s49
    %p56 = scmp.eq.s32.totalorder %s18, 1
    %p57 = por %p55, %p56
    %p58 = scmp.ne.s32.totalorder %s49, %s50
    %p59 = scmp.eq.s32.totalorder %s18, 0
    %p60 = por %p58, %p59
    %p61 = scmp.ne.s32.totalorder %s49, %s50
    %p62 = scmp.eq.s32.totalorder %s19, 1
    %p63 = por %p61, %p62
    %p65 = scmp.ne.s32.totalorder %s50, %s64
    %p66 = scmp.eq.s32.totalorder %s19, 0
    %p67 = por %p65, %p66
    %s69 = sadd.s32 %s68, 1
    %p72 = scmp.eq.s32.totalorder %s13, 1
    %p73 = scmp.ne.s32.totalorder %s68, %s70
    %p74 = scmp.eq.s32.totalorder %s13, 0
    %p75 = por %p73, %p74
    %p76 = scmp.ne.s32.totalorder %s68, %s70
    %p77 = scmp.eq.s32.totalorder %s18, 1
    %p78 = por %p76, %p77
    %p79 = scmp.ne.s32.totalorder %s70, %s71
    %p80 = scmp.eq.s32.totalorder %s18, 0
    %p81 = por %p79, %p80
    %p82 = scmp.ne.s32.totalorder %s70, %s71
    %p83 = scmp.eq.s32.totalorder %s19, 1
    %p84 = por %p82, %p83
    %p86 = scmp.ne.s32.totalorder %s71, %s85
    %p87 = scmp.eq.s32.totalorder %s19, 0
    %p88 = por %p86, %p87
    %s90 = sadd.s32 %s89, 1
    %p93 = scmp.eq.s32.totalorder %s13, 1
    %p94 = scmp.ne.s32.totalorder %s89, %s91
    %p95 = scmp.eq.s32.totalorder %s13, 0
    %p96 = por %p94, %p95
    %p97 = scmp.ne.s32.totalorder %s89, %s91
    %p98 = scmp.eq.s32.totalorder %s18, 1
    %p99 = por %p97, %p98
    %p100 = scmp.ne.s32.totalorder %s91, %s92
    %p101 = scmp.eq.s32.totalorder %s18, 0
    %p102 = por %p100, %p101
    %p103 = scmp.ne.s32.totalorder %s91, %s92
    %p104 = scmp.eq.s32.totalorder %s19, 1
    %p105 = por %p103, %p104
    %p107 = scmp.ne.s32.totalorder %s92, %s106
    %p108 = scmp.eq.s32.totalorder %s19, 0
    %p109 = por %p107, %p108
    %s111 = sadd.s32 %s110, 1
    %p114 = scmp.eq.s32.totalorder %s13, 1
    %p115 = scmp.ne.s32.totalorder %s110, %s112
    %p116 = scmp.eq.s32.totalorder %s13, 0
    %p117 = por %p115, %p116
    %p118 = scmp.ne.s32.totalorder %s110, %s112
    %p119 = scmp.eq.s32.totalorder %s18, 1
    %p120 = por %p118, %p119
    %p121 = scmp.ne.s32.totalorder %s112, %s113
    %p122 = scmp.eq.s32.totalorder %s18, 0
    %p123 = por %p121, %p122
    %p124 = scmp.ne.s32.totalorder %s112, %s113
    %p125 = scmp.eq.s32.totalorder %s19, 1
    %p126 = por %p124, %p125
    %p128 = scmp.ne.s32.totalorder %s113, %s127
    %p129 = scmp.eq.s32.totalorder %s19, 0
    %p130 = por %p128, %p129
    %s131 = ssub.s32 %s13, %s20
    %p132 = scmp.eq.s32.totalorder %s131, 0
    %s134 = sadd.s32 %s133, 1
    %s135 = scalar_select %p132, %s133, %s134
    %p138 = pneg %p132
    %p139 = scmp.eq.s32.totalorder %s13, 1
    %p140 = por %p138, %p139
    %p141 = scmp.ne.s32.totalorder %s133, %s136
    %p142 = scmp.eq.s32.totalorder %s13, 0
    %p143 = por %p141, %p142
    %p144 = scmp.ne.s32.totalorder %s133, %s136
    %p145 = scmp.eq.s32.totalorder %s18, 1
    %p146 = por %p144, %p145
    %p147 = scmp.ne.s32.totalorder %s136, %s137
    %p148 = scmp.eq.s32.totalorder %s18, 0
    %p149 = por %p147, %p148
    %p150 = scmp.ne.s32.totalorder %s136, %s137
    %p151 = scmp.eq.s32.totalorder %s19, 1
    %p152 = por %p150, %p151
    %p154 = scmp.ne.s32.totalorder %s137, %s153
    %p155 = scmp.eq.s32.totalorder %s19, 0
    %p156 = por %p154, %p155
    %s157 = ssub.s32 %s13, %s20
    %p158 = scmp.eq.s32.totalorder %s157, 0
    %s160 = sadd.s32 %s159, 1
    %s161 = scalar_select %p158, %s159, %s160
    %p164 = pneg %p158
    %p165 = scmp.eq.s32.totalorder %s13, 1
    %p166 = por %p164, %p165
    %p167 = scmp.ne.s32.totalorder %s159, %s162
    %p168 = scmp.eq.s32.totalorder %s13, 0
    %p169 = por %p167, %p168
    %p170 = scmp.ne.s32.totalorder %s159, %s162
    %p171 = scmp.eq.s32.totalorder %s18, 1
    %p172 = por %p170, %p171
    %p173 = scmp.ne.s32.totalorder %s162, %s163
    %p174 = scmp.eq.s32.totalorder %s18, 0
    %p175 = por %p173, %p174
    %p176 = scmp.ne.s32.totalorder %s162, %s163
    %p177 = scmp.eq.s32.totalorder %s19, 1
    %p178 = por %p176, %p177
    %p180 = scmp.ne.s32.totalorder %s163, %s179
    %p181 = scmp.eq.s32.totalorder %s19, 0
    %p182 = por %p180, %p181
    %p183 = scmp.le.s32.totalorder 1, %s13
    %p184 = scmp.lt.s32.totalorder %s13, 3
    %p185 = pnand %p183, %p184
    %p186 = pneg %p185
    // Predicated region
    $region9: #{basic_conv_net_forward.6} parent=5 // pred_check
      _
    $region10: #{basic_conv_net_forward.6} parent=5 // pred_check_branch
      %188 = sbr.rel (%p185) target = $region12
    $region11: #{basic_conv_net_forward.6} parent=5 // pred_region
      %s189 = ssub.s32 %s13, 1
      // Predicated region
      $region13: #{basic_conv_net_forward.6} parent=11 // pred_check
        %p190 = pneg %p60
      $region14: #{basic_conv_net_forward.6} parent=11 // pred_check_branch
        %192 = sbr.rel (%p190) target = $region16
      $region15: #{basic_conv_net_forward.6} parent=11 // pred_region
        _
      $region16: #{basic_conv_net_forward.6} parent=11 // pred_fallthru
        _
      // Predicated region
      $region17: #{basic_conv_net_forward.6} parent=11 // pred_check
        %p193 = pneg %p81
      $region18: #{basic_conv_net_forward.6} parent=11 // pred_check_branch
        %195 = sbr.rel (%p193) target = $region20
      $region19: #{basic_conv_net_forward.6} parent=11 // pred_region
        _
      $region20: #{basic_conv_net_forward.6} parent=11 // pred_fallthru
        _
      // Predicated region
      $region21: #{basic_conv_net_forward.6} parent=11 // pred_check
        %p196 = pneg %p102
      $region22: #{basic_conv_net_forward.6} parent=11 // pred_check_branch
        %198 = sbr.rel (%p196) target = $region24
      $region23: #{basic_conv_net_forward.6} parent=11 // pred_region
        _
      $region24: #{basic_conv_net_forward.6} parent=11 // pred_fallthru
        _
      // Predicated region
      $region25: #{basic_conv_net_forward.6} parent=11 // pred_check
        %p199 = pneg %p123
      $region26: #{basic_conv_net_forward.6} parent=11 // pred_check_branch
        %201 = sbr.rel (%p199) target = $region28
      $region27: #{basic_conv_net_forward.6} parent=11 // pred_region
        _
      $region28: #{basic_conv_net_forward.6} parent=11 // pred_fallthru
        _
    $region12: #{basic_conv_net_forward.6} parent=5 // pred_fallthru
      _
    %p202 = scmp.lt.s32.totalorder %s13, 2
    // Predicated region
    $region29: #{basic_conv_net_forward.6} parent=5 // pred_check
      %p203 = pneg %p202
    $region30: #{basic_conv_net_forward.6} parent=5 // pred_check_branch
      %205 = sbr.rel (%p203) target = $region32
    $region31: #{basic_conv_net_forward.6} parent=5 // pred_region
      // Predicated region
      $region33: #{basic_conv_net_forward.6} parent=31 // pred_check
        %p206 = pneg %p33
      $region34: #{basic_conv_net_forward.6} parent=31 // pred_check_branch
        %208 = sbr.rel (%p206) target = $region36
      $region35: #{basic_conv_net_forward.6} parent=31 // pred_region
        %p209 = scmp.lt.s32.totalorder %s13, 1
        %s210 = scalar_select %p209, %s13, 1
        %s211 = smul.addr %s210, 3
        %s212 = smul.addr %s211, 4
        %s213 = scalar_lea.vmem %s0, %s212
      $region36: #{basic_conv_net_forward.6} parent=31 // pred_fallthru
        _
    $region32: #{basic_conv_net_forward.6} parent=5 // pred_fallthru
      _
    %p214 = scmp.le.s32.totalorder 1, %s13
    %p215 = scmp.lt.s32.totalorder %s13, 3
    %p216 = pnand %p214, %p215
    %p217 = pneg %p216
    // Predicated region
    $region37: #{basic_conv_net_forward.6} parent=5 // pred_check
      _
    $region38: #{basic_conv_net_forward.6} parent=5 // pred_check_branch
      %219 = sbr.rel (%p216) target = $region40
    $region39: #{basic_conv_net_forward.6} parent=5 // pred_region
      %s220 = ssub.s32 %s13, 1
      %p221 = scmp.lt.s32.totalorder %s18, 1
      %s222 = scalar_select %p221, %s18, 1
      %s223 = smul.addr %s222, 3
      %s224 = smul.addr %s223, 4
      %s225 = scalar_lea.vmem %s0, %s224
      %p226 = pneg %p39
      %p227 = pneg %p36
      %p228 = pneg %p60
      %p229 = pneg %p57
      %p230 = pneg %p81
      %p231 = pneg %p78
      %p232 = pneg %p102
      %p233 = pneg %p99
      %p234 = pneg %p123
      %p235 = pneg %p120
      %p236 = pneg %p149
      %p237 = pneg %p146
      %p238 = scmp.lt.s32.totalorder %s18, 1
      %s239 = scalar_select %p238, %s18, 1
      %s240 = smul.addr %s239, 6
      %s241 = smul.addr %s240, 4
      %s242 = scalar_lea.vmem %s5, %s241
      %p243 = pneg %p175
      %p244 = pneg %p172
      %p245 = scmp.lt.s32.totalorder %s18, 1
      %s246 = scalar_select %p245, %s18, 1
      %s247 = smul.addr %s246, 2
      %s248 = smul.addr %s247, 8
      %s249 = scalar_lea.vmem %s6, %s248
      %p250 = scmp.lt.s32.totalorder %s18, 1
      %s251 = scalar_select %p250, %s18, 1
      %s252 = smul.addr %s251, 3
      %s253 = smul.addr %s252, 4
      %s254 = scalar_lea.vmem %s0, %s253
      %p255 = scmp.lt.s32.totalorder %s18, 1
      %s256 = scalar_select %p255, %s18, 1
      %s257 = smul.addr %s256, 6
      %s258 = smul.addr %s257, 4
      %s259 = scalar_lea.vmem %s5, %s258
      %p260 = scmp.lt.s32.totalorder %s18, 1
      %s261 = scalar_select %p260, %s18, 1
      %s262 = smul.addr %s261, 2
      %s263 = smul.addr %s262, 8
      %s264 = scalar_lea.vmem %s6, %s263
      %v266 = vld [vmem:[%s4] sm:$0x7]
      %v267 = vld [vmem:[%s254] sm:$0xff]
      %v268 = vld [vmem:[%s254 + $0x8] sm:$0xf]
      %v269 = vunpack.c.l.bf16 %v267
      %v270 = vunpack.c.h.bf16 %v267
      %v271 = vunpack.c.l.bf16 %v268
      %v272 = vld [vmem:[%s1] sm:$0xff]
      %274 = vset.pattern.permute.xlu0 0
      %275 = vperm.xlu0 %274, %v272
      %v276 = vpop.permute.xlu0 %275
      %v278 = vmul.f32 %v269, %v276
      %v279 = vmul.f32 %v270, %v276
      %v280 = vmul.f32 %v271, %v276
      %v281 = vld [vmem:[%s2] sm:$0xff]
      %283 = vset.pattern.permute.xlu0 0
      %284 = vperm.xlu0 %283, %v281
      %v285 = vpop.permute.xlu0 %284
      %v287 = vadd.f32 %v278, %v285
      %v288 = vadd.f32 %v279, %v285
      %v289 = vadd.f32 %v280, %v285
      %v290 = vmax.f32 %v287, 0.0
      %v291 = vmax.f32 %v288, 0.0
      %v292 = vmax.f32 %v289, 0.0
      %v294 = vlaneseq
      %v295 = vshrl.u32 %v294, 7
      %v296 = vsub.s32 0, %v295
      %v297 = vrot.slane %v266, %v296
      %v298 = vlaneseq
      %v299 = vshrl.u32 %v298, 7
      %v300 = vsub.s32 1, %v299
      %v301 = vrot.slane %v266, %v300
      %v302 = vlaneseq
      %v303 = vshrl.u32 %v302, 7
      %v304 = vsub.s32 2, %v303
      %v305 = vrot.slane %v266, %v304
      %v309 = vmul.f32 %v290, %v297
      %v310 = vmul.f32 %v291, %v301
      %v311 = vmul.f32 %v292, %v305
      %v312 = vpack.c.bf16 %v309, %v309
      %v313 = vpack.c.bf16 %v310, %v310
      %v314 = vpack.c.bf16 %v311, %v311
      %v315 = vld [vmem:[%s3] sm:$0xf]
      %v316 = vld [vmem:[%s3 + $0x4] sm:$0xf]
      %318 = vrot.lane.b32.xlu0 %v314, 19
      %v319 = vpop.permute.xlu0 %318
      %322 = vrot.lane.b32.xlu0 %v312, 19
      %v323 = vpop.permute.xlu0 %322
      %324 = vrot.lane.b32.xlu0 %v313, 19
      %v325 = vpop.permute.xlu0 %324
      %vm326 = vcmask 154624
      %v327 = vsel %vm326, %v323, %v325
      %v328 = vsel %vm326, %v325, %v319
      %vm329 = vcmask 154624
      %v332 = vsel %vm329, %v319, %v323
      %v334 = vunpack.c.l.b16 %v332
      %v335 = vunpack.c.l.b16 %v327
      %v336 = vunpack.c.l.b16 %v328
      %v337 = vpack.c.b16 %v335, %v334
      %v338 = vpack.c.b16 %v336, %v336
      %341 = vst [vmem:[#allocation2] sm:$0xff] %v337
      %342 = vst [vmem:[#allocation2 + $0x8] sm:$0xf] %v338
      %343 = vrot.lane.b32.xlu0 %v314, 18
      %v344 = vpop.permute.xlu0 %343
      %345 = vrot.lane.b32.xlu0 %v312, 18
      %v346 = vpop.permute.xlu0 %345
      %347 = vrot.lane.b32.xlu0 %v313, 18
      %v348 = vpop.permute.xlu0 %347
      %vm349 = vcmask 146432
      %v350 = vsel %vm349, %v346, %v348
      %v351 = vsel %vm349, %v348, %v344
      %vm352 = vcmask 146432
      %v355 = vsel %vm352, %v344, %v346
      %v357 = vunpack.c.l.b16 %v355
      %v358 = vunpack.c.l.b16 %v350
      %v359 = vunpack.c.l.b16 %v351
      %v360 = vpack.c.b16 %v358, %v357
      %v361 = vpack.c.b16 %v359, %v359
      %364 = vst [vmem:[#allocation2 + $0xc] sm:$0xff] %v360
      %365 = vst [vmem:[#allocation2 + $0x14] sm:$0xf] %v361
      %366 = vrot.lane.b32.xlu0 %v314, 17
      %v367 = vpop.permute.xlu0 %366
      %368 = vrot.lane.b32.xlu0 %v312, 17
      %v369 = vpop.permute.xlu0 %368
      %370 = vrot.lane.b32.xlu0 %v313, 17
      %v371 = vpop.permute.xlu0 %370
      %vm372 = vcmask 138240
      %v373 = vsel %vm372, %v369, %v371
      %v374 = vsel %vm372, %v371, %v367
      %vm375 = vcmask 138240
      %v378 = vsel %vm375, %v367, %v369
      %v380 = vunpack.c.l.b16 %v378
      %v381 = vunpack.c.l.b16 %v373
      %v382 = vunpack.c.l.b16 %v374
      %v383 = vpack.c.b16 %v381, %v380
      %v384 = vpack.c.b16 %v382, %v382
      %387 = vst [vmem:[#allocation2 + $0x18] sm:$0xff] %v383
      %388 = vst [vmem:[#allocation2 + $0x20] sm:$0xf] %v384
      %389 = vrot.lane.b32.xlu0 %v314, 1
      %v390 = vpop.permute.xlu0 %389
      %391 = vrot.lane.b32.xlu0 %v312, 1
      %v392 = vpop.permute.xlu0 %391
      %393 = vrot.lane.b32.xlu0 %v313, 1
      %v394 = vpop.permute.xlu0 %393
      %vm395 = vcmask 7168
      %v396 = vsel %vm395, %v392, %v394
      %v397 = vsel %vm395, %v394, %v390
      %vm398 = vcmask 7168
      %v401 = vsel %vm398, %v390, %v392
      %v403 = vunpack.c.l.b16 %v401
      %v404 = vunpack.c.l.b16 %v396
      %v405 = vunpack.c.l.b16 %v397
      %v406 = vpack.c.b16 %v404, %v403
      %v407 = vpack.c.b16 %v405, %v405
      %410 = vst [vmem:[#allocation2 + $0x24] sm:$0xff] %v406
      %411 = vst [vmem:[#allocation2 + $0x2c] sm:$0xf] %v407
      %v412 = vunpack.c.l.b16 %v312
      %v413 = vunpack.c.l.b16 %v313
      %v414 = vunpack.c.l.b16 %v314
      %v415 = vpack.c.b16 %v413, %v412
      %v416 = vpack.c.b16 %v414, %v414
      %419 = vst [vmem:[#allocation2 + $0x30] sm:$0xff] %v415
      %420 = vst [vmem:[#allocation2 + $0x38] sm:$0xf] %v416
      %421 = vrot.lane.b32.xlu0 %v312, 127
      %v422 = vpop.permute.xlu0 %421
      %423 = vrot.lane.b32.xlu0 %v313, 127
      %v424 = vpop.permute.xlu0 %423
      %425 = vrot.lane.b32.xlu0 %v314, 127
      %v426 = vpop.permute.xlu0 %425
      %vm427 = vcmask 1039360
      %v428 = vsel %vm427, %v422, %v424
      %v429 = vsel %vm427, %v424, %v426
      %vm430 = vcmask 1039360
      %v433 = vsel %vm430, %v426, %v422
      %v435 = vunpack.c.l.b16 %v428
      %v436 = vunpack.c.l.b16 %v429
      %v437 = vunpack.c.l.b16 %v433
      %v438 = vpack.c.b16 %v436, %v435
      %v439 = vpack.c.b16 %v437, %v437
      %442 = vst [vmem:[#allocation2 + $0x3c] sm:$0xff] %v438
      %443 = vst [vmem:[#allocation2 + $0x44] sm:$0xf] %v439
      %444 = vrot.lane.b32.xlu0 %v312, 111
      %v445 = vpop.permute.xlu0 %444
      %446 = vrot.lane.b32.xlu0 %v313, 111
      %v447 = vpop.permute.xlu0 %446
      %448 = vrot.lane.b32.xlu0 %v314, 111
      %v449 = vpop.permute.xlu0 %448
      %vm450 = vcmask 908288
      %v451 = vsel %vm450, %v445, %v447
      %v452 = vsel %vm450, %v447, %v449
      %vm453 = vcmask 908288
      %v456 = vsel %vm453, %v449, %v445
      %v458 = vunpack.c.l.b16 %v451
      %v459 = vunpack.c.l.b16 %v452
      %v460 = vunpack.c.l.b16 %v456
      %v461 = vpack.c.b16 %v459, %v458
      %v462 = vpack.c.b16 %v460, %v460
      %465 = vst [vmem:[#allocation2 + $0x48] sm:$0xff] %v461
      %466 = vst [vmem:[#allocation2 + $0x50] sm:$0xf] %v462
      %467 = vrot.lane.b32.xlu0 %v312, 110
      %v468 = vpop.permute.xlu0 %467
      %469 = vrot.lane.b32.xlu0 %v313, 110
      %v470 = vpop.permute.xlu0 %469
      %471 = vrot.lane.b32.xlu0 %v314, 110
      %v472 = vpop.permute.xlu0 %471
      %vm473 = vcmask 900096
      %v474 = vsel %vm473, %v468, %v470
      %v475 = vsel %vm473, %v470, %v472
      %vm476 = vcmask 900096
      %v479 = vsel %vm476, %v472, %v468
      %v481 = vunpack.c.l.b16 %v474
      %v482 = vunpack.c.l.b16 %v475
      %v483 = vunpack.c.l.b16 %v479
      %v484 = vpack.c.b16 %v482, %v481
      %v485 = vpack.c.b16 %v483, %v483
      %488 = vst [vmem:[#allocation2 + $0x54] sm:$0xff] %v484
      %489 = vst [vmem:[#allocation2 + $0x5c] sm:$0xf] %v485
      %490 = vrot.lane.b32.xlu0 %v312, 109
      %v491 = vpop.permute.xlu0 %490
      %492 = vrot.lane.b32.xlu0 %v313, 109
      %v493 = vpop.permute.xlu0 %492
      %494 = vrot.lane.b32.xlu0 %v314, 109
      %v495 = vpop.permute.xlu0 %494
      %vm496 = vcmask 891904
      %v497 = vsel %vm496, %v491, %v493
      %v498 = vsel %vm496, %v493, %v495
      %vm499 = vcmask 891904
      %v502 = vsel %vm499, %v495, %v491
      %v504 = vunpack.c.l.b16 %v497
      %v505 = vunpack.c.l.b16 %v498
      %v506 = vunpack.c.l.b16 %v502
      %v507 = vpack.c.b16 %v505, %v504
      %v508 = vpack.c.b16 %v506, %v506
      %511 = vst [vmem:[#allocation2 + $0x60] sm:$0xff] %v507
      %512 = vst [vmem:[#allocation2 + $0x68] sm:$0xf] %v508
      %v513 = vld [vmem:[#allocation2] sm:$0xff]
      %v514 = vld [vmem:[#allocation2 + $0x8] sm:$0xf]
      %v515 = vld [vmem:[#allocation2 + $0xc] sm:$0xff]
      %v516 = vld [vmem:[#allocation2 + $0x14] sm:$0xf]
      %v517 = vld [vmem:[#allocation2 + $0x18] sm:$0xff]
      %v518 = vld [vmem:[#allocation2 + $0x20] sm:$0xf]
      %v519 = vld [vmem:[#allocation2 + $0x24] sm:$0xff]
      %v520 = vld [vmem:[#allocation2 + $0x2c] sm:$0xf]
      %v521 = vld [vmem:[#allocation2 + $0x30] sm:$0xff]
      %v522 = vld [vmem:[#allocation2 + $0x38] sm:$0xf]
      %v523 = vld [vmem:[#allocation2 + $0x3c] sm:$0xff]
      %v524 = vld [vmem:[#allocation2 + $0x44] sm:$0xf]
      %v525 = vld [vmem:[#allocation2 + $0x48] sm:$0xff]
      %v526 = vld [vmem:[#allocation2 + $0x50] sm:$0xf]
      %v527 = vld [vmem:[#allocation2 + $0x54] sm:$0xff]
      %v528 = vld [vmem:[#allocation2 + $0x5c] sm:$0xf]
      %v529 = vld [vmem:[#allocation2 + $0x60] sm:$0xff]
      %v530 = vld [vmem:[#allocation2 + $0x68] sm:$0xf]
      %v533 = vunpack.c.l.b16 %v315
      %v534 = vunpack.c.l.b16 %v316
      %v535 = vpack.c.b16 %v534, %v533
      %v554 = vunpack.c.l.b16 %v513
      %v555 = vunpack.c.h.b16 %v513
      %v556 = vunpack.c.l.b16 %v514
      %v557 = vunpack.c.l.b16 %v515
      %v558 = vunpack.c.h.b16 %v515
      %v559 = vunpack.c.l.b16 %v516
      %v560 = vunpack.c.l.b16 %v517
      %v561 = vunpack.c.h.b16 %v517
      %v562 = vunpack.c.l.b16 %v518
      %v563 = vunpack.c.l.b16 %v519
      %v564 = vunpack.c.h.b16 %v519
      %v565 = vunpack.c.l.b16 %v520
      %v566 = vunpack.c.l.b16 %v521
      %v567 = vunpack.c.h.b16 %v521
      %v568 = vunpack.c.l.b16 %v522
      %v569 = vunpack.c.l.b16 %v523
      %v570 = vunpack.c.h.b16 %v523
      %v571 = vunpack.c.l.b16 %v524
      %v572 = vunpack.c.l.b16 %v525
      %v573 = vunpack.c.h.b16 %v525
      %v574 = vunpack.c.l.b16 %v526
      %v575 = vunpack.c.l.b16 %v527
      %v576 = vunpack.c.h.b16 %v527
      %v577 = vunpack.c.l.b16 %v528
      %v578 = vunpack.c.l.b16 %v529
      %v579 = vunpack.c.h.b16 %v529
      %v580 = vunpack.c.l.b16 %v530
      %v581 = vpack.c.b16 %v557, %v554
      %v582 = vpack.c.b16 %v558, %v555
      %v583 = vpack.c.b16 %v559, %v556
      %v584 = vpack.c.b16 %v563, %v560
      %v585 = vpack.c.b16 %v564, %v561
      %v586 = vpack.c.b16 %v565, %v562
      %v587 = vpack.c.b16 %v569, %v566
      %v588 = vpack.c.b16 %v570, %v567
      %v589 = vpack.c.b16 %v571, %v568
      %v590 = vpack.c.b16 %v575, %v572
      %v591 = vpack.c.b16 %v576, %v573
      %v592 = vpack.c.b16 %v577, %v574
      %v593 = vpack.c.b16 %v578, %v578
      %v594 = vpack.c.b16 %v579, %v579
      %v595 = vpack.c.b16 %v580, %v580
      %vm608 = vcmask 588800
      %v610 = vsel %vm608, %v535, 0
      %vm612 = vcmask 1043456
      %v614 = vsel %vm612, %v593, 0
      %v617 = vsel %vm612, %v594, 0
      %v620 = vsel %vm612, %v595, 0
      %622 = vmatprep.subr.bf16.mxu0 %v582
      %623 = vmatpush1.bf16.msra.mxu0 %v581
      %624 = vmatprep.subr.bf16.mxu0 %v585
      %625 = vmatpush1.bf16.msra.mxu0 %v584
      %626 = vmatprep.subr.bf16.mxu0 %v588
      %627 = vmatpush1.bf16.msra.mxu0 %v587
      %628 = vmatprep.subr.bf16.mxu0 %v591
      %629 = vmatpush1.bf16.msra.mxu0 %v590
      %630 = vmatprep.subr.bf16.mxu0 %v617
      %631 = vmatpush1.bf16.msra.mxu0 %v614
      %632 = vmatprep.subr.bf16.mxu0 0
      %633 = vmatpush1.bf16.msra.mxu0 0
      %634 = vmatprep.subr.bf16.mxu0 0
      %635 = vmatpush1.bf16.msra.mxu0 0
      %636 = vmatprep.subr.bf16.mxu0 0
      %637 = vmatpush1.bf16.msra.mxu0 0
      %638 = vmatprep.subr.bf16.mxu0 0
      %639 = vmatpush1.bf16.msra.mxu0 0
      %640 = vmatprep.subr.bf16.mxu0 0
      %641 = vmatpush1.bf16.msra.mxu0 0
      %642 = vmatprep.subr.bf16.mxu0 0
      %643 = vmatpush1.bf16.msra.mxu0 0
      %644 = vmatprep.subr.bf16.mxu0 0
      %645 = vmatpush1.bf16.msra.mxu0 0
      %646 = vmatprep.subr.bf16.mxu0 0
      %647 = vmatpush1.bf16.msra.mxu0 0
      %648 = vmatprep.subr.bf16.mxu0 0
      %649 = vmatpush1.bf16.msra.mxu0 0
      %650 = vmatprep.subr.bf16.mxu0 0
      %651 = vmatpush1.bf16.msra.mxu0 0
      %652 = vmatprep.subr.bf16.mxu0 0
      %653 = vmatpush1.bf16.msra.mxu0 0
      %654 = vmatprep.mubr.bf16.mxu0 0
      %655 = vmatmul.mubr.bf16.gmra.mrb[0].mxu0 %v610
      %v656 = vpop.f32.mrb[0].mxu0
      %v657 = vadd.f32 0.0, %v656
      %v658 = vpop.f32.mrb[0].mxu0
      %v659 = vadd.f32 0.0, %v658
      %v660 = vpop.f32.mrb[0].mxu0
      %v661 = vadd.f32 0.0, %v660
      %v662 = vpop.f32.mrb[0].mxu0
      %v663 = vadd.f32 0.0, %v662
      %664 = vdwg.mxu0
      %665 = vmatprep.subr.bf16.mxu0 0
      %666 = vmatpush1.bf16.msra.mxu0 %v583
      %667 = vmatprep.subr.bf16.mxu0 0
      %668 = vmatpush1.bf16.msra.mxu0 %v586
      %669 = vmatprep.subr.bf16.mxu0 0
      %670 = vmatpush1.bf16.msra.mxu0 %v589
      %671 = vmatprep.subr.bf16.mxu0 0
      %672 = vmatpush1.bf16.msra.mxu0 %v592
      %673 = vmatprep.subr.bf16.mxu0 0
      %674 = vmatpush1.bf16.msra.mxu0 %v620
      %675 = vmatprep.subr.bf16.mxu0 0
      %676 = vmatpush1.bf16.msra.mxu0 0
      %677 = vmatprep.subr.bf16.mxu0 0
      %678 = vmatpush1.bf16.msra.mxu0 0
      %679 = vmatprep.subr.bf16.mxu0 0
      %680 = vmatpush1.bf16.msra.mxu0 0
      %681 = vmatprep.subr.bf16.mxu0 0
      %682 = vmatpush1.bf16.msra.mxu0 0
      %683 = vmatprep.subr.bf16.mxu0 0
      %684 = vmatpush1.bf16.msra.mxu0 0
      %685 = vmatprep.subr.bf16.mxu0 0
      %686 = vmatpush1.bf16.msra.mxu0 0
      %687 = vmatprep.subr.bf16.mxu0 0
      %688 = vmatpush1.bf16.msra.mxu0 0
      %689 = vmatprep.subr.bf16.mxu0 0
      %690 = vmatpush1.bf16.msra.mxu0 0
      %691 = vmatprep.subr.bf16.mxu0 0
      %692 = vmatpush1.bf16.msra.mxu0 0
      %693 = vmatprep.subr.bf16.mxu0 0
      %694 = vmatpush1.bf16.msra.mxu0 0
      %695 = vmatprep.subr.bf16.mxu0 0
      %696 = vmatpush1.bf16.msra.mxu0 0
      %697 = vmatprep.mubr.bf16.mxu0 0
      %698 = vmatmul.mubr.bf16.gmra.mrb[0].mxu0 %v610
      %v699 = vpop.f32.mrb[0].mxu0
      %v700 = vadd.f32 0.0, %v699
      %v701 = vpop.f32.mrb[0].mxu0
      %v702 = vpop.f32.mrb[0].mxu0
      %v703 = vadd.f32 0.0, %v702
      %v704 = vpop.f32.mrb[0].mxu0
      %705 = vdwg.mxu0
      %v706 = vpack.c.bf16 %v661, %v657
      %v707 = vpack.c.bf16 %v663, %v659
      %v708 = vpack.c.bf16 %v703, %v700
      %v712 = vunpack.c.l.b16 %v706
      %v713 = vunpack.c.l.b16 %v707
      %v714 = vunpack.c.l.b16 %v708
      %v715 = vunpack.c.h.b16 %v706
      %v716 = vunpack.c.h.b16 %v707
      %v717 = vunpack.c.h.b16 %v708
      %v718 = vpack.c.b16 %v713, %v712
      %v719 = vpack.c.b16 %v714, %v714
      %v720 = vpack.c.b16 %v716, %v715
      %v721 = vpack.c.b16 %v717, %v717
      %726 = vst [vmem:[%s259] sm:$0xff] %v718
      %727 = vst [vmem:[%s259 + $0x8] sm:$0xf] %v719
      %728 = vst [vmem:[%s259 + $0xc] sm:$0xff] %v720
      %729 = vst [vmem:[%s259 + $0x14] sm:$0xf] %v721
      %v730 = vmul.f32 %v657, %v297
      %v731 = vmul.f32 %v659, %v301
      %v732 = vmul.f32 %v700, %v305
      %v733 = vmul.f32 %v661, %v297
      %v734 = vmul.f32 %v663, %v301
      %v735 = vmul.f32 %v703, %v305
      %v736 = vadd.f32 %v730, %v731
      %v737 = vadd.f32 %v736, %v732
      %738 = vadd.xlane.f32.xlu0 %v737
      %v739 = vpop.xlane.xlu0 %738
      %v740 = vadd.f32 %v733, %v734
      %v741 = vadd.f32 %v740, %v735
      %742 = vadd.xlane.f32.xlu0 %v741
      %v743 = vpop.xlane.xlu0 %742
      %v744 = vadd.f32 %v739, 0.0
      %v745 = vadd.f32 %v743, 0.0
      %v746 = vmul.f32 %v730, %v657
      %v747 = vmul.f32 %v731, %v659
      %v748 = vmul.f32 %v732, %v700
      %v749 = vmul.f32 %v733, %v661
      %v750 = vmul.f32 %v734, %v663
      %v751 = vmul.f32 %v735, %v703
      %v752 = vadd.f32 %v746, %v747
      %v753 = vadd.f32 %v752, %v748
      %754 = vadd.xlane.f32.xlu0 %v753
      %v755 = vpop.xlane.xlu0 %754
      %v756 = vadd.f32 %v749, %v750
      %v757 = vadd.f32 %v756, %v751
      %758 = vadd.xlane.f32.xlu0 %v757
      %v759 = vpop.xlane.xlu0 %758
      %v760 = vadd.f32 %v755, 0.0
      %v761 = vadd.f32 %v759, 0.0
      %762 = vst.msk [vmem:[%s264] sm:$0xff] %vm398, %v744
      %763 = vst.msk [vmem:[%s264 + $0x8] sm:$0xff] %vm398, %v745
      %vm764 = vcmask 15368
      %765 = vst.msk [vmem:[%s264] sm:$0xff] %vm764, %v760
      %766 = vst.msk [vmem:[%s264 + $0x8] sm:$0xff] %vm764, %v761
      %p767 = scmp.lt.s32.totalorder %s18, 1
      %s768 = scalar_select %p767, %s18, 1
      %s769 = smul.addr %s768, 6
      %s770 = smul.addr %s769, 4
      %s771 = scalar_lea.vmem %s5, %s770
      %p772 = scmp.lt.s32.totalorder %s18, 1
      %s773 = scalar_select %p772, %s18, 1
      %s774 = smul.addr %s773, 2
      %s775 = smul.addr %s774, 8
      %s776 = scalar_lea.vmem %s6, %s775
      // Predicated region
      $region41: #{basic_conv_net_forward.6} parent=39 // pred_check
        %p777 = pneg %p146
      $region42: #{basic_conv_net_forward.6} parent=39 // pred_check_branch
        %779 = sbr.rel (%p777) target = $region44
      $region43: #{basic_conv_net_forward.6} parent=39 // pred_region
        _
      $region44: #{basic_conv_net_forward.6} parent=39 // pred_fallthru
        _
      // Predicated region
      $region45: #{basic_conv_net_forward.6} parent=39 // pred_check
        %p780 = pneg %p172
      $region46: #{basic_conv_net_forward.6} parent=39 // pred_check_branch
        %782 = sbr.rel (%p780) target = $region48
      $region47: #{basic_conv_net_forward.6} parent=39 // pred_region
        _
      $region48: #{basic_conv_net_forward.6} parent=39 // pred_fallthru
        _
    $region40: #{basic_conv_net_forward.6} parent=5 // pred_fallthru
      _
    %p783 = scmp.le.s32.totalorder 2, %s13
    // Predicated region
    $region49: #{basic_conv_net_forward.6} parent=5 // pred_check
      %p784 = pneg %p783
    $region50: #{basic_conv_net_forward.6} parent=5 // pred_check_branch
      %786 = sbr.rel (%p784) target = $region52
    $region51: #{basic_conv_net_forward.6} parent=5 // pred_region
      %s787 = ssub.s32 %s13, 2
      // Predicated region
      $region53: #{basic_conv_net_forward.6} parent=51 // pred_check
        %p788 = pneg %p152
      $region54: #{basic_conv_net_forward.6} parent=51 // pred_check_branch
        %790 = sbr.rel (%p788) target = $region56
      $region55: #{basic_conv_net_forward.6} parent=51 // pred_region
        %p791 = scmp.lt.s32.totalorder %s19, 1
        %s792 = scalar_select %p791, %s19, 1
        %s793 = smul.addr %s792, 6
        %s794 = smul.addr %s793, 4
        %s795 = scalar_lea.vmem %s5, %s794
      $region56: #{basic_conv_net_forward.6} parent=51 // pred_fallthru
        _
      // Predicated region
      $region57: #{basic_conv_net_forward.6} parent=51 // pred_check
        %p796 = pneg %p178
      $region58: #{basic_conv_net_forward.6} parent=51 // pred_check_branch
        %798 = sbr.rel (%p796) target = $region60
      $region59: #{basic_conv_net_forward.6} parent=51 // pred_region
        %p799 = scmp.lt.s32.totalorder %s19, 1
        %s800 = scalar_select %p799, %s19, 1
        %s801 = smul.addr %s800, 2
        %s802 = smul.addr %s801, 8
        %s803 = scalar_lea.vmem %s6, %s802
      $region60: #{basic_conv_net_forward.6} parent=51 // pred_fallthru
        _
    $region52: #{basic_conv_net_forward.6} parent=5 // pred_fallthru
      _
  $region6: #{basic_conv_net_forward.6} parent=0 // loop_footer
    %s17 = sadd.s32 1, %s13
  $region7: #{basic_conv_net_forward.6} parent=0 // loop_footer_branch
    %12 = sbr.rel target = $region3
  $region8: #{basic_conv_net_forward.6} parent=0 // loop_exit
    _

// kernel: basic_conv_net_forward.9
$region0: #{basic_conv_net_forward.9}
  #allocation0 [shape = 'u32[]', space=smem, size = 0x4, offset = 0x4, fixed_abs, tag = 'smem constant byte address 0x4 - core index']
  #allocation1 [shape = 'u32[144,128]{1,0:T(1,128)}', space=vmem, size = 0x12000, scoped, tag = 'internal scratch']
  %s0 = inlined_call_operand.vmem [shape: bf16[2,128], index: 0, kind: input, shape index: {}]
  %s1 = inlined_call_operand.vmem [shape: bf16[128,128], index: 1, kind: input, shape index: {}]
  %s2 = inlined_call_operand.vmem [shape: f32[1,128], index: 2, kind: input, shape index: {}]
  %s3 = inlined_call_operand.hbm [shape: f32[2,128], index: 3, kind: output, shape index: {}]
  %s4 = sld [smem:[#allocation0]]
  $region22: #{basic_conv_net_forward.9} parent=0
    _
  %s6 = ssub.s32 1, %s4
  %s7 = scalar_select 0, %s6, %s4
  $region1: #{basic_conv_net_forward.9} parent=0
    #allocation2 [shape = 'u8[1024]{0}', space=vmem, size = 0x400, scoped, tag = 'output window, operand 0, single buffered']
    #allocation3 [shape = 's32[1]{0}', space=sflag, size = 0x4, scoped, tag = 'scoped memory for basic_conv_net_forward.9']
    %8 = vsyncpa [#allocation3], 0
    // Predicated region
    $region2: #{basic_conv_net_forward.9} parent=1 // pred_check
      _
    $region3: #{basic_conv_net_forward.9} parent=1 // pred_check_branch
      %10 = sbr.rel (0) target = $region5
    $region4: #{basic_conv_net_forward.9} parent=1 // pred_region
      _
    $region5: #{basic_conv_net_forward.9} parent=1 // pred_fallthru
      _
    // Predicated region
    $region6: #{basic_conv_net_forward.9} parent=1 // pred_check
      _
    $region7: #{basic_conv_net_forward.9} parent=1 // pred_check_branch
      %12 = sbr.rel (0) target = $region9
    $region8: #{basic_conv_net_forward.9} parent=1 // pred_region
      _
    $region9: #{basic_conv_net_forward.9} parent=1 // pred_fallthru
      _
    // Predicated region
    $region10: #{basic_conv_net_forward.9} parent=1 // pred_check
      _
    $region11: #{basic_conv_net_forward.9} parent=1 // pred_check_branch
      %14 = sbr.rel (0) target = $region13
    $region12: #{basic_conv_net_forward.9} parent=1 // pred_region
      _
    $region13: #{basic_conv_net_forward.9} parent=1 // pred_fallthru
      _
    %v16 = vld [vmem:[%s0] sm:$0x1]
    %v17 = vld [vmem:[%s1] sm:$0xf]
    %v18 = vld [vmem:[%s1 + $0x4] sm:$0xf]
    %v19 = vld [vmem:[%s1 + $0x8] sm:$0xf]
    %v20 = vld [vmem:[%s1 + $0xc] sm:$0xf]
    %v21 = vld [vmem:[%s1 + $0x10] sm:$0xf]
    %v22 = vld [vmem:[%s1 + $0x14] sm:$0xf]
    %v23 = vld [vmem:[%s1 + $0x18] sm:$0xf]
    %v24 = vld [vmem:[%s1 + $0x1c] sm:$0xf]
    %v25 = vld [vmem:[%s1 + $0x20] sm:$0xf]
    %v26 = vld [vmem:[%s1 + $0x24] sm:$0xf]
    %v27 = vld [vmem:[%s1 + $0x28] sm:$0xf]
    %v28 = vld [vmem:[%s1 + $0x2c] sm:$0xf]
    %v29 = vld [vmem:[%s1 + $0x30] sm:$0xf]
    %v30 = vld [vmem:[%s1 + $0x34] sm:$0xf]
    %v31 = vld [vmem:[%s1 + $0x38] sm:$0xf]
    %v32 = vld [vmem:[%s1 + $0x3c] sm:$0xf]
    %v33 = vld [vmem:[%s2] sm:$0x1]
    %v35 = vlaneseq
    %v36 = vshrl.u32 %v35, 7
    %v37 = vsub.s32 0, %v36
    %v38 = vrot.slane %v33, %v37
    %v56 = vunpack.c.l.b16 %v17
    %v57 = vunpack.c.l.b16 %v18
    %v58 = vunpack.c.l.b16 %v19
    %v59 = vunpack.c.l.b16 %v20
    %v60 = vunpack.c.l.b16 %v21
    %v61 = vunpack.c.l.b16 %v22
    %v62 = vunpack.c.l.b16 %v23
    %v63 = vunpack.c.l.b16 %v24
    %v64 = vunpack.c.l.b16 %v25
    %v65 = vunpack.c.l.b16 %v26
    %v66 = vunpack.c.l.b16 %v27
    %v67 = vunpack.c.l.b16 %v28
    %v68 = vunpack.c.l.b16 %v29
    %v69 = vunpack.c.l.b16 %v30
    %v70 = vunpack.c.l.b16 %v31
    %v71 = vunpack.c.l.b16 %v32
    %v72 = vpack.c.b16 %v57, %v56
    %v73 = vpack.c.b16 %v59, %v58
    %v74 = vpack.c.b16 %v61, %v60
    %v75 = vpack.c.b16 %v63, %v62
    %v76 = vpack.c.b16 %v65, %v64
    %v77 = vpack.c.b16 %v67, %v66
    %v78 = vpack.c.b16 %v69, %v68
    %v79 = vpack.c.b16 %v71, %v70
    %88 = vmatprep.subr.bf16.mxu0 0
    %89 = vmatpush1.bf16.msra.mxu0 %v72
    %90 = vmatprep.subr.bf16.mxu0 0
    %91 = vmatpush1.bf16.msra.mxu0 %v73
    %92 = vmatprep.subr.bf16.mxu0 0
    %93 = vmatpush1.bf16.msra.mxu0 %v74
    %94 = vmatprep.subr.bf16.mxu0 0
    %95 = vmatpush1.bf16.msra.mxu0 %v75
    %96 = vmatprep.subr.bf16.mxu0 0
    %97 = vmatpush1.bf16.msra.mxu0 %v76
    %98 = vmatprep.subr.bf16.mxu0 0
    %99 = vmatpush1.bf16.msra.mxu0 %v77
    %100 = vmatprep.subr.bf16.mxu0 0
    %101 = vmatpush1.bf16.msra.mxu0 %v78
    %102 = vmatprep.subr.bf16.mxu0 0
    %103 = vmatpush1.bf16.msra.mxu0 %v79
    %104 = vmatprep.subr.bf16.mxu0 0
    %105 = vmatpush1.bf16.msra.mxu0 0
    %106 = vmatprep.subr.bf16.mxu0 0
    %107 = vmatpush1.bf16.msra.mxu0 0
    %108 = vmatprep.subr.bf16.mxu0 0
    %109 = vmatpush1.bf16.msra.mxu0 0
    %110 = vmatprep.subr.bf16.mxu0 0
    %111 = vmatpush1.bf16.msra.mxu0 0
    %112 = vmatprep.subr.bf16.mxu0 0
    %113 = vmatpush1.bf16.msra.mxu0 0
    %114 = vmatprep.subr.bf16.mxu0 0
    %115 = vmatpush1.bf16.msra.mxu0 0
    %116 = vmatprep.subr.bf16.mxu0 0
    %117 = vmatpush1.bf16.msra.mxu0 0
    %118 = vmatprep.subr.bf16.mxu0 0
    %119 = vmatpush1.bf16.msra.mxu0 0
    %120 = vmatprep.mubr.bf16.mxu0 0
    %121 = vmatmul.mubr.bf16.gmra.mrb[0].mxu0 %v16
    %v122 = vpop.f32.mrb[0].mxu0
    %v123 = vadd.f32 %v38, %v122
    %v124 = vpop.f32.mrb[0].mxu0
    %v125 = vpop.f32.mrb[0].mxu0
    %v126 = vpop.f32.mrb[0].mxu0
    %127 = vdwg.mxu0
    %128 = vst [vmem:[#allocation2] sm:$0x3] %v123
    // Predicated region
    $region14: #{basic_conv_net_forward.9} parent=1 // pred_check
      _
    $region15: #{basic_conv_net_forward.9} parent=1 // pred_check_branch
      %130 = sbr.rel (0) target = $region17
    $region16: #{basic_conv_net_forward.9} parent=1 // pred_region
      %s132 = ssub.s32 32, 32
      %133 = vsyncadd [#allocation3], %s132
      %s135 = sshll.u32 [#allocation2], 4
      %s136 = int_to_ptr.vmem [resolvable:$true] %s135
      %138 = dma.vmem_to_hbm [thread:$0]  %s136, 32, %s3, [#allocation3]
    $region17: #{basic_conv_net_forward.9} parent=1 // pred_fallthru
      _
    // Predicated region
    $region18: #{basic_conv_net_forward.9} parent=1 // pred_check
      _
    $region19: #{basic_conv_net_forward.9} parent=1 // pred_check_branch
      %140 = sbr.rel (0) target = $region21
    $region20: #{basic_conv_net_forward.9} parent=1 // pred_region
      %141 = dma.done [#allocation3], 32
    $region21: #{basic_conv_net_forward.9} parent=1 // pred_fallthru
      _
    %142 = vsyncpa [#allocation3], 1

// kernel: basic_conv_net_forward.8
$region0: #{basic_conv_net_forward.8}
  #allocation0 [shape = 'u32[]', space=smem, size = 0x4, offset = 0x4, fixed_abs, tag = 'smem constant byte address 0x4 - core index']
  #allocation1 [shape = 'u32[144,128]{1,0:T(1,128)}', space=vmem, size = 0x12000, scoped, tag = 'internal scratch']
  %s0 = inlined_call_operand.vmem [shape: bf16[2,4096], index: 0, kind: input, shape index: {}]
  %s1 = inlined_call_operand.hbm [shape: bf16[4096,128], index: 1, kind: input, shape index: {}]
  %s2 = inlined_call_operand.vmem [shape: f32[1,128], index: 2, kind: input, shape index: {}]
  %s3 = inlined_call_operand.vmem [shape: bf16[2,128], index: 3, kind: output, shape index: {}]
  %s4 = sld [smem:[#allocation0]]
  $region26: #{basic_conv_net_forward.8} parent=0
    _
  %s6 = ssub.s32 1, %s4
  %s7 = scalar_select 0, %s6, %s4
  $region1: #{basic_conv_net_forward.8} parent=0
    #allocation2 [shape = 'u8[1048576]{0}', space=vmem, size = 0x100000, scoped, tag = 'input window, operand 1, single buffered']
    #allocation3 [shape = 's32[1]{0}', space=sflag, size = 0x4, scoped, tag = 'scoped memory for basic_conv_net_forward.8']
    %8 = vsyncpa [#allocation3], 0
    // Predicated region
    $region2: #{basic_conv_net_forward.8} parent=1 // pred_check
      _
    $region3: #{basic_conv_net_forward.8} parent=1 // pred_check_branch
      %10 = sbr.rel (0) target = $region5
    $region4: #{basic_conv_net_forward.8} parent=1 // pred_region
      _
    $region5: #{basic_conv_net_forward.8} parent=1 // pred_fallthru
      _
    // Predicated region
    $region6: #{basic_conv_net_forward.8} parent=1 // pred_check
      _
    $region7: #{basic_conv_net_forward.8} parent=1 // pred_check_branch
      %12 = sbr.rel (0) target = $region9
    $region8: #{basic_conv_net_forward.8} parent=1 // pred_region
      %s14 = ssub.s32 32768, 32768
      %15 = vsyncadd [#allocation3], %s14
      %s16 = sshll.u32 [#allocation2], 4
      %s17 = int_to_ptr.vmem [resolvable:$true] %s16
      %22 = dma.hbm_to_vmem [thread:$0]  %s1, 32768, %s17, [#allocation3], 64, 64, 4
    $region9: #{basic_conv_net_forward.8} parent=1 // pred_fallthru
      _
    // Predicated region
    $region10: #{basic_conv_net_forward.8} parent=1 // pred_check
      _
    $region11: #{basic_conv_net_forward.8} parent=1 // pred_check_branch
      %24 = sbr.rel (0) target = $region13
    $region12: #{basic_conv_net_forward.8} parent=1 // pred_region
      _
    $region13: #{basic_conv_net_forward.8} parent=1 // pred_fallthru
      _
    // Predicated region
    $region14: #{basic_conv_net_forward.8} parent=1 // pred_check
      _
    $region15: #{basic_conv_net_forward.8} parent=1 // pred_check_branch
      %26 = sbr.rel (0) target = $region17
    $region16: #{basic_conv_net_forward.8} parent=1 // pred_region
      %27 = dma.done [#allocation3], 32768
    $region17: #{basic_conv_net_forward.8} parent=1 // pred_fallthru
      _
    %v29 = vld [vmem:[%s0] sm:$0xff]
    %v30 = vld [vmem:[%s0 + $0x8] sm:$0xff]
    %v31 = vld [vmem:[%s0 + $0x10] sm:$0xff]
    %v32 = vld [vmem:[%s0 + $0x18] sm:$0xff]
    %v33 = vld [vmem:[#allocation2] sm:$0xf]
    %v34 = vld [vmem:[#allocation2 + $0x4] sm:$0xf]
    %v35 = vld [vmem:[#allocation2 + $0x8] sm:$0xf]
    %v36 = vld [vmem:[#allocation2 + $0xc] sm:$0xf]
    %v37 = vld [vmem:[#allocation2 + $0x10] sm:$0xf]
    %v38 = vld [vmem:[#allocation2 + $0x14] sm:$0xf]
    %v39 = vld [vmem:[#allocation2 + $0x18] sm:$0xf]
    %v40 = vld [vmem:[#allocation2 + $0x1c] sm:$0xf]
    %v41 = vld [vmem:[#allocation2 + $0x20] sm:$0xf]
    %v42 = vld [vmem:[#allocation2 + $0x24] sm:$0xf]
    %v43 = vld [vmem:[#allocation2 + $0x28] sm:$0xf]
    %v44 = vld [vmem:[#allocation2 + $0x2c] sm:$0xf]
    %v45 = vld [vmem:[#allocation2 + $0x30] sm:$0xf]
    %v46 = vld [vmem:[#allocation2 + $0x34] sm:$0xf]
    %v47 = vld [vmem:[#allocation2 + $0x38] sm:$0xf]
    %v48 = vld [vmem:[#allocation2 + $0x3c] sm:$0xf]
    %v49 = vld [vmem:[#allocation2 + $0x40] sm:$0xf]
    %v50 = vld [vmem:[#allocation2 + $0x44] sm:$0xf]
    %v51 = vld [vmem:[#allocation2 + $0x48] sm:$0xf]
    %v52 = vld [vmem:[#allocation2 + $0x4c] sm:$0xf]
    %v53 = vld [vmem:[#allocation2 + $0x50] sm:$0xf]
    %v54 = vld [vmem:[#allocation2 + $0x54] sm:$0xf]
    %v55 = vld [vmem:[#allocation2 + $0x58] sm:$0xf]
    %v56 = vld [vmem:[#allocation2 + $0x5c] sm:$0xf]
    %v57 = vld [vmem:[#allocation2 + $0x60] sm:$0xf]
    %v58 = vld [vmem:[#allocation2 + $0x64] sm:$0xf]
    %v59 = vld [vmem:[#allocation2 + $0x68] sm:$0xf]
    %v60 = vld [vmem:[#allocation2 + $0x6c] sm:$0xf]
    %v61 = vld [vmem:[#allocation2 + $0x70] sm:$0xf]
    %v62 = vld [vmem:[#allocation2 + $0x74] sm:$0xf]
    %v63 = vld [vmem:[#allocation2 + $0x78] sm:$0xf]
    %v64 = vld [vmem:[#allocation2 + $0x7c] sm:$0xf]
    %v65 = vld [vmem:[#allocation2 + $0x80] sm:$0xf]
    %v66 = vld [vmem:[#allocation2 + $0x84] sm:$0xf]
    %v67 = vld [vmem:[#allocation2 + $0x88] sm:$0xf]
    %v68 = vld [vmem:[#allocation2 + $0x8c] sm:$0xf]
    %v69 = vld [vmem:[#allocation2 + $0x90] sm:$0xf]
    %v70 = vld [vmem:[#allocation2 + $0x94] sm:$0xf]
    %v71 = vld [vmem:[#allocation2 + $0x98] sm:$0xf]
    %v72 = vld [vmem:[#allocation2 + $0x9c] sm:$0xf]
    %v73 = vld [vmem:[#allocation2 + $0xa0] sm:$0xf]
    %v74 = vld [vmem:[#allocation2 + $0xa4] sm:$0xf]
    %v75 = vld [vmem:[#allocation2 + $0xa8] sm:$0xf]
    %v76 = vld [vmem:[#allocation2 + $0xac] sm:$0xf]
    %v77 = vld [vmem:[#allocation2 + $0xb0] sm:$0xf]
    %v78 = vld [vmem:[#allocation2 + $0xb4] sm:$0xf]
    %v79 = vld [vmem:[#allocation2 + $0xb8] sm:$0xf]
    %v80 = vld [vmem:[#allocation2 + $0xbc] sm:$0xf]
    %v81 = vld [vmem:[#allocation2 + $0xc0] sm:$0xf]
    %v82 = vld [vmem:[#allocation2 + $0xc4] sm:$0xf]
    %v83 = vld [vmem:[#allocation2 + $0xc8] sm:$0xf]
    %v84 = vld [vmem:[#allocation2 + $0xcc] sm:$0xf]
    %v85 = vld [vmem:[#allocation2 + $0xd0] sm:$0xf]
    %v86 = vld [vmem:[#allocation2 + $0xd4] sm:$0xf]
    %v87 = vld [vmem:[#allocation2 + $0xd8] sm:$0xf]
    %v88 = vld [vmem:[#allocation2 + $0xdc] sm:$0xf]
    %v89 = vld [vmem:[#allocation2 + $0xe0] sm:$0xf]
    %v90 = vld [vmem:[#allocation2 + $0xe4] sm:$0xf]
    %v91 = vld [vmem:[#allocation2 + $0xe8] sm:$0xf]
    %v92 = vld [vmem:[#allocation2 + $0xec] sm:$0xf]
    %v93 = vld [vmem:[#allocation2 + $0xf0] sm:$0xf]
    %v94 = vld [vmem:[#allocation2 + $0xf4] sm:$0xf]
    %v95 = vld [vmem:[#allocation2 + $0xf8] sm:$0xf]
    %v96 = vld [vmem:[#allocation2 + $0xfc] sm:$0xf]
    %v97 = vld [vmem:[#allocation2 + $0x100] sm:$0xf]
    %v98 = vld [vmem:[#allocation2 + $0x104] sm:$0xf]
    %v99 = vld [vmem:[#allocation2 + $0x108] sm:$0xf]
    %v100 = vld [vmem:[#allocation2 + $0x10c] sm:$0xf]
    %v101 = vld [vmem:[#allocation2 + $0x110] sm:$0xf]
    %v102 = vld [vmem:[#allocation2 + $0x114] sm:$0xf]
    %v103 = vld [vmem:[#allocation2 + $0x118] sm:$0xf]
    %v104 = vld [vmem:[#allocation2 + $0x11c] sm:$0xf]
    %v105 = vld [vmem:[#allocation2 + $0x120] sm:$0xf]
    %v106 = vld [vmem:[#allocation2 + $0x124] sm:$0xf]
    %v107 = vld [vmem:[#allocation2 + $0x128] sm:$0xf]
    %v108 = vld [vmem:[#allocation2 + $0x12c] sm:$0xf]
    %v109 = vld [vmem:[#allocation2 + $0x130] sm:$0xf]
    %v110 = vld [vmem:[#allocation2 + $0x134] sm:$0xf]
    %v111 = vld [vmem:[#allocation2 + $0x138] sm:$0xf]
    %v112 = vld [vmem:[#allocation2 + $0x13c] sm:$0xf]
    %v113 = vld [vmem:[#allocation2 + $0x140] sm:$0xf]
    %v114 = vld [vmem:[#allocation2 + $0x144] sm:$0xf]
    %v115 = vld [vmem:[#allocation2 + $0x148] sm:$0xf]
    %v116 = vld [vmem:[#allocation2 + $0x14c] sm:$0xf]
    %v117 = vld [vmem:[#allocation2 + $0x150] sm:$0xf]
    %v118 = vld [vmem:[#allocation2 + $0x154] sm:$0xf]
    %v119 = vld [vmem:[#allocation2 + $0x158] sm:$0xf]
    %v120 = vld [vmem:[#allocation2 + $0x15c] sm:$0xf]
    %v121 = vld [vmem:[#allocation2 + $0x160] sm:$0xf]
    %v122 = vld [vmem:[#allocation2 + $0x164] sm:$0xf]
    %v123 = vld [vmem:[#allocation2 + $0x168] sm:$0xf]
    %v124 = vld [vmem:[#allocation2 + $0x16c] sm:$0xf]
    %v125 = vld [vmem:[#allocation2 + $0x170] sm:$0xf]
    %v126 = vld [vmem:[#allocation2 + $0x174] sm:$0xf]
    %v127 = vld [vmem:[#allocation2 + $0x178] sm:$0xf]
    %v128 = vld [vmem:[#allocation2 + $0x17c] sm:$0xf]
    %v129 = vld [vmem:[#allocation2 + $0x180] sm:$0xf]
    %v130 = vld [vmem:[#allocation2 + $0x184] sm:$0xf]
    %v131 = vld [vmem:[#allocation2 + $0x188] sm:$0xf]
    %v132 = vld [vmem:[#allocation2 + $0x18c] sm:$0xf]
    %v133 = vld [vmem:[#allocation2 + $0x190] sm:$0xf]
    %v134 = vld [vmem:[#allocation2 + $0x194] sm:$0xf]
    %v135 = vld [vmem:[#allocation2 + $0x198] sm:$0xf]
    %v136 = vld [vmem:[#allocation2 + $0x19c] sm:$0xf]
    %v137 = vld [vmem:[#allocation2 + $0x1a0] sm:$0xf]
    %v138 = vld [vmem:[#allocation2 + $0x1a4] sm:$0xf]
    %v139 = vld [vmem:[#allocation2 + $0x1a8] sm:$0xf]
    %v140 = vld [vmem:[#allocation2 + $0x1ac] sm:$0xf]
    %v141 = vld [vmem:[#allocation2 + $0x1b0] sm:$0xf]
    %v142 = vld [vmem:[#allocation2 + $0x1b4] sm:$0xf]
    %v143 = vld [vmem:[#allocation2 + $0x1b8] sm:$0xf]
    %v144 = vld [vmem:[#allocation2 + $0x1bc] sm:$0xf]
    %v145 = vld [vmem:[#allocation2 + $0x1c0] sm:$0xf]
    %v146 = vld [vmem:[#allocation2 + $0x1c4] sm:$0xf]
    %v147 = vld [vmem:[#allocation2 + $0x1c8] sm:$0xf]
    %v148 = vld [vmem:[#allocation2 + $0x1cc] sm:$0xf]
    %v149 = vld [vmem:[#allocation2 + $0x1d0] sm:$0xf]
    %v150 = vld [vmem:[#allocation2 + $0x1d4] sm:$0xf]
    %v151 = vld [vmem:[#allocation2 + $0x1d8] sm:$0xf]
    %v152 = vld [vmem:[#allocation2 + $0x1dc] sm:$0xf]
    %v153 = vld [vmem:[#allocation2 + $0x1e0] sm:$0xf]
    %v154 = vld [vmem:[#allocation2 + $0x1e4] sm:$0xf]
    %v155 = vld [vmem:[#allocation2 + $0x1e8] sm:$0xf]
    %v156 = vld [vmem:[#allocation2 + $0x1ec] sm:$0xf]
    %v157 = vld [vmem:[#allocation2 + $0x1f0] sm:$0xf]
    %v158 = vld [vmem:[#allocation2 + $0x1f4] sm:$0xf]
    %v159 = vld [vmem:[#allocation2 + $0x1f8] sm:$0xf]
    %v160 = vld [vmem:[#allocation2 + $0x1fc] sm:$0xf]
    %v161 = vld [vmem:[#allocation2 + $0x200] sm:$0xf]
    %v162 = vld [vmem:[#allocation2 + $0x204] sm:$0xf]
    %v163 = vld [vmem:[#allocation2 + $0x208] sm:$0xf]
    %v164 = vld [vmem:[#allocation2 + $0x20c] sm:$0xf]
    %v165 = vld [vmem:[#allocation2 + $0x210] sm:$0xf]
    %v166 = vld [vmem:[#allocation2 + $0x214] sm:$0xf]
    %v167 = vld [vmem:[#allocation2 + $0x218] sm:$0xf]
    %v168 = vld [vmem:[#allocation2 + $0x21c] sm:$0xf]
    %v169 = vld [vmem:[#allocation2 + $0x220] sm:$0xf]
    %v170 = vld [vmem:[#allocation2 + $0x224] sm:$0xf]
    %v171 = vld [vmem:[#allocation2 + $0x228] sm:$0xf]
    %v172 = vld [vmem:[#allocation2 + $0x22c] sm:$0xf]
    %v173 = vld [vmem:[#allocation2 + $0x230] sm:$0xf]
    %v174 = vld [vmem:[#allocation2 + $0x234] sm:$0xf]
    %v175 = vld [vmem:[#allocation2 + $0x238] sm:$0xf]
    %v176 = vld [vmem:[#allocation2 + $0x23c] sm:$0xf]
    %v177 = vld [vmem:[#allocation2 + $0x240] sm:$0xf]
    %v178 = vld [vmem:[#allocation2 + $0x244] sm:$0xf]
    %v179 = vld [vmem:[#allocation2 + $0x248] sm:$0xf]
    %v180 = vld [vmem:[#allocation2 + $0x24c] sm:$0xf]
    %v181 = vld [vmem:[#allocation2 + $0x250] sm:$0xf]
    %v182 = vld [vmem:[#allocation2 + $0x254] sm:$0xf]
    %v183 = vld [vmem:[#allocation2 + $0x258] sm:$0xf]
    %v184 = vld [vmem:[#allocation2 + $0x25c] sm:$0xf]
    %v185 = vld [vmem:[#allocation2 + $0x260] sm:$0xf]
    %v186 = vld [vmem:[#allocation2 + $0x264] sm:$0xf]
    %v187 = vld [vmem:[#allocation2 + $0x268] sm:$0xf]
    %v188 = vld [vmem:[#allocation2 + $0x26c] sm:$0xf]
    %v189 = vld [vmem:[#allocation2 + $0x270] sm:$0xf]
    %v190 = vld [vmem:[#allocation2 + $0x274] sm:$0xf]
    %v191 = vld [vmem:[#allocation2 + $0x278] sm:$0xf]
    %v192 = vld [vmem:[#allocation2 + $0x27c] sm:$0xf]
    %v193 = vld [vmem:[#allocation2 + $0x280] sm:$0xf]
    %v194 = vld [vmem:[#allocation2 + $0x284] sm:$0xf]
    %v195 = vld [vmem:[#allocation2 + $0x288] sm:$0xf]
    %v196 = vld [vmem:[#allocation2 + $0x28c] sm:$0xf]
    %v197 = vld [vmem:[#allocation2 + $0x290] sm:$0xf]
    %v198 = vld [vmem:[#allocation2 + $0x294] sm:$0xf]
    %v199 = vld [vmem:[#allocation2 + $0x298] sm:$0xf]
    %v200 = vld [vmem:[#allocation2 + $0x29c] sm:$0xf]
    %v201 = vld [vmem:[#allocation2 + $0x2a0] sm:$0xf]
    %v202 = vld [vmem:[#allocation2 + $0x2a4] sm:$0xf]
    %v203 = vld [vmem:[#allocation2 + $0x2a8] sm:$0xf]
    %v204 = vld [vmem:[#allocation2 + $0x2ac] sm:$0xf]
    %v205 = vld [vmem:[#allocation2 + $0x2b0] sm:$0xf]
    %v206 = vld [vmem:[#allocation2 + $0x2b4] sm:$0xf]
    %v207 = vld [vmem:[#allocation2 + $0x2b8] sm:$0xf]
    %v208 = vld [vmem:[#allocation2 + $0x2bc] sm:$0xf]
    %v209 = vld [vmem:[#allocation2 + $0x2c0] sm:$0xf]
    %v210 = vld [vmem:[#allocation2 + $0x2c4] sm:$0xf]
    %v211 = vld [vmem:[#allocation2 + $0x2c8] sm:$0xf]
    %v212 = vld [vmem:[#allocation2 + $0x2cc] sm:$0xf]
    %v213 = vld [vmem:[#allocation2 + $0x2d0] sm:$0xf]
    %v214 = vld [vmem:[#allocation2 + $0x2d4] sm:$0xf]
    %v215 = vld [vmem:[#allocation2 + $0x2d8] sm:$0xf]
    %v216 = vld [vmem:[#allocation2 + $0x2dc] sm:$0xf]
    %v217 = vld [vmem:[#allocation2 + $0x2e0] sm:$0xf]
    %v218 = vld [vmem:[#allocation2 + $0x2e4] sm:$0xf]
    %v219 = vld [vmem:[#allocation2 + $0x2e8] sm:$0xf]
    %v220 = vld [vmem:[#allocation2 + $0x2ec] sm:$0xf]
    %v221 = vld [vmem:[#allocation2 + $0x2f0] sm:$0xf]
    %v222 = vld [vmem:[#allocation2 + $0x2f4] sm:$0xf]
    %v223 = vld [vmem:[#allocation2 + $0x2f8] sm:$0xf]
    %v224 = vld [vmem:[#allocation2 + $0x2fc] sm:$0xf]
    %v225 = vld [vmem:[#allocation2 + $0x300] sm:$0xf]
    %v226 = vld [vmem:[#allocation2 + $0x304] sm:$0xf]
    %v227 = vld [vmem:[#allocation2 + $0x308] sm:$0xf]
    %v228 = vld [vmem:[#allocation2 + $0x30c] sm:$0xf]
    %v229 = vld [vmem:[#allocation2 + $0x310] sm:$0xf]
    %v230 = vld [vmem:[#allocation2 + $0x314] sm:$0xf]
    %v231 = vld [vmem:[#allocation2 + $0x318] sm:$0xf]
    %v232 = vld [vmem:[#allocation2 + $0x31c] sm:$0xf]
    %v233 = vld [vmem:[#allocation2 + $0x320] sm:$0xf]
    %v234 = vld [vmem:[#allocation2 + $0x324] sm:$0xf]
    %v235 = vld [vmem:[#allocation2 + $0x328] sm:$0xf]
    %v236 = vld [vmem:[#allocation2 + $0x32c] sm:$0xf]
    %v237 = vld [vmem:[#allocation2 + $0x330] sm:$0xf]
    %v238 = vld [vmem:[#allocation2 + $0x334] sm:$0xf]
    %v239 = vld [vmem:[#allocation2 + $0x338] sm:$0xf]
    %v240 = vld [vmem:[#allocation2 + $0x33c] sm:$0xf]
    %v241 = vld [vmem:[#allocation2 + $0x340] sm:$0xf]
    %v242 = vld [vmem:[#allocation2 + $0x344] sm:$0xf]
    %v243 = vld [vmem:[#allocation2 + $0x348] sm:$0xf]
    %v244 = vld [vmem:[#allocation2 + $0x34c] sm:$0xf]
    %v245 = vld [vmem:[#allocation2 + $0x350] sm:$0xf]
    %v246 = vld [vmem:[#allocation2 + $0x354] sm:$0xf]
    %v247 = vld [vmem:[#allocation2 + $0x358] sm:$0xf]
    %v248 = vld [vmem:[#allocation2 + $0x35c] sm:$0xf]
    %v249 = vld [vmem:[#allocation2 + $0x360] sm:$0xf]
    %v250 = vld [vmem:[#allocation2 + $0x364] sm:$0xf]
    %v251 = vld [vmem:[#allocation2 + $0x368] sm:$0xf]
    %v252 = vld [vmem:[#allocation2 + $0x36c] sm:$0xf]
    %v253 = vld [vmem:[#allocation2 + $0x370] sm:$0xf]
    %v254 = vld [vmem:[#allocation2 + $0x374] sm:$0xf]
    %v255 = vld [vmem:[#allocation2 + $0x378] sm:$0xf]
    %v256 = vld [vmem:[#allocation2 + $0x37c] sm:$0xf]
    %v257 = vld [vmem:[#allocation2 + $0x380] sm:$0xf]
    %v258 = vld [vmem:[#allocation2 + $0x384] sm:$0xf]
    %v259 = vld [vmem:[#allocation2 + $0x388] sm:$0xf]
    %v260 = vld [vmem:[#allocation2 + $0x38c] sm:$0xf]
    %v261 = vld [vmem:[#allocation2 + $0x390] sm:$0xf]
    %v262 = vld [vmem:[#allocation2 + $0x394] sm:$0xf]
    %v263 = vld [vmem:[#allocation2 + $0x398] sm:$0xf]
    %v264 = vld [vmem:[#allocation2 + $0x39c] sm:$0xf]
    %v265 = vld [vmem:[#allocation2 + $0x3a0] sm:$0xf]
    %v266 = vld [vmem:[#allocation2 + $0x3a4] sm:$0xf]
    %v267 = vld [vmem:[#allocation2 + $0x3a8] sm:$0xf]
    %v268 = vld [vmem:[#allocation2 + $0x3ac] sm:$0xf]
    %v269 = vld [vmem:[#allocation2 + $0x3b0] sm:$0xf]
    %v270 = vld [vmem:[#allocation2 + $0x3b4] sm:$0xf]
    %v271 = vld [vmem:[#allocation2 + $0x3b8] sm:$0xf]
    %v272 = vld [vmem:[#allocation2 + $0x3bc] sm:$0xf]
    %v273 = vld [vmem:[#allocation2 + $0x3c0] sm:$0xf]
    %v274 = vld [vmem:[#allocation2 + $0x3c4] sm:$0xf]
    %v275 = vld [vmem:[#allocation2 + $0x3c8] sm:$0xf]
    %v276 = vld [vmem:[#allocation2 + $0x3cc] sm:$0xf]
    %v277 = vld [vmem:[#allocation2 + $0x3d0] sm:$0xf]
    %v278 = vld [vmem:[#allocation2 + $0x3d4] sm:$0xf]
    %v279 = vld [vmem:[#allocation2 + $0x3d8] sm:$0xf]
    %v280 = vld [vmem:[#allocation2 + $0x3dc] sm:$0xf]
    %v281 = vld [vmem:[#allocation2 + $0x3e0] sm:$0xf]
    %v282 = vld [vmem:[#allocation2 + $0x3e4] sm:$0xf]
    %v283 = vld [vmem:[#allocation2 + $0x3e8] sm:$0xf]
    %v284 = vld [vmem:[#allocation2 + $0x3ec] sm:$0xf]
    %v285 = vld [vmem:[#allocation2 + $0x3f0] sm:$0xf]
    %v286 = vld [vmem:[#allocation2 + $0x3f4] sm:$0xf]
    %v287 = vld [vmem:[#allocation2 + $0x3f8] sm:$0xf]
    %v288 = vld [vmem:[#allocation2 + $0x3fc] sm:$0xf]
    %v289 = vld [vmem:[#allocation2 + $0x400] sm:$0xf]
    %v290 = vld [vmem:[#allocation2 + $0x404] sm:$0xf]
    %v291 = vld [vmem:[#allocation2 + $0x408] sm:$0xf]
    %v292 = vld [vmem:[#allocation2 + $0x40c] sm:$0xf]
    %v293 = vld [vmem:[#allocation2 + $0x410] sm:$0xf]
    %v294 = vld [vmem:[#allocation2 + $0x414] sm:$0xf]
    %v295 = vld [vmem:[#allocation2 + $0x418] sm:$0xf]
    %v296 = vld [vmem:[#allocation2 + $0x41c] sm:$0xf]
    %v297 = vld [vmem:[#allocation2 + $0x420] sm:$0xf]
    %v298 = vld [vmem:[#allocation2 + $0x424] sm:$0xf]
    %v299 = vld [vmem:[#allocation2 + $0x428] sm:$0xf]
    %v300 = vld [vmem:[#allocation2 + $0x42c] sm:$0xf]
    %v301 = vld [vmem:[#allocation2 + $0x430] sm:$0xf]
    %v302 = vld [vmem:[#allocation2 + $0x434] sm:$0xf]
    %v303 = vld [vmem:[#allocation2 + $0x438] sm:$0xf]
    %v304 = vld [vmem:[#allocation2 + $0x43c] sm:$0xf]
    %v305 = vld [vmem:[#allocation2 + $0x440] sm:$0xf]
    %v306 = vld [vmem:[#allocation2 + $0x444] sm:$0xf]
    %v307 = vld [vmem:[#allocation2 + $0x448] sm:$0xf]
    %v308 = vld [vmem:[#allocation2 + $0x44c] sm:$0xf]
    %v309 = vld [vmem:[#allocation2 + $0x450] sm:$0xf]
    %v310 = vld [vmem:[#allocation2 + $0x454] sm:$0xf]
    %v311 = vld [vmem:[#allocation2 + $0x458] sm:$0xf]
    %v312 = vld [vmem:[#allocation2 + $0x45c] sm:$0xf]
    %v313 = vld [vmem:[#allocation2 + $0x460] sm:$0xf]
    %v314 = vld [vmem:[#allocation2 + $0x464] sm:$0xf]
    %v315 = vld [vmem:[#allocation2 + $0x468] sm:$0xf]
    %v316 = vld [vmem:[#allocation2 + $0x46c] sm:$0xf]
    %v317 = vld [vmem:[#allocation2 + $0x470] sm:$0xf]
    %v318 = vld [vmem:[#allocation2 + $0x474] sm:$0xf]
    %v319 = vld [vmem:[#allocation2 + $0x478] sm:$0xf]
    %v320 = vld [vmem:[#allocation2 + $0x47c] sm:$0xf]
    %v321 = vld [vmem:[#allocation2 + $0x480] sm:$0xf]
    %v322 = vld [vmem:[#allocation2 + $0x484] sm:$0xf]
    %v323 = vld [vmem:[#allocation2 + $0x488] sm:$0xf]
    %v324 = vld [vmem:[#allocation2 + $0x48c] sm:$0xf]
    %v325 = vld [vmem:[#allocation2 + $0x490] sm:$0xf]
    %v326 = vld [vmem:[#allocation2 + $0x494] sm:$0xf]
    %v327 = vld [vmem:[#allocation2 + $0x498] sm:$0xf]
    %v328 = vld [vmem:[#allocation2 + $0x49c] sm:$0xf]
    %v329 = vld [vmem:[#allocation2 + $0x4a0] sm:$0xf]
    %v330 = vld [vmem:[#allocation2 + $0x4a4] sm:$0xf]
    %v331 = vld [vmem:[#allocation2 + $0x4a8] sm:$0xf]
    %v332 = vld [vmem:[#allocation2 + $0x4ac] sm:$0xf]
    %v333 = vld [vmem:[#allocation2 + $0x4b0] sm:$0xf]
    %v334 = vld [vmem:[#allocation2 + $0x4b4] sm:$0xf]
    %v335 = vld [vmem:[#allocation2 + $0x4b8] sm:$0xf]
    %v336 = vld [vmem:[#allocation2 + $0x4bc] sm:$0xf]
    %v337 = vld [vmem:[#allocation2 + $0x4c0] sm:$0xf]
    %v338 = vld [vmem:[#allocation2 + $0x4c4] sm:$0xf]
    %v339 = vld [vmem:[#allocation2 + $0x4c8] sm:$0xf]
    %v340 = vld [vmem:[#allocation2 + $0x4cc] sm:$0xf]
    %v341 = vld [vmem:[#allocation2 + $0x4d0] sm:$0xf]
    %v342 = vld [vmem:[#allocation2 + $0x4d4] sm:$0xf]
    %v343 = vld [vmem:[#allocation2 + $0x4d8] sm:$0xf]
    %v344 = vld [vmem:[#allocation2 + $0x4dc] sm:$0xf]
    %v345 = vld [vmem:[#allocation2 + $0x4e0] sm:$0xf]
    %v346 = vld [vmem:[#allocation2 + $0x4e4] sm:$0xf]
    %v347 = vld [vmem:[#allocation2 + $0x4e8] sm:$0xf]
    %v348 = vld [vmem:[#allocation2 + $0x4ec] sm:$0xf]
    %v349 = vld [vmem:[#allocation2 + $0x4f0] sm:$0xf]
    %v350 = vld [vmem:[#allocation2 + $0x4f4] sm:$0xf]
    %v351 = vld [vmem:[#allocation2 + $0x4f8] sm:$0xf]
    %v352 = vld [vmem:[#allocation2 + $0x4fc] sm:$0xf]
    %v353 = vld [vmem:[#allocation2 + $0x500] sm:$0xf]
    %v354 = vld [vmem:[#allocation2 + $0x504] sm:$0xf]
    %v355 = vld [vmem:[#allocation2 + $0x508] sm:$0xf]
    %v356 = vld [vmem:[#allocation2 + $0x50c] sm:$0xf]
    %v357 = vld [vmem:[#allocation2 + $0x510] sm:$0xf]
    %v358 = vld [vmem:[#allocation2 + $0x514] sm:$0xf]
    %v359 = vld [vmem:[#allocation2 + $0x518] sm:$0xf]
    %v360 = vld [vmem:[#allocation2 + $0x51c] sm:$0xf]
    %v361 = vld [vmem:[#allocation2 + $0x520] sm:$0xf]
    %v362 = vld [vmem:[#allocation2 + $0x524] sm:$0xf]
    %v363 = vld [vmem:[#allocation2 + $0x528] sm:$0xf]
    %v364 = vld [vmem:[#allocation2 + $0x52c] sm:$0xf]
    %v365 = vld [vmem:[#allocation2 + $0x530] sm:$0xf]
    %v366 = vld [vmem:[#allocation2 + $0x534] sm:$0xf]
    %v367 = vld [vmem:[#allocation2 + $0x538] sm:$0xf]
    %v368 = vld [vmem:[#allocation2 + $0x53c] sm:$0xf]
    %v369 = vld [vmem:[#allocation2 + $0x540] sm:$0xf]
    %v370 = vld [vmem:[#allocation2 + $0x544] sm:$0xf]
    %v371 = vld [vmem:[#allocation2 + $0x548] sm:$0xf]
    %v372 = vld [vmem:[#allocation2 + $0x54c] sm:$0xf]
    %v373 = vld [vmem:[#allocation2 + $0x550] sm:$0xf]
    %v374 = vld [vmem:[#allocation2 + $0x554] sm:$0xf]
    %v375 = vld [vmem:[#allocation2 + $0x558] sm:$0xf]
    %v376 = vld [vmem:[#allocation2 + $0x55c] sm:$0xf]
    %v377 = vld [vmem:[#allocation2 + $0x560] sm:$0xf]
    %v378 = vld [vmem:[#allocation2 + $0x564] sm:$0xf]
    %v379 = vld [vmem:[#allocation2 + $0x568] sm:$0xf]
    %v380 = vld [vmem:[#allocation2 + $0x56c] sm:$0xf]
    %v381 = vld [vmem:[#allocation2 + $0x570] sm:$0xf]
    %v382 = vld [vmem:[#allocation2 + $0x574] sm:$0xf]
    %v383 = vld [vmem:[#allocation2 + $0x578] sm:$0xf]
    %v384 = vld [vmem:[#allocation2 + $0x57c] sm:$0xf]
    %v385 = vld [vmem:[#allocation2 + $0x580] sm:$0xf]
    %v386 = vld [vmem:[#allocation2 + $0x584] sm:$0xf]
    %v387 = vld [vmem:[#allocation2 + $0x588] sm:$0xf]
    %v388 = vld [vmem:[#allocation2 + $0x58c] sm:$0xf]
    %v389 = vld [vmem:[#allocation2 + $0x590] sm:$0xf]
    %v390 = vld [vmem:[#allocation2 + $0x594] sm:$0xf]
    %v391 = vld [vmem:[#allocation2 + $0x598] sm:$0xf]
    %v392 = vld [vmem:[#allocation2 + $0x59c] sm:$0xf]
    %v393 = vld [vmem:[#allocation2 + $0x5a0] sm:$0xf]
    %v394 = vld [vmem:[#allocation2 + $0x5a4] sm:$0xf]
    %v395 = vld [vmem:[#allocation2 + $0x5a8] sm:$0xf]
    %v396 = vld [vmem:[#allocation2 + $0x5ac] sm:$0xf]
    %v397 = vld [vmem:[#allocation2 + $0x5b0] sm:$0xf]
    %v398 = vld [vmem:[#allocation2 + $0x5b4] sm:$0xf]
    %v399 = vld [vmem:[#allocation2 + $0x5b8] sm:$0xf]
    %v400 = vld [vmem:[#allocation2 + $0x5bc] sm:$0xf]
    %v401 = vld [vmem:[#allocation2 + $0x5c0] sm:$0xf]
    %v402 = vld [vmem:[#allocation2 + $0x5c4] sm:$0xf]
    %v403 = vld [vmem:[#allocation2 + $0x5c8] sm:$0xf]
    %v404 = vld [vmem:[#allocation2 + $0x5cc] sm:$0xf]
    %v405 = vld [vmem:[#allocation2 + $0x5d0] sm:$0xf]
    %v406 = vld [vmem:[#allocation2 + $0x5d4] sm:$0xf]
    %v407 = vld [vmem:[#allocation2 + $0x5d8] sm:$0xf]
    %v408 = vld [vmem:[#allocation2 + $0x5dc] sm:$0xf]
    %v409 = vld [vmem:[#allocation2 + $0x5e0] sm:$0xf]
    %v410 = vld [vmem:[#allocation2 + $0x5e4] sm:$0xf]
    %v411 = vld [vmem:[#allocation2 + $0x5e8] sm:$0xf]
    %v412 = vld [vmem:[#allocation2 + $0x5ec] sm:$0xf]
    %v413 = vld [vmem:[#allocation2 + $0x5f0] sm:$0xf]
    %v414 = vld [vmem:[#allocation2 + $0x5f4] sm:$0xf]
    %v415 = vld [vmem:[#allocation2 + $0x5f8] sm:$0xf]
    %v416 = vld [vmem:[#allocation2 + $0x5fc] sm:$0xf]
    %v417 = vld [vmem:[#allocation2 + $0x600] sm:$0xf]
    %v418 = vld [vmem:[#allocation2 + $0x604] sm:$0xf]
    %v419 = vld [vmem:[#allocation2 + $0x608] sm:$0xf]
    %v420 = vld [vmem:[#allocation2 + $0x60c] sm:$0xf]
    %v421 = vld [vmem:[#allocation2 + $0x610] sm:$0xf]
    %v422 = vld [vmem:[#allocation2 + $0x614] sm:$0xf]
    %v423 = vld [vmem:[#allocation2 + $0x618] sm:$0xf]
    %v424 = vld [vmem:[#allocation2 + $0x61c] sm:$0xf]
    %v425 = vld [vmem:[#allocation2 + $0x620] sm:$0xf]
    %v426 = vld [vmem:[#allocation2 + $0x624] sm:$0xf]
    %v427 = vld [vmem:[#allocation2 + $0x628] sm:$0xf]
    %v428 = vld [vmem:[#allocation2 + $0x62c] sm:$0xf]
    %v429 = vld [vmem:[#allocation2 + $0x630] sm:$0xf]
    %v430 = vld [vmem:[#allocation2 + $0x634] sm:$0xf]
    %v431 = vld [vmem:[#allocation2 + $0x638] sm:$0xf]
    %v432 = vld [vmem:[#allocation2 + $0x63c] sm:$0xf]
    %v433 = vld [vmem:[#allocation2 + $0x640] sm:$0xf]
    %v434 = vld [vmem:[#allocation2 + $0x644] sm:$0xf]
    %v435 = vld [vmem:[#allocation2 + $0x648] sm:$0xf]
    %v436 = vld [vmem:[#allocation2 + $0x64c] sm:$0xf]
    %v437 = vld [vmem:[#allocation2 + $0x650] sm:$0xf]
    %v438 = vld [vmem:[#allocation2 + $0x654] sm:$0xf]
    %v439 = vld [vmem:[#allocation2 + $0x658] sm:$0xf]
    %v440 = vld [vmem:[#allocation2 + $0x65c] sm:$0xf]
    %v441 = vld [vmem:[#allocation2 + $0x660] sm:$0xf]
    %v442 = vld [vmem:[#allocation2 + $0x664] sm:$0xf]
    %v443 = vld [vmem:[#allocation2 + $0x668] sm:$0xf]
    %v444 = vld [vmem:[#allocation2 + $0x66c] sm:$0xf]
    %v445 = vld [vmem:[#allocation2 + $0x670] sm:$0xf]
    %v446 = vld [vmem:[#allocation2 + $0x674] sm:$0xf]
    %v447 = vld [vmem:[#allocation2 + $0x678] sm:$0xf]
    %v448 = vld [vmem:[#allocation2 + $0x67c] sm:$0xf]
    %v449 = vld [vmem:[#allocation2 + $0x680] sm:$0xf]
    %v450 = vld [vmem:[#allocation2 + $0x684] sm:$0xf]
    %v451 = vld [vmem:[#allocation2 + $0x688] sm:$0xf]
    %v452 = vld [vmem:[#allocation2 + $0x68c] sm:$0xf]
    %v453 = vld [vmem:[#allocation2 + $0x690] sm:$0xf]
    %v454 = vld [vmem:[#allocation2 + $0x694] sm:$0xf]
    %v455 = vld [vmem:[#allocation2 + $0x698] sm:$0xf]
    %v456 = vld [vmem:[#allocation2 + $0x69c] sm:$0xf]
    %v457 = vld [vmem:[#allocation2 + $0x6a0] sm:$0xf]
    %v458 = vld [vmem:[#allocation2 + $0x6a4] sm:$0xf]
    %v459 = vld [vmem:[#allocation2 + $0x6a8] sm:$0xf]
    %v460 = vld [vmem:[#allocation2 + $0x6ac] sm:$0xf]
    %v461 = vld [vmem:[#allocation2 + $0x6b0] sm:$0xf]
    %v462 = vld [vmem:[#allocation2 + $0x6b4] sm:$0xf]
    %v463 = vld [vmem:[#allocation2 + $0x6b8] sm:$0xf]
    %v464 = vld [vmem:[#allocation2 + $0x6bc] sm:$0xf]
    %v465 = vld [vmem:[#allocation2 + $0x6c0] sm:$0xf]
    %v466 = vld [vmem:[#allocation2 + $0x6c4] sm:$0xf]
    %v467 = vld [vmem:[#allocation2 + $0x6c8] sm:$0xf]
    %v468 = vld [vmem:[#allocation2 + $0x6cc] sm:$0xf]
    %v469 = vld [vmem:[#allocation2 + $0x6d0] sm:$0xf]
    %v470 = vld [vmem:[#allocation2 + $0x6d4] sm:$0xf]
    %v471 = vld [vmem:[#allocation2 + $0x6d8] sm:$0xf]
    %v472 = vld [vmem:[#allocation2 + $0x6dc] sm:$0xf]
    %v473 = vld [vmem:[#allocation2 + $0x6e0] sm:$0xf]
    %v474 = vld [vmem:[#allocation2 + $0x6e4] sm:$0xf]
    %v475 = vld [vmem:[#allocation2 + $0x6e8] sm:$0xf]
    %v476 = vld [vmem:[#allocation2 + $0x6ec] sm:$0xf]
    %v477 = vld [vmem:[#allocation2 + $0x6f0] sm:$0xf]
    %v478 = vld [vmem:[#allocation2 + $0x6f4] sm:$0xf]
    %v479 = vld [vmem:[#allocation2 + $0x6f8] sm:$0xf]
    %v480 = vld [vmem:[#allocation2 + $0x6fc] sm:$0xf]
    %v481 = vld [vmem:[#allocation2 + $0x700] sm:$0xf]
    %v482 = vld [vmem:[#allocation2 + $0x704] sm:$0xf]
    %v483 = vld [vmem:[#allocation2 + $0x708] sm:$0xf]
    %v484 = vld [vmem:[#allocation2 + $0x70c] sm:$0xf]
    %v485 = vld [vmem:[#allocation2 + $0x710] sm:$0xf]
    %v486 = vld [vmem:[#allocation2 + $0x714] sm:$0xf]
    %v487 = vld [vmem:[#allocation2 + $0x718] sm:$0xf]
    %v488 = vld [vmem:[#allocation2 + $0x71c] sm:$0xf]
    %v489 = vld [vmem:[#allocation2 + $0x720] sm:$0xf]
    %v490 = vld [vmem:[#allocation2 + $0x724] sm:$0xf]
    %v491 = vld [vmem:[#allocation2 + $0x728] sm:$0xf]
    %v492 = vld [vmem:[#allocation2 + $0x72c] sm:$0xf]
    %v493 = vld [vmem:[#allocation2 + $0x730] sm:$0xf]
    %v494 = vld [vmem:[#allocation2 + $0x734] sm:$0xf]
    %v495 = vld [vmem:[#allocation2 + $0x738] sm:$0xf]
    %v496 = vld [vmem:[#allocation2 + $0x73c] sm:$0xf]
    %v497 = vld [vmem:[#allocation2 + $0x740] sm:$0xf]
    %v498 = vld [vmem:[#allocation2 + $0x744] sm:$0xf]
    %v499 = vld [vmem:[#allocation2 + $0x748] sm:$0xf]
    %v500 = vld [vmem:[#allocation2 + $0x74c] sm:$0xf]
    %v501 = vld [vmem:[#allocation2 + $0x750] sm:$0xf]
    %v502 = vld [vmem:[#allocation2 + $0x754] sm:$0xf]
    %v503 = vld [vmem:[#allocation2 + $0x758] sm:$0xf]
    %v504 = vld [vmem:[#allocation2 + $0x75c] sm:$0xf]
    %v505 = vld [vmem:[#allocation2 + $0x760] sm:$0xf]
    %v506 = vld [vmem:[#allocation2 + $0x764] sm:$0xf]
    %v507 = vld [vmem:[#allocation2 + $0x768] sm:$0xf]
    %v508 = vld [vmem:[#allocation2 + $0x76c] sm:$0xf]
    %v509 = vld [vmem:[#allocation2 + $0x770] sm:$0xf]
    %v510 = vld [vmem:[#allocation2 + $0x774] sm:$0xf]
    %v511 = vld [vmem:[#allocation2 + $0x778] sm:$0xf]
    %v512 = vld [vmem:[#allocation2 + $0x77c] sm:$0xf]
    %v513 = vld [vmem:[#allocation2 + $0x780] sm:$0xf]
    %v514 = vld [vmem:[#allocation2 + $0x784] sm:$0xf]
    %v515 = vld [vmem:[#allocation2 + $0x788] sm:$0xf]
    %v516 = vld [vmem:[#allocation2 + $0x78c] sm:$0xf]
    %v517 = vld [vmem:[#allocation2 + $0x790] sm:$0xf]
    %v518 = vld [vmem:[#allocation2 + $0x794] sm:$0xf]
    %v519 = vld [vmem:[#allocation2 + $0x798] sm:$0xf]
    %v520 = vld [vmem:[#allocation2 + $0x79c] sm:$0xf]
    %v521 = vld [vmem:[#allocation2 + $0x7a0] sm:$0xf]
    %v522 = vld [vmem:[#allocation2 + $0x7a4] sm:$0xf]
    %v523 = vld [vmem:[#allocation2 + $0x7a8] sm:$0xf]
    %v524 = vld [vmem:[#allocation2 + $0x7ac] sm:$0xf]
    %v525 = vld [vmem:[#allocation2 + $0x7b0] sm:$0xf]
    %v526 = vld [vmem:[#allocation2 + $0x7b4] sm:$0xf]
    %v527 = vld [vmem:[#allocation2 + $0x7b8] sm:$0xf]
    %v528 = vld [vmem:[#allocation2 + $0x7bc] sm:$0xf]
    %v529 = vld [vmem:[#allocation2 + $0x7c0] sm:$0xf]
    %v530 = vld [vmem:[#allocation2 + $0x7c4] sm:$0xf]
    %v531 = vld [vmem:[#allocation2 + $0x7c8] sm:$0xf]
    %v532 = vld [vmem:[#allocation2 + $0x7cc] sm:$0xf]
    %v533 = vld [vmem:[#allocation2 + $0x7d0] sm:$0xf]
    %v534 = vld [vmem:[#allocation2 + $0x7d4] sm:$0xf]
    %v535 = vld [vmem:[#allocation2 + $0x7d8] sm:$0xf]
    %v536 = vld [vmem:[#allocation2 + $0x7dc] sm:$0xf]
    %v537 = vld [vmem:[#allocation2 + $0x7e0] sm:$0xf]
    %v538 = vld [vmem:[#allocation2 + $0x7e4] sm:$0xf]
    %v539 = vld [vmem:[#allocation2 + $0x7e8] sm:$0xf]
    %v540 = vld [vmem:[#allocation2 + $0x7ec] sm:$0xf]
    %v541 = vld [vmem:[#allocation2 + $0x7f0] sm:$0xf]
    %v542 = vld [vmem:[#allocation2 + $0x7f4] sm:$0xf]
    %v543 = vld [vmem:[#allocation2 + $0x7f8] sm:$0xf]
    %v544 = vld [vmem:[#allocation2 + $0x7fc] sm:$0xf]
    %v545 = vld [vmem:[%s2] sm:$0x1]
    %v547 = vlaneseq
    %v548 = vshrl.u32 %v547, 7
    %v549 = vsub.s32 0, %v548
    %v550 = vrot.slane %v545, %v549
    %v556 = vcombine.high %v29, %v29
    %v558 = vunpack.c.l.s4 1966171168
    %v559 = vunpack.c.0.s8 %v558
    %v560 = vlaneseq
    %v561 = vshrl.u32 %v560, 7
    %v562 = vsub.s32 %v559, %v561
    %v563 = vrot.slane %v29, %v562
    %v565 = vunpack.c.l.s4 1966171168
    %v566 = vunpack.c.0.s8 %v565
    %v567 = vlaneseq
    %v568 = vshrl.u32 %v567, 7
    %v569 = vsub.s32 %v566, %v568
    %v570 = vrot.slane %v556, %v569
    %v571 = vcombine.high %v563, %v563
    %v572 = vcombine.high %v570, %v570
    %v574 = vunpack.c.l.s4 1966171168
    %v575 = vunpack.c.0.s8 %v574
    %v576 = vlaneseq
    %v577 = vshrl.u32 %v576, 7
    %v578 = vsub.s32 %v575, %v577
    %v579 = vrot.slane %v563, %v578
    %v581 = vunpack.c.l.s4 1966171168
    %v582 = vunpack.c.0.s8 %v581
    %v583 = vlaneseq
    %v584 = vshrl.u32 %v583, 7
    %v585 = vsub.s32 %v582, %v584
    %v586 = vrot.slane %v570, %v585
    %v588 = vunpack.c.l.s4 1966171168
    %v589 = vunpack.c.0.s8 %v588
    %v590 = vlaneseq
    %v591 = vshrl.u32 %v590, 7
    %v592 = vsub.s32 %v589, %v591
    %v593 = vrot.slane %v571, %v592
    %v595 = vunpack.c.l.s4 1966171168
    %v596 = vunpack.c.0.s8 %v595
    %v597 = vlaneseq
    %v598 = vshrl.u32 %v597, 7
    %v599 = vsub.s32 %v596, %v598
    %v600 = vrot.slane %v572, %v599
    %v601 = vcombine.high %v579, %v579
    %v602 = vcombine.high %v586, %v586
    %v603 = vcombine.high %v593, %v593
    %v604 = vcombine.high %v600, %v600
    %v605 = vcombine.high %v30, %v30
    %v607 = vunpack.c.l.s4 1966171168
    %v608 = vunpack.c.0.s8 %v607
    %v609 = vlaneseq
    %v610 = vshrl.u32 %v609, 7
    %v611 = vsub.s32 %v608, %v610
    %v612 = vrot.slane %v30, %v611
    %v614 = vunpack.c.l.s4 1966171168
    %v615 = vunpack.c.0.s8 %v614
    %v616 = vlaneseq
    %v617 = vshrl.u32 %v616, 7
    %v618 = vsub.s32 %v615, %v617
    %v619 = vrot.slane %v605, %v618
    %v620 = vcombine.high %v612, %v612
    %v621 = vcombine.high %v619, %v619
    %v623 = vunpack.c.l.s4 1966171168
    %v624 = vunpack.c.0.s8 %v623
    %v625 = vlaneseq
    %v626 = vshrl.u32 %v625, 7
    %v627 = vsub.s32 %v624, %v626
    %v628 = vrot.slane %v612, %v627
    %v630 = vunpack.c.l.s4 1966171168
    %v631 = vunpack.c.0.s8 %v630
    %v632 = vlaneseq
    %v633 = vshrl.u32 %v632, 7
    %v634 = vsub.s32 %v631, %v633
    %v635 = vrot.slane %v619, %v634
    %v637 = vunpack.c.l.s4 1966171168
    %v638 = vunpack.c.0.s8 %v637
    %v639 = vlaneseq
    %v640 = vshrl.u32 %v639, 7
    %v641 = vsub.s32 %v638, %v640
    %v642 = vrot.slane %v620, %v641
    %v644 = vunpack.c.l.s4 1966171168
    %v645 = vunpack.c.0.s8 %v644
    %v646 = vlaneseq
    %v647 = vshrl.u32 %v646, 7
    %v648 = vsub.s32 %v645, %v647
    %v649 = vrot.slane %v621, %v648
    %v650 = vcombine.high %v628, %v628
    %v651 = vcombine.high %v635, %v635
    %v652 = vcombine.high %v642, %v642
    %v653 = vcombine.high %v649, %v649
    %v654 = vcombine.high %v31, %v31
    %v656 = vunpack.c.l.s4 1966171168
    %v657 = vunpack.c.0.s8 %v656
    %v658 = vlaneseq
    %v659 = vshrl.u32 %v658, 7
    %v660 = vsub.s32 %v657, %v659
    %v661 = vrot.slane %v31, %v660
    %v663 = vunpack.c.l.s4 1966171168
    %v664 = vunpack.c.0.s8 %v663
    %v665 = vlaneseq
    %v666 = vshrl.u32 %v665, 7
    %v667 = vsub.s32 %v664, %v666
    %v668 = vrot.slane %v654, %v667
    %v669 = vcombine.high %v661, %v661
    %v670 = vcombine.high %v668, %v668
    %v672 = vunpack.c.l.s4 1966171168
    %v673 = vunpack.c.0.s8 %v672
    %v674 = vlaneseq
    %v675 = vshrl.u32 %v674, 7
    %v676 = vsub.s32 %v673, %v675
    %v677 = vrot.slane %v661, %v676
    %v679 = vunpack.c.l.s4 1966171168
    %v680 = vunpack.c.0.s8 %v679
    %v681 = vlaneseq
    %v682 = vshrl.u32 %v681, 7
    %v683 = vsub.s32 %v680, %v682
    %v684 = vrot.slane %v668, %v683
    %v686 = vunpack.c.l.s4 1966171168
    %v687 = vunpack.c.0.s8 %v686
    %v688 = vlaneseq
    %v689 = vshrl.u32 %v688, 7
    %v690 = vsub.s32 %v687, %v689
    %v691 = vrot.slane %v669, %v690
    %v693 = vunpack.c.l.s4 1966171168
    %v694 = vunpack.c.0.s8 %v693
    %v695 = vlaneseq
    %v696 = vshrl.u32 %v695, 7
    %v697 = vsub.s32 %v694, %v696
    %v698 = vrot.slane %v670, %v697
    %v699 = vcombine.high %v677, %v677
    %v700 = vcombine.high %v684, %v684
    %v701 = vcombine.high %v691, %v691
    %v702 = vcombine.high %v698, %v698
    %v703 = vcombine.high %v32, %v32
    %v705 = vunpack.c.l.s4 1966171168
    %v706 = vunpack.c.0.s8 %v705
    %v707 = vlaneseq
    %v708 = vshrl.u32 %v707, 7
    %v709 = vsub.s32 %v706, %v708
    %v710 = vrot.slane %v32, %v709
    %v712 = vunpack.c.l.s4 1966171168
    %v713 = vunpack.c.0.s8 %v712
    %v714 = vlaneseq
    %v715 = vshrl.u32 %v714, 7
    %v716 = vsub.s32 %v713, %v715
    %v717 = vrot.slane %v703, %v716
    %v718 = vcombine.high %v710, %v710
    %v719 = vcombine.high %v717, %v717
    %v721 = vunpack.c.l.s4 1966171168
    %v722 = vunpack.c.0.s8 %v721
    %v723 = vlaneseq
    %v724 = vshrl.u32 %v723, 7
    %v725 = vsub.s32 %v722, %v724
    %v726 = vrot.slane %v710, %v725
    %v728 = vunpack.c.l.s4 1966171168
    %v729 = vunpack.c.0.s8 %v728
    %v730 = vlaneseq
    %v731 = vshrl.u32 %v730, 7
    %v732 = vsub.s32 %v729, %v731
    %v733 = vrot.slane %v717, %v732
    %v735 = vunpack.c.l.s4 1966171168
    %v736 = vunpack.c.0.s8 %v735
    %v737 = vlaneseq
    %v738 = vshrl.u32 %v737, 7
    %v739 = vsub.s32 %v736, %v738
    %v740 = vrot.slane %v718, %v739
    %v742 = vunpack.c.l.s4 1966171168
    %v743 = vunpack.c.0.s8 %v742
    %v744 = vlaneseq
    %v745 = vshrl.u32 %v744, 7
    %v746 = vsub.s32 %v743, %v745
    %v747 = vrot.slane %v719, %v746
    %v748 = vcombine.high %v726, %v726
    %v749 = vcombine.high %v733, %v733
    %v750 = vcombine.high %v740, %v740
    %v751 = vcombine.high %v747, %v747
    %v1296 = vunpack.c.l.b16 %v33
    %v1297 = vunpack.c.l.b16 %v34
    %v1298 = vunpack.c.l.b16 %v35
    %v1299 = vunpack.c.l.b16 %v36
    %v1300 = vunpack.c.l.b16 %v37
    %v1301 = vunpack.c.l.b16 %v38
    %v1302 = vunpack.c.l.b16 %v39
    %v1303 = vunpack.c.l.b16 %v40
    %v1304 = vunpack.c.l.b16 %v41
    %v1305 = vunpack.c.l.b16 %v42
    %v1306 = vunpack.c.l.b16 %v43
    %v1307 = vunpack.c.l.b16 %v44
    %v1308 = vunpack.c.l.b16 %v45
    %v1309 = vunpack.c.l.b16 %v46
    %v1310 = vunpack.c.l.b16 %v47
    %v1311 = vunpack.c.l.b16 %v48
    %v1312 = vunpack.c.l.b16 %v49
    %v1313 = vunpack.c.l.b16 %v50
    %v1314 = vunpack.c.l.b16 %v51
    %v1315 = vunpack.c.l.b16 %v52
    %v1316 = vunpack.c.l.b16 %v53
    %v1317 = vunpack.c.l.b16 %v54
    %v1318 = vunpack.c.l.b16 %v55
    %v1319 = vunpack.c.l.b16 %v56
    %v1320 = vunpack.c.l.b16 %v57
    %v1321 = vunpack.c.l.b16 %v58
    %v1322 = vunpack.c.l.b16 %v59
    %v1323 = vunpack.c.l.b16 %v60
    %v1324 = vunpack.c.l.b16 %v61
    %v1325 = vunpack.c.l.b16 %v62
    %v1326 = vunpack.c.l.b16 %v63
    %v1327 = vunpack.c.l.b16 %v64
    %v1328 = vunpack.c.l.b16 %v65
    %v1329 = vunpack.c.l.b16 %v66
    %v1330 = vunpack.c.l.b16 %v67
    %v1331 = vunpack.c.l.b16 %v68
    %v1332 = vunpack.c.l.b16 %v69
    %v1333 = vunpack.c.l.b16 %v70
    %v1334 = vunpack.c.l.b16 %v71
    %v1335 = vunpack.c.l.b16 %v72
    %v1336 = vunpack.c.l.b16 %v73
    %v1337 = vunpack.c.l.b16 %v74
    %v1338 = vunpack.c.l.b16 %v75
    %v1339 = vunpack.c.l.b16 %v76
    %v1340 = vunpack.c.l.b16 %v77
    %v1341 = vunpack.c.l.b16 %v78
    %v1342 = vunpack.c.l.b16 %v79
    %v1343 = vunpack.c.l.b16 %v80
    %v1344 = vunpack.c.l.b16 %v81
    %v1345 = vunpack.c.l.b16 %v82
    %v1346 = vunpack.c.l.b16 %v83
    %v1347 = vunpack.c.l.b16 %v84
    %v1348 = vunpack.c.l.b16 %v85
    %v1349 = vunpack.c.l.b16 %v86
    %v1350 = vunpack.c.l.b16 %v87
    %v1351 = vunpack.c.l.b16 %v88
    %v1352 = vunpack.c.l.b16 %v89
    %v1353 = vunpack.c.l.b16 %v90
    %v1354 = vunpack.c.l.b16 %v91
    %v1355 = vunpack.c.l.b16 %v92
    %v1356 = vunpack.c.l.b16 %v93
    %v1357 = vunpack.c.l.b16 %v94
    %v1358 = vunpack.c.l.b16 %v95
    %v1359 = vunpack.c.l.b16 %v96
    %v1360 = vunpack.c.l.b16 %v97
    %v1361 = vunpack.c.l.b16 %v98
    %v1362 = vunpack.c.l.b16 %v99
    %v1363 = vunpack.c.l.b16 %v100
    %v1364 = vunpack.c.l.b16 %v101
    %v1365 = vunpack.c.l.b16 %v102
    %v1366 = vunpack.c.l.b16 %v103
    %v1367 = vunpack.c.l.b16 %v104
    %v1368 = vunpack.c.l.b16 %v105
    %v1369 = vunpack.c.l.b16 %v106
    %v1370 = vunpack.c.l.b16 %v107
    %v1371 = vunpack.c.l.b16 %v108
    %v1372 = vunpack.c.l.b16 %v109
    %v1373 = vunpack.c.l.b16 %v110
    %v1374 = vunpack.c.l.b16 %v111
    %v1375 = vunpack.c.l.b16 %v112
    %v1376 = vunpack.c.l.b16 %v113
    %v1377 = vunpack.c.l.b16 %v114
    %v1378 = vunpack.c.l.b16 %v115
    %v1379 = vunpack.c.l.b16 %v116
    %v1380 = vunpack.c.l.b16 %v117
    %v1381 = vunpack.c.l.b16 %v118
    %v1382 = vunpack.c.l.b16 %v119
    %v1383 = vunpack.c.l.b16 %v120
    %v1384 = vunpack.c.l.b16 %v121
    %v1385 = vunpack.c.l.b16 %v122
    %v1386 = vunpack.c.l.b16 %v123
    %v1387 = vunpack.c.l.b16 %v124
    %v1388 = vunpack.c.l.b16 %v125
    %v1389 = vunpack.c.l.b16 %v126
    %v1390 = vunpack.c.l.b16 %v127
    %v1391 = vunpack.c.l.b16 %v128
    %v1392 = vunpack.c.l.b16 %v129
    %v1393 = vunpack.c.l.b16 %v130
    %v1394 = vunpack.c.l.b16 %v131
    %v1395 = vunpack.c.l.b16 %v132
    %v1396 = vunpack.c.l.b16 %v133
    %v1397 = vunpack.c.l.b16 %v134
    %v1398 = vunpack.c.l.b16 %v135
    %v1399 = vunpack.c.l.b16 %v136
    %v1400 = vunpack.c.l.b16 %v137
    %v1401 = vunpack.c.l.b16 %v138
    %v1402 = vunpack.c.l.b16 %v139
    %v1403 = vunpack.c.l.b16 %v140
    %v1404 = vunpack.c.l.b16 %v141
    %v1405 = vunpack.c.l.b16 %v142
    %v1406 = vunpack.c.l.b16 %v143
    %v1407 = vunpack.c.l.b16 %v144
    %v1408 = vunpack.c.l.b16 %v145
    %v1409 = vunpack.c.l.b16 %v146
    %v1410 = vunpack.c.l.b16 %v147
    %v1411 = vunpack.c.l.b16 %v148
    %v1412 = vunpack.c.l.b16 %v149
    %v1413 = vunpack.c.l.b16 %v150
    %v1414 = vunpack.c.l.b16 %v151
    %v1415 = vunpack.c.l.b16 %v152
    %v1416 = vunpack.c.l.b16 %v153
    %v1417 = vunpack.c.l.b16 %v154
    %v1418 = vunpack.c.l.b16 %v155
    %v1419 = vunpack.c.l.b16 %v156
    %v1420 = vunpack.c.l.b16 %v157
    %v1421 = vunpack.c.l.b16 %v158
    %v1422 = vunpack.c.l.b16 %v159
    %v1423 = vunpack.c.l.b16 %v160
    %v1424 = vunpack.c.l.b16 %v161
    %v1425 = vunpack.c.l.b16 %v162
    %v1426 = vunpack.c.l.b16 %v163
    %v1427 = vunpack.c.l.b16 %v164
    %v1428 = vunpack.c.l.b16 %v165
    %v1429 = vunpack.c.l.b16 %v166
    %v1430 = vunpack.c.l.b16 %v167
    %v1431 = vunpack.c.l.b16 %v168
    %v1432 = vunpack.c.l.b16 %v169
    %v1433 = vunpack.c.l.b16 %v170
    %v1434 = vunpack.c.l.b16 %v171
    %v1435 = vunpack.c.l.b16 %v172
    %v1436 = vunpack.c.l.b16 %v173
    %v1437 = vunpack.c.l.b16 %v174
    %v1438 = vunpack.c.l.b16 %v175
    %v1439 = vunpack.c.l.b16 %v176
    %v1440 = vunpack.c.l.b16 %v177
    %v1441 = vunpack.c.l.b16 %v178
    %v1442 = vunpack.c.l.b16 %v179
    %v1443 = vunpack.c.l.b16 %v180
    %v1444 = vunpack.c.l.b16 %v181
    %v1445 = vunpack.c.l.b16 %v182
    %v1446 = vunpack.c.l.b16 %v183
    %v1447 = vunpack.c.l.b16 %v184
    %v1448 = vunpack.c.l.b16 %v185
    %v1449 = vunpack.c.l.b16 %v186
    %v1450 = vunpack.c.l.b16 %v187
    %v1451 = vunpack.c.l.b16 %v188
    %v1452 = vunpack.c.l.b16 %v189
    %v1453 = vunpack.c.l.b16 %v190
    %v1454 = vunpack.c.l.b16 %v191
    %v1455 = vunpack.c.l.b16 %v192
    %v1456 = vunpack.c.l.b16 %v193
    %v1457 = vunpack.c.l.b16 %v194
    %v1458 = vunpack.c.l.b16 %v195
    %v1459 = vunpack.c.l.b16 %v196
    %v1460 = vunpack.c.l.b16 %v197
    %v1461 = vunpack.c.l.b16 %v198
    %v1462 = vunpack.c.l.b16 %v199
    %v1463 = vunpack.c.l.b16 %v200
    %v1464 = vunpack.c.l.b16 %v201
    %v1465 = vunpack.c.l.b16 %v202
    %v1466 = vunpack.c.l.b16 %v203
    %v1467 = vunpack.c.l.b16 %v204
    %v1468 = vunpack.c.l.b16 %v205
    %v1469 = vunpack.c.l.b16 %v206
    %v1470 = vunpack.c.l.b16 %v207
    %v1471 = vunpack.c.l.b16 %v208
    %v1472 = vunpack.c.l.b16 %v209
    %v1473 = vunpack.c.l.b16 %v210
    %v1474 = vunpack.c.l.b16 %v211
    %v1475 = vunpack.c.l.b16 %v212
    %v1476 = vunpack.c.l.b16 %v213
    %v1477 = vunpack.c.l.b16 %v214
    %v1478 = vunpack.c.l.b16 %v215
    %v1479 = vunpack.c.l.b16 %v216
    %v1480 = vunpack.c.l.b16 %v217
    %v1481 = vunpack.c.l.b16 %v218
    %v1482 = vunpack.c.l.b16 %v219
    %v1483 = vunpack.c.l.b16 %v220
    %v1484 = vunpack.c.l.b16 %v221
    %v1485 = vunpack.c.l.b16 %v222
    %v1486 = vunpack.c.l.b16 %v223
    %v1487 = vunpack.c.l.b16 %v224
    %v1488 = vunpack.c.l.b16 %v225
    %v1489 = vunpack.c.l.b16 %v226
    %v1490 = vunpack.c.l.b16 %v227
    %v1491 = vunpack.c.l.b16 %v228
    %v1492 = vunpack.c.l.b16 %v229
    %v1493 = vunpack.c.l.b16 %v230
    %v1494 = vunpack.c.l.b16 %v231
    %v1495 = vunpack.c.l.b16 %v232
    %v1496 = vunpack.c.l.b16 %v233
    %v1497 = vunpack.c.l.b16 %v234
    %v1498 = vunpack.c.l.b16 %v235
    %v1499 = vunpack.c.l.b16 %v236
    %v1500 = vunpack.c.l.b16 %v237
    %v1501 = vunpack.c.l.b16 %v238
    %v1502 = vunpack.c.l.b16 %v239
    %v1503 = vunpack.c.l.b16 %v240
    %v1504 = vunpack.c.l.b16 %v241
    %v1505 = vunpack.c.l.b16 %v242
    %v1506 = vunpack.c.l.b16 %v243
    %v1507 = vunpack.c.l.b16 %v244
    %v1508 = vunpack.c.l.b16 %v245
    %v1509 = vunpack.c.l.b16 %v246
    %v1510 = vunpack.c.l.b16 %v247
    %v1511 = vunpack.c.l.b16 %v248
    %v1512 = vunpack.c.l.b16 %v249
    %v1513 = vunpack.c.l.b16 %v250
    %v1514 = vunpack.c.l.b16 %v251
    %v1515 = vunpack.c.l.b16 %v252
    %v1516 = vunpack.c.l.b16 %v253
    %v1517 = vunpack.c.l.b16 %v254
    %v1518 = vunpack.c.l.b16 %v255
    %v1519 = vunpack.c.l.b16 %v256
    %v1520 = vunpack.c.l.b16 %v257
    %v1521 = vunpack.c.l.b16 %v258
    %v1522 = vunpack.c.l.b16 %v259
    %v1523 = vunpack.c.l.b16 %v260
    %v1524 = vunpack.c.l.b16 %v261
    %v1525 = vunpack.c.l.b16 %v262
    %v1526 = vunpack.c.l.b16 %v263
    %v1527 = vunpack.c.l.b16 %v264
    %v1528 = vunpack.c.l.b16 %v265
    %v1529 = vunpack.c.l.b16 %v266
    %v1530 = vunpack.c.l.b16 %v267
    %v1531 = vunpack.c.l.b16 %v268
    %v1532 = vunpack.c.l.b16 %v269
    %v1533 = vunpack.c.l.b16 %v270
    %v1534 = vunpack.c.l.b16 %v271
    %v1535 = vunpack.c.l.b16 %v272
    %v1536 = vunpack.c.l.b16 %v273
    %v1537 = vunpack.c.l.b16 %v274
    %v1538 = vunpack.c.l.b16 %v275
    %v1539 = vunpack.c.l.b16 %v276
    %v1540 = vunpack.c.l.b16 %v277
    %v1541 = vunpack.c.l.b16 %v278
    %v1542 = vunpack.c.l.b16 %v279
    %v1543 = vunpack.c.l.b16 %v280
    %v1544 = vunpack.c.l.b16 %v281
    %v1545 = vunpack.c.l.b16 %v282
    %v1546 = vunpack.c.l.b16 %v283
    %v1547 = vunpack.c.l.b16 %v284
    %v1548 = vunpack.c.l.b16 %v285
    %v1549 = vunpack.c.l.b16 %v286
    %v1550 = vunpack.c.l.b16 %v287
    %v1551 = vunpack.c.l.b16 %v288
    %v1552 = vunpack.c.l.b16 %v289
    %v1553 = vunpack.c.l.b16 %v290
    %v1554 = vunpack.c.l.b16 %v291
    %v1555 = vunpack.c.l.b16 %v292
    %v1556 = vunpack.c.l.b16 %v293
    %v1557 = vunpack.c.l.b16 %v294
    %v1558 = vunpack.c.l.b16 %v295
    %v1559 = vunpack.c.l.b16 %v296
    %v1560 = vunpack.c.l.b16 %v297
    %v1561 = vunpack.c.l.b16 %v298
    %v1562 = vunpack.c.l.b16 %v299
    %v1563 = vunpack.c.l.b16 %v300
    %v1564 = vunpack.c.l.b16 %v301
    %v1565 = vunpack.c.l.b16 %v302
    %v1566 = vunpack.c.l.b16 %v303
    %v1567 = vunpack.c.l.b16 %v304
    %v1568 = vunpack.c.l.b16 %v305
    %v1569 = vunpack.c.l.b16 %v306
    %v1570 = vunpack.c.l.b16 %v307
    %v1571 = vunpack.c.l.b16 %v308
    %v1572 = vunpack.c.l.b16 %v309
    %v1573 = vunpack.c.l.b16 %v310
    %v1574 = vunpack.c.l.b16 %v311
    %v1575 = vunpack.c.l.b16 %v312
    %v1576 = vunpack.c.l.b16 %v313
    %v1577 = vunpack.c.l.b16 %v314
    %v1578 = vunpack.c.l.b16 %v315
    %v1579 = vunpack.c.l.b16 %v316
    %v1580 = vunpack.c.l.b16 %v317
    %v1581 = vunpack.c.l.b16 %v318
    %v1582 = vunpack.c.l.b16 %v319
    %v1583 = vunpack.c.l.b16 %v320
    %v1584 = vunpack.c.l.b16 %v321
    %v1585 = vunpack.c.l.b16 %v322
    %v1586 = vunpack.c.l.b16 %v323
    %v1587 = vunpack.c.l.b16 %v324
    %v1588 = vunpack.c.l.b16 %v325
    %v1589 = vunpack.c.l.b16 %v326
    %v1590 = vunpack.c.l.b16 %v327
    %v1591 = vunpack.c.l.b16 %v328
    %v1592 = vunpack.c.l.b16 %v329
    %v1593 = vunpack.c.l.b16 %v330
    %v1594 = vunpack.c.l.b16 %v331
    %v1595 = vunpack.c.l.b16 %v332
    %v1596 = vunpack.c.l.b16 %v333
    %v1597 = vunpack.c.l.b16 %v334
    %v1598 = vunpack.c.l.b16 %v335
    %v1599 = vunpack.c.l.b16 %v336
    %v1600 = vunpack.c.l.b16 %v337
    %v1601 = vunpack.c.l.b16 %v338
    %v1602 = vunpack.c.l.b16 %v339
    %v1603 = vunpack.c.l.b16 %v340
    %v1604 = vunpack.c.l.b16 %v341
    %v1605 = vunpack.c.l.b16 %v342
    %v1606 = vunpack.c.l.b16 %v343
    %v1607 = vunpack.c.l.b16 %v344
    %v1608 = vunpack.c.l.b16 %v345
    %v1609 = vunpack.c.l.b16 %v346
    %v1610 = vunpack.c.l.b16 %v347
    %v1611 = vunpack.c.l.b16 %v348
    %v1612 = vunpack.c.l.b16 %v349
    %v1613 = vunpack.c.l.b16 %v350
    %v1614 = vunpack.c.l.b16 %v351
    %v1615 = vunpack.c.l.b16 %v352
    %v1616 = vunpack.c.l.b16 %v353
    %v1617 = vunpack.c.l.b16 %v354
    %v1618 = vunpack.c.l.b16 %v355
    %v1619 = vunpack.c.l.b16 %v356
    %v1620 = vunpack.c.l.b16 %v357
    %v1621 = vunpack.c.l.b16 %v358
    %v1622 = vunpack.c.l.b16 %v359
    %v1623 = vunpack.c.l.b16 %v360
    %v1624 = vunpack.c.l.b16 %v361
    %v1625 = vunpack.c.l.b16 %v362
    %v1626 = vunpack.c.l.b16 %v363
    %v1627 = vunpack.c.l.b16 %v364
    %v1628 = vunpack.c.l.b16 %v365
    %v1629 = vunpack.c.l.b16 %v366
    %v1630 = vunpack.c.l.b16 %v367
    %v1631 = vunpack.c.l.b16 %v368
    %v1632 = vunpack.c.l.b16 %v369
    %v1633 = vunpack.c.l.b16 %v370
    %v1634 = vunpack.c.l.b16 %v371
    %v1635 = vunpack.c.l.b16 %v372
    %v1636 = vunpack.c.l.b16 %v373
    %v1637 = vunpack.c.l.b16 %v374
    %v1638 = vunpack.c.l.b16 %v375
    %v1639 = vunpack.c.l.b16 %v376
    %v1640 = vunpack.c.l.b16 %v377
    %v1641 = vunpack.c.l.b16 %v378
    %v1642 = vunpack.c.l.b16 %v379
    %v1643 = vunpack.c.l.b16 %v380
    %v1644 = vunpack.c.l.b16 %v381
    %v1645 = vunpack.c.l.b16 %v382
    %v1646 = vunpack.c.l.b16 %v383
    %v1647 = vunpack.c.l.b16 %v384
    %v1648 = vunpack.c.l.b16 %v385
    %v1649 = vunpack.c.l.b16 %v386
    %v1650 = vunpack.c.l.b16 %v387
    %v1651 = vunpack.c.l.b16 %v388
    %v1652 = vunpack.c.l.b16 %v389
    %v1653 = vunpack.c.l.b16 %v390
    %v1654 = vunpack.c.l.b16 %v391
    %v1655 = vunpack.c.l.b16 %v392
    %v1656 = vunpack.c.l.b16 %v393
    %v1657 = vunpack.c.l.b16 %v394
    %v1658 = vunpack.c.l.b16 %v395
    %v1659 = vunpack.c.l.b16 %v396
    %v1660 = vunpack.c.l.b16 %v397
    %v1661 = vunpack.c.l.b16 %v398
    %v1662 = vunpack.c.l.b16 %v399
    %v1663 = vunpack.c.l.b16 %v400
    %v1664 = vunpack.c.l.b16 %v401
    %v1665 = vunpack.c.l.b16 %v402
    %v1666 = vunpack.c.l.b16 %v403
    %v1667 = vunpack.c.l.b16 %v404
    %v1668 = vunpack.c.l.b16 %v405
    %v1669 = vunpack.c.l.b16 %v406
    %v1670 = vunpack.c.l.b16 %v407
    %v1671 = vunpack.c.l.b16 %v408
    %v1672 = vunpack.c.l.b16 %v409
    %v1673 = vunpack.c.l.b16 %v410
    %v1674 = vunpack.c.l.b16 %v411
    %v1675 = vunpack.c.l.b16 %v412
    %v1676 = vunpack.c.l.b16 %v413
    %v1677 = vunpack.c.l.b16 %v414
    %v1678 = vunpack.c.l.b16 %v415
    %v1679 = vunpack.c.l.b16 %v416
    %v1680 = vunpack.c.l.b16 %v417
    %v1681 = vunpack.c.l.b16 %v418
    %v1682 = vunpack.c.l.b16 %v419
    %v1683 = vunpack.c.l.b16 %v420
    %v1684 = vunpack.c.l.b16 %v421
    %v1685 = vunpack.c.l.b16 %v422
    %v1686 = vunpack.c.l.b16 %v423
    %v1687 = vunpack.c.l.b16 %v424
    %v1688 = vunpack.c.l.b16 %v425
    %v1689 = vunpack.c.l.b16 %v426
    %v1690 = vunpack.c.l.b16 %v427
    %v1691 = vunpack.c.l.b16 %v428
    %v1692 = vunpack.c.l.b16 %v429
    %v1693 = vunpack.c.l.b16 %v430
    %v1694 = vunpack.c.l.b16 %v431
    %v1695 = vunpack.c.l.b16 %v432
    %v1696 = vunpack.c.l.b16 %v433
    %v1697 = vunpack.c.l.b16 %v434
    %v1698 = vunpack.c.l.b16 %v435
    %v1699 = vunpack.c.l.b16 %v436
    %v1700 = vunpack.c.l.b16 %v437
    %v1701 = vunpack.c.l.b16 %v438
    %v1702 = vunpack.c.l.b16 %v439
    %v1703 = vunpack.c.l.b16 %v440
    %v1704 = vunpack.c.l.b16 %v441
    %v1705 = vunpack.c.l.b16 %v442
    %v1706 = vunpack.c.l.b16 %v443
    %v1707 = vunpack.c.l.b16 %v444
    %v1708 = vunpack.c.l.b16 %v445
    %v1709 = vunpack.c.l.b16 %v446
    %v1710 = vunpack.c.l.b16 %v447
    %v1711 = vunpack.c.l.b16 %v448
    %v1712 = vunpack.c.l.b16 %v449
    %v1713 = vunpack.c.l.b16 %v450
    %v1714 = vunpack.c.l.b16 %v451
    %v1715 = vunpack.c.l.b16 %v452
    %v1716 = vunpack.c.l.b16 %v453
    %v1717 = vunpack.c.l.b16 %v454
    %v1718 = vunpack.c.l.b16 %v455
    %v1719 = vunpack.c.l.b16 %v456
    %v1720 = vunpack.c.l.b16 %v457
    %v1721 = vunpack.c.l.b16 %v458
    %v1722 = vunpack.c.l.b16 %v459
    %v1723 = vunpack.c.l.b16 %v460
    %v1724 = vunpack.c.l.b16 %v461
    %v1725 = vunpack.c.l.b16 %v462
    %v1726 = vunpack.c.l.b16 %v463
    %v1727 = vunpack.c.l.b16 %v464
    %v1728 = vunpack.c.l.b16 %v465
    %v1729 = vunpack.c.l.b16 %v466
    %v1730 = vunpack.c.l.b16 %v467
    %v1731 = vunpack.c.l.b16 %v468
    %v1732 = vunpack.c.l.b16 %v469
    %v1733 = vunpack.c.l.b16 %v470
    %v1734 = vunpack.c.l.b16 %v471
    %v1735 = vunpack.c.l.b16 %v472
    %v1736 = vunpack.c.l.b16 %v473
    %v1737 = vunpack.c.l.b16 %v474
    %v1738 = vunpack.c.l.b16 %v475
    %v1739 = vunpack.c.l.b16 %v476
    %v1740 = vunpack.c.l.b16 %v477
    %v1741 = vunpack.c.l.b16 %v478
    %v1742 = vunpack.c.l.b16 %v479
    %v1743 = vunpack.c.l.b16 %v480
    %v1744 = vunpack.c.l.b16 %v481
    %v1745 = vunpack.c.l.b16 %v482
    %v1746 = vunpack.c.l.b16 %v483
    %v1747 = vunpack.c.l.b16 %v484
    %v1748 = vunpack.c.l.b16 %v485
    %v1749 = vunpack.c.l.b16 %v486
    %v1750 = vunpack.c.l.b16 %v487
    %v1751 = vunpack.c.l.b16 %v488
    %v1752 = vunpack.c.l.b16 %v489
    %v1753 = vunpack.c.l.b16 %v490
    %v1754 = vunpack.c.l.b16 %v491
    %v1755 = vunpack.c.l.b16 %v492
    %v1756 = vunpack.c.l.b16 %v493
    %v1757 = vunpack.c.l.b16 %v494
    %v1758 = vunpack.c.l.b16 %v495
    %v1759 = vunpack.c.l.b16 %v496
    %v1760 = vunpack.c.l.b16 %v497
    %v1761 = vunpack.c.l.b16 %v498
    %v1762 = vunpack.c.l.b16 %v499
    %v1763 = vunpack.c.l.b16 %v500
    %v1764 = vunpack.c.l.b16 %v501
    %v1765 = vunpack.c.l.b16 %v502
    %v1766 = vunpack.c.l.b16 %v503
    %v1767 = vunpack.c.l.b16 %v504
    %v1768 = vunpack.c.l.b16 %v505
    %v1769 = vunpack.c.l.b16 %v506
    %v1770 = vunpack.c.l.b16 %v507
    %v1771 = vunpack.c.l.b16 %v508
    %v1772 = vunpack.c.l.b16 %v509
    %v1773 = vunpack.c.l.b16 %v510
    %v1774 = vunpack.c.l.b16 %v511
    %v1775 = vunpack.c.l.b16 %v512
    %v1776 = vunpack.c.l.b16 %v513
    %v1777 = vunpack.c.l.b16 %v514
    %v1778 = vunpack.c.l.b16 %v515
    %v1779 = vunpack.c.l.b16 %v516
    %v1780 = vunpack.c.l.b16 %v517
    %v1781 = vunpack.c.l.b16 %v518
    %v1782 = vunpack.c.l.b16 %v519
    %v1783 = vunpack.c.l.b16 %v520
    %v1784 = vunpack.c.l.b16 %v521
    %v1785 = vunpack.c.l.b16 %v522
    %v1786 = vunpack.c.l.b16 %v523
    %v1787 = vunpack.c.l.b16 %v524
    %v1788 = vunpack.c.l.b16 %v525
    %v1789 = vunpack.c.l.b16 %v526
    %v1790 = vunpack.c.l.b16 %v527
    %v1791 = vunpack.c.l.b16 %v528
    %v1792 = vunpack.c.l.b16 %v529
    %v1793 = vunpack.c.l.b16 %v530
    %v1794 = vunpack.c.l.b16 %v531
    %v1795 = vunpack.c.l.b16 %v532
    %v1796 = vunpack.c.l.b16 %v533
    %v1797 = vunpack.c.l.b16 %v534
    %v1798 = vunpack.c.l.b16 %v535
    %v1799 = vunpack.c.l.b16 %v536
    %v1800 = vunpack.c.l.b16 %v537
    %v1801 = vunpack.c.l.b16 %v538
    %v1802 = vunpack.c.l.b16 %v539
    %v1803 = vunpack.c.l.b16 %v540
    %v1804 = vunpack.c.l.b16 %v541
    %v1805 = vunpack.c.l.b16 %v542
    %v1806 = vunpack.c.l.b16 %v543
    %v1807 = vunpack.c.l.b16 %v544
    %v1808 = vpack.c.b16 %v1297, %v1296
    %v1809 = vpack.c.b16 %v1299, %v1298
    %v1810 = vpack.c.b16 %v1301, %v1300
    %v1811 = vpack.c.b16 %v1303, %v1302
    %v1812 = vpack.c.b16 %v1305, %v1304
    %v1813 = vpack.c.b16 %v1307, %v1306
    %v1814 = vpack.c.b16 %v1309, %v1308
    %v1815 = vpack.c.b16 %v1311, %v1310
    %v1816 = vpack.c.b16 %v1313, %v1312
    %v1817 = vpack.c.b16 %v1315, %v1314
    %v1818 = vpack.c.b16 %v1317, %v1316
    %v1819 = vpack.c.b16 %v1319, %v1318
    %v1820 = vpack.c.b16 %v1321, %v1320
    %v1821 = vpack.c.b16 %v1323, %v1322
    %v1822 = vpack.c.b16 %v1325, %v1324
    %v1823 = vpack.c.b16 %v1327, %v1326
    %v1824 = vpack.c.b16 %v1329, %v1328
    %v1825 = vpack.c.b16 %v1331, %v1330
    %v1826 = vpack.c.b16 %v1333, %v1332
    %v1827 = vpack.c.b16 %v1335, %v1334
    %v1828 = vpack.c.b16 %v1337, %v1336
    %v1829 = vpack.c.b16 %v1339, %v1338
    %v1830 = vpack.c.b16 %v1341, %v1340
    %v1831 = vpack.c.b16 %v1343, %v1342
    %v1832 = vpack.c.b16 %v1345, %v1344
    %v1833 = vpack.c.b16 %v1347, %v1346
    %v1834 = vpack.c.b16 %v1349, %v1348
    %v1835 = vpack.c.b16 %v1351, %v1350
    %v1836 = vpack.c.b16 %v1353, %v1352
    %v1837 = vpack.c.b16 %v1355, %v1354
    %v1838 = vpack.c.b16 %v1357, %v1356
    %v1839 = vpack.c.b16 %v1359, %v1358
    %v1840 = vpack.c.b16 %v1361, %v1360
    %v1841 = vpack.c.b16 %v1363, %v1362
    %v1842 = vpack.c.b16 %v1365, %v1364
    %v1843 = vpack.c.b16 %v1367, %v1366
    %v1844 = vpack.c.b16 %v1369, %v1368
    %v1845 = vpack.c.b16 %v1371, %v1370
    %v1846 = vpack.c.b16 %v1373, %v1372
    %v1847 = vpack.c.b16 %v1375, %v1374
    %v1848 = vpack.c.b16 %v1377, %v1376
    %v1849 = vpack.c.b16 %v1379, %v1378
    %v1850 = vpack.c.b16 %v1381, %v1380
    %v1851 = vpack.c.b16 %v1383, %v1382
    %v1852 = vpack.c.b16 %v1385, %v1384
    %v1853 = vpack.c.b16 %v1387, %v1386
    %v1854 = vpack.c.b16 %v1389, %v1388
    %v1855 = vpack.c.b16 %v1391, %v1390
    %v1856 = vpack.c.b16 %v1393, %v1392
    %v1857 = vpack.c.b16 %v1395, %v1394
    %v1858 = vpack.c.b16 %v1397, %v1396
    %v1859 = vpack.c.b16 %v1399, %v1398
    %v1860 = vpack.c.b16 %v1401, %v1400
    %v1861 = vpack.c.b16 %v1403, %v1402
    %v1862 = vpack.c.b16 %v1405, %v1404
    %v1863 = vpack.c.b16 %v1407, %v1406
    %v1864 = vpack.c.b16 %v1409, %v1408
    %v1865 = vpack.c.b16 %v1411, %v1410
    %v1866 = vpack.c.b16 %v1413, %v1412
    %v1867 = vpack.c.b16 %v1415, %v1414
    %v1868 = vpack.c.b16 %v1417, %v1416
    %v1869 = vpack.c.b16 %v1419, %v1418
    %v1870 = vpack.c.b16 %v1421, %v1420
    %v1871 = vpack.c.b16 %v1423, %v1422
    %v1872 = vpack.c.b16 %v1425, %v1424
    %v1873 = vpack.c.b16 %v1427, %v1426
    %v1874 = vpack.c.b16 %v1429, %v1428
    %v1875 = vpack.c.b16 %v1431, %v1430
    %v1876 = vpack.c.b16 %v1433, %v1432
    %v1877 = vpack.c.b16 %v1435, %v1434
    %v1878 = vpack.c.b16 %v1437, %v1436
    %v1879 = vpack.c.b16 %v1439, %v1438
    %v1880 = vpack.c.b16 %v1441, %v1440
    %v1881 = vpack.c.b16 %v1443, %v1442
    %v1882 = vpack.c.b16 %v1445, %v1444
    %v1883 = vpack.c.b16 %v1447, %v1446
    %v1884 = vpack.c.b16 %v1449, %v1448
    %v1885 = vpack.c.b16 %v1451, %v1450
    %v1886 = vpack.c.b16 %v1453, %v1452
    %v1887 = vpack.c.b16 %v1455, %v1454
    %v1888 = vpack.c.b16 %v1457, %v1456
    %v1889 = vpack.c.b16 %v1459, %v1458
    %v1890 = vpack.c.b16 %v1461, %v1460
    %v1891 = vpack.c.b16 %v1463, %v1462
    %v1892 = vpack.c.b16 %v1465, %v1464
    %v1893 = vpack.c.b16 %v1467, %v1466
    %v1894 = vpack.c.b16 %v1469, %v1468
    %v1895 = vpack.c.b16 %v1471, %v1470
    %v1896 = vpack.c.b16 %v1473, %v1472
    %v1897 = vpack.c.b16 %v1475, %v1474
    %v1898 = vpack.c.b16 %v1477, %v1476
    %v1899 = vpack.c.b16 %v1479, %v1478
    %v1900 = vpack.c.b16 %v1481, %v1480
    %v1901 = vpack.c.b16 %v1483, %v1482
    %v1902 = vpack.c.b16 %v1485, %v1484
    %v1903 = vpack.c.b16 %v1487, %v1486
    %v1904 = vpack.c.b16 %v1489, %v1488
    %v1905 = vpack.c.b16 %v1491, %v1490
    %v1906 = vpack.c.b16 %v1493, %v1492
    %v1907 = vpack.c.b16 %v1495, %v1494
    %v1908 = vpack.c.b16 %v1497, %v1496
    %v1909 = vpack.c.b16 %v1499, %v1498
    %v1910 = vpack.c.b16 %v1501, %v1500
    %v1911 = vpack.c.b16 %v1503, %v1502
    %v1912 = vpack.c.b16 %v1505, %v1504
    %v1913 = vpack.c.b16 %v1507, %v1506
    %v1914 = vpack.c.b16 %v1509, %v1508
    %v1915 = vpack.c.b16 %v1511, %v1510
    %v1916 = vpack.c.b16 %v1513, %v1512
    %v1917 = vpack.c.b16 %v1515, %v1514
    %v1918 = vpack.c.b16 %v1517, %v1516
    %v1919 = vpack.c.b16 %v1519, %v1518
    %v1920 = vpack.c.b16 %v1521, %v1520
    %v1921 = vpack.c.b16 %v1523, %v1522
    %v1922 = vpack.c.b16 %v1525, %v1524
    %v1923 = vpack.c.b16 %v1527, %v1526
    %v1924 = vpack.c.b16 %v1529, %v1528
    %v1925 = vpack.c.b16 %v1531, %v1530
    %v1926 = vpack.c.b16 %v1533, %v1532
    %v1927 = vpack.c.b16 %v1535, %v1534
    %v1928 = vpack.c.b16 %v1537, %v1536
    %v1929 = vpack.c.b16 %v1539, %v1538
    %v1930 = vpack.c.b16 %v1541, %v1540
    %v1931 = vpack.c.b16 %v1543, %v1542
    %v1932 = vpack.c.b16 %v1545, %v1544
    %v1933 = vpack.c.b16 %v1547, %v1546
    %v1934 = vpack.c.b16 %v1549, %v1548
    %v1935 = vpack.c.b16 %v1551, %v1550
    %v1936 = vpack.c.b16 %v1553, %v1552
    %v1937 = vpack.c.b16 %v1555, %v1554
    %v1938 = vpack.c.b16 %v1557, %v1556
    %v1939 = vpack.c.b16 %v1559, %v1558
    %v1940 = vpack.c.b16 %v1561, %v1560
    %v1941 = vpack.c.b16 %v1563, %v1562
    %v1942 = vpack.c.b16 %v1565, %v1564
    %v1943 = vpack.c.b16 %v1567, %v1566
    %v1944 = vpack.c.b16 %v1569, %v1568
    %v1945 = vpack.c.b16 %v1571, %v1570
    %v1946 = vpack.c.b16 %v1573, %v1572
    %v1947 = vpack.c.b16 %v1575, %v1574
    %v1948 = vpack.c.b16 %v1577, %v1576
    %v1949 = vpack.c.b16 %v1579, %v1578
    %v1950 = vpack.c.b16 %v1581, %v1580
    %v1951 = vpack.c.b16 %v1583, %v1582
    %v1952 = vpack.c.b16 %v1585, %v1584
    %v1953 = vpack.c.b16 %v1587, %v1586
    %v1954 = vpack.c.b16 %v1589, %v1588
    %v1955 = vpack.c.b16 %v1591, %v1590
    %v1956 = vpack.c.b16 %v1593, %v1592
    %v1957 = vpack.c.b16 %v1595, %v1594
    %v1958 = vpack.c.b16 %v1597, %v1596
    %v1959 = vpack.c.b16 %v1599, %v1598
    %v1960 = vpack.c.b16 %v1601, %v1600
    %v1961 = vpack.c.b16 %v1603, %v1602
    %v1962 = vpack.c.b16 %v1605, %v1604
    %v1963 = vpack.c.b16 %v1607, %v1606
    %v1964 = vpack.c.b16 %v1609, %v1608
    %v1965 = vpack.c.b16 %v1611, %v1610
    %v1966 = vpack.c.b16 %v1613, %v1612
    %v1967 = vpack.c.b16 %v1615, %v1614
    %v1968 = vpack.c.b16 %v1617, %v1616
    %v1969 = vpack.c.b16 %v1619, %v1618
    %v1970 = vpack.c.b16 %v1621, %v1620
    %v1971 = vpack.c.b16 %v1623, %v1622
    %v1972 = vpack.c.b16 %v1625, %v1624
    %v1973 = vpack.c.b16 %v1627, %v1626
    %v1974 = vpack.c.b16 %v1629, %v1628
    %v1975 = vpack.c.b16 %v1631, %v1630
    %v1976 = vpack.c.b16 %v1633, %v1632
    %v1977 = vpack.c.b16 %v1635, %v1634
    %v1978 = vpack.c.b16 %v1637, %v1636
    %v1979 = vpack.c.b16 %v1639, %v1638
    %v1980 = vpack.c.b16 %v1641, %v1640
    %v1981 = vpack.c.b16 %v1643, %v1642
    %v1982 = vpack.c.b16 %v1645, %v1644
    %v1983 = vpack.c.b16 %v1647, %v1646
    %v1984 = vpack.c.b16 %v1649, %v1648
    %v1985 = vpack.c.b16 %v1651, %v1650
    %v1986 = vpack.c.b16 %v1653, %v1652
    %v1987 = vpack.c.b16 %v1655, %v1654
    %v1988 = vpack.c.b16 %v1657, %v1656
    %v1989 = vpack.c.b16 %v1659, %v1658
    %v1990 = vpack.c.b16 %v1661, %v1660
    %v1991 = vpack.c.b16 %v1663, %v1662
    %v1992 = vpack.c.b16 %v1665, %v1664
    %v1993 = vpack.c.b16 %v1667, %v1666
    %v1994 = vpack.c.b16 %v1669, %v1668
    %v1995 = vpack.c.b16 %v1671, %v1670
    %v1996 = vpack.c.b16 %v1673, %v1672
    %v1997 = vpack.c.b16 %v1675, %v1674
    %v1998 = vpack.c.b16 %v1677, %v1676
    %v1999 = vpack.c.b16 %v1679, %v1678
    %v2000 = vpack.c.b16 %v1681, %v1680
    %v2001 = vpack.c.b16 %v1683, %v1682
    %v2002 = vpack.c.b16 %v1685, %v1684
    %v2003 = vpack.c.b16 %v1687, %v1686
    %v2004 = vpack.c.b16 %v1689, %v1688
    %v2005 = vpack.c.b16 %v1691, %v1690
    %v2006 = vpack.c.b16 %v1693, %v1692
    %v2007 = vpack.c.b16 %v1695, %v1694
    %v2008 = vpack.c.b16 %v1697, %v1696
    %v2009 = vpack.c.b16 %v1699, %v1698
    %v2010 = vpack.c.b16 %v1701, %v1700
    %v2011 = vpack.c.b16 %v1703, %v1702
    %v2012 = vpack.c.b16 %v1705, %v1704
    %v2013 = vpack.c.b16 %v1707, %v1706
    %v2014 = vpack.c.b16 %v1709, %v1708
    %v2015 = vpack.c.b16 %v1711, %v1710
    %v2016 = vpack.c.b16 %v1713, %v1712
    %v2017 = vpack.c.b16 %v1715, %v1714
    %v2018 = vpack.c.b16 %v1717, %v1716
    %v2019 = vpack.c.b16 %v1719, %v1718
    %v2020 = vpack.c.b16 %v1721, %v1720
    %v2021 = vpack.c.b16 %v1723, %v1722
    %v2022 = vpack.c.b16 %v1725, %v1724
    %v2023 = vpack.c.b16 %v1727, %v1726
    %v2024 = vpack.c.b16 %v1729, %v1728
    %v2025 = vpack.c.b16 %v1731, %v1730
    %v2026 = vpack.c.b16 %v1733, %v1732
    %v2027 = vpack.c.b16 %v1735, %v1734
    %v2028 = vpack.c.b16 %v1737, %v1736
    %v2029 = vpack.c.b16 %v1739, %v1738
    %v2030 = vpack.c.b16 %v1741, %v1740
    %v2031 = vpack.c.b16 %v1743, %v1742
    %v2032 = vpack.c.b16 %v1745, %v1744
    %v2033 = vpack.c.b16 %v1747, %v1746
    %v2034 = vpack.c.b16 %v1749, %v1748
    %v2035 = vpack.c.b16 %v1751, %v1750
    %v2036 = vpack.c.b16 %v1753, %v1752
    %v2037 = vpack.c.b16 %v1755, %v1754
    %v2038 = vpack.c.b16 %v1757, %v1756
    %v2039 = vpack.c.b16 %v1759, %v1758
    %v2040 = vpack.c.b16 %v1761, %v1760
    %v2041 = vpack.c.b16 %v1763, %v1762
    %v2042 = vpack.c.b16 %v1765, %v1764
    %v2043 = vpack.c.b16 %v1767, %v1766
    %v2044 = vpack.c.b16 %v1769, %v1768
    %v2045 = vpack.c.b16 %v1771, %v1770
    %v2046 = vpack.c.b16 %v1773, %v1772
    %v2047 = vpack.c.b16 %v1775, %v1774
    %v2048 = vpack.c.b16 %v1777, %v1776
    %v2049 = vpack.c.b16 %v1779, %v1778
    %v2050 = vpack.c.b16 %v1781, %v1780
    %v2051 = vpack.c.b16 %v1783, %v1782
    %v2052 = vpack.c.b16 %v1785, %v1784
    %v2053 = vpack.c.b16 %v1787, %v1786
    %v2054 = vpack.c.b16 %v1789, %v1788
    %v2055 = vpack.c.b16 %v1791, %v1790
    %v2056 = vpack.c.b16 %v1793, %v1792
    %v2057 = vpack.c.b16 %v1795, %v1794
    %v2058 = vpack.c.b16 %v1797, %v1796
    %v2059 = vpack.c.b16 %v1799, %v1798
    %v2060 = vpack.c.b16 %v1801, %v1800
    %v2061 = vpack.c.b16 %v1803, %v1802
    %v2062 = vpack.c.b16 %v1805, %v1804
    %v2063 = vpack.c.b16 %v1807, %v1806
    %2320 = vmatprep.subr.bf16.mxu0 0
    %2321 = vmatpush1.bf16.msra.mxu0 %v1808
    %2322 = vmatprep.subr.bf16.mxu0 0
    %2323 = vmatpush1.bf16.msra.mxu0 %v1809
    %2324 = vmatprep.subr.bf16.mxu0 0
    %2325 = vmatpush1.bf16.msra.mxu0 %v1810
    %2326 = vmatprep.subr.bf16.mxu0 0
    %2327 = vmatpush1.bf16.msra.mxu0 %v1811
    %2328 = vmatprep.subr.bf16.mxu0 0
    %2329 = vmatpush1.bf16.msra.mxu0 %v1812
    %2330 = vmatprep.subr.bf16.mxu0 0
    %2331 = vmatpush1.bf16.msra.mxu0 %v1813
    %2332 = vmatprep.subr.bf16.mxu0 0
    %2333 = vmatpush1.bf16.msra.mxu0 %v1814
    %2334 = vmatprep.subr.bf16.mxu0 0
    %2335 = vmatpush1.bf16.msra.mxu0 %v1815
    %2336 = vmatprep.subr.bf16.mxu0 0
    %2337 = vmatpush1.bf16.msra.mxu0 %v1816
    %2338 = vmatprep.subr.bf16.mxu0 0
    %2339 = vmatpush1.bf16.msra.mxu0 %v1817
    %2340 = vmatprep.subr.bf16.mxu0 0
    %2341 = vmatpush1.bf16.msra.mxu0 %v1818
    %2342 = vmatprep.subr.bf16.mxu0 0
    %2343 = vmatpush1.bf16.msra.mxu0 %v1819
    %2344 = vmatprep.subr.bf16.mxu0 0
    %2345 = vmatpush1.bf16.msra.mxu0 %v1820
    %2346 = vmatprep.subr.bf16.mxu0 0
    %2347 = vmatpush1.bf16.msra.mxu0 %v1821
    %2348 = vmatprep.subr.bf16.mxu0 0
    %2349 = vmatpush1.bf16.msra.mxu0 %v1822
    %2350 = vmatprep.subr.bf16.mxu0 0
    %2351 = vmatpush1.bf16.msra.mxu0 %v1823
    %2352 = vmatprep.mubr.bf16.mxu0 %v593
    %2353 = vmatmul.mubr.bf16.gmra.mrb[0].mxu0 %v579
    %v2354 = vpop.f32.mrb[0].mxu0
    %v2355 = vadd.f32 %v550, %v2354
    %v2356 = vpop.f32.mrb[0].mxu0
    %v2357 = vpop.f32.mrb[0].mxu0
    %v2358 = vpop.f32.mrb[0].mxu0
    %2359 = vdwg.mxu0
    %2360 = vmatprep.subr.bf16.mxu0 0
    %2361 = vmatpush1.bf16.msra.mxu0 %v1824
    %2362 = vmatprep.subr.bf16.mxu0 0
    %2363 = vmatpush1.bf16.msra.mxu0 %v1825
    %2364 = vmatprep.subr.bf16.mxu0 0
    %2365 = vmatpush1.bf16.msra.mxu0 %v1826
    %2366 = vmatprep.subr.bf16.mxu0 0
    %2367 = vmatpush1.bf16.msra.mxu0 %v1827
    %2368 = vmatprep.subr.bf16.mxu0 0
    %2369 = vmatpush1.bf16.msra.mxu0 %v1828
    %2370 = vmatprep.subr.bf16.mxu0 0
    %2371 = vmatpush1.bf16.msra.mxu0 %v1829
    %2372 = vmatprep.subr.bf16.mxu0 0
    %2373 = vmatpush1.bf16.msra.mxu0 %v1830
    %2374 = vmatprep.subr.bf16.mxu0 0
    %2375 = vmatpush1.bf16.msra.mxu0 %v1831
    %2376 = vmatprep.subr.bf16.mxu0 0
    %2377 = vmatpush1.bf16.msra.mxu0 %v1832
    %2378 = vmatprep.subr.bf16.mxu0 0
    %2379 = vmatpush1.bf16.msra.mxu0 %v1833
    %2380 = vmatprep.subr.bf16.mxu0 0
    %2381 = vmatpush1.bf16.msra.mxu0 %v1834
    %2382 = vmatprep.subr.bf16.mxu0 0
    %2383 = vmatpush1.bf16.msra.mxu0 %v1835
    %2384 = vmatprep.subr.bf16.mxu0 0
    %2385 = vmatpush1.bf16.msra.mxu0 %v1836
    %2386 = vmatprep.subr.bf16.mxu0 0
    %2387 = vmatpush1.bf16.msra.mxu0 %v1837
    %2388 = vmatprep.subr.bf16.mxu0 0
    %2389 = vmatpush1.bf16.msra.mxu0 %v1838
    %2390 = vmatprep.subr.bf16.mxu0 0
    %2391 = vmatpush1.bf16.msra.mxu0 %v1839
    %2392 = vmatprep.mubr.bf16.mxu0 %v603
    %2393 = vmatmul.mubr.bf16.gmra.mrb[0].mxu0 %v601
    %v2394 = vpop.f32.mrb[0].mxu0
    %v2395 = vadd.f32 %v2355, %v2394
    %v2396 = vpop.f32.mrb[0].mxu0
    %v2397 = vpop.f32.mrb[0].mxu0
    %v2398 = vpop.f32.mrb[0].mxu0
    %2399 = vdwg.mxu0
    %2400 = vmatprep.subr.bf16.mxu0 0
    %2401 = vmatpush1.bf16.msra.mxu0 %v1840
    %2402 = vmatprep.subr.bf16.mxu0 0
    %2403 = vmatpush1.bf16.msra.mxu0 %v1841
    %2404 = vmatprep.subr.bf16.mxu0 0
    %2405 = vmatpush1.bf16.msra.mxu0 %v1842
    %2406 = vmatprep.subr.bf16.mxu0 0
    %2407 = vmatpush1.bf16.msra.mxu0 %v1843
    %2408 = vmatprep.subr.bf16.mxu0 0
    %2409 = vmatpush1.bf16.msra.mxu0 %v1844
    %2410 = vmatprep.subr.bf16.mxu0 0
    %2411 = vmatpush1.bf16.msra.mxu0 %v1845
    %2412 = vmatprep.subr.bf16.mxu0 0
    %2413 = vmatpush1.bf16.msra.mxu0 %v1846
    %2414 = vmatprep.subr.bf16.mxu0 0
    %2415 = vmatpush1.bf16.msra.mxu0 %v1847
    %2416 = vmatprep.subr.bf16.mxu0 0
    %2417 = vmatpush1.bf16.msra.mxu0 %v1848
    %2418 = vmatprep.subr.bf16.mxu0 0
    %2419 = vmatpush1.bf16.msra.mxu0 %v1849
    %2420 = vmatprep.subr.bf16.mxu0 0
    %2421 = vmatpush1.bf16.msra.mxu0 %v1850
    %2422 = vmatprep.subr.bf16.mxu0 0
    %2423 = vmatpush1.bf16.msra.mxu0 %v1851
    %2424 = vmatprep.subr.bf16.mxu0 0
    %2425 = vmatpush1.bf16.msra.mxu0 %v1852
    %2426 = vmatprep.subr.bf16.mxu0 0
    %2427 = vmatpush1.bf16.msra.mxu0 %v1853
    %2428 = vmatprep.subr.bf16.mxu0 0
    %2429 = vmatpush1.bf16.msra.mxu0 %v1854
    %2430 = vmatprep.subr.bf16.mxu0 0
    %2431 = vmatpush1.bf16.msra.mxu0 %v1855
    %2432 = vmatprep.mubr.bf16.mxu0 %v600
    %2433 = vmatmul.mubr.bf16.gmra.mrb[0].mxu0 %v586
    %v2434 = vpop.f32.mrb[0].mxu0
    %v2435 = vadd.f32 %v2395, %v2434
    %v2436 = vpop.f32.mrb[0].mxu0
    %v2437 = vpop.f32.mrb[0].mxu0
    %v2438 = vpop.f32.mrb[0].mxu0
    %2439 = vdwg.mxu0
    %2440 = vmatprep.subr.bf16.mxu0 0
    %2441 = vmatpush1.bf16.msra.mxu0 %v1856
    %2442 = vmatprep.subr.bf16.mxu0 0
    %2443 = vmatpush1.bf16.msra.mxu0 %v1857
    %2444 = vmatprep.subr.bf16.mxu0 0
    %2445 = vmatpush1.bf16.msra.mxu0 %v1858
    %2446 = vmatprep.subr.bf16.mxu0 0
    %2447 = vmatpush1.bf16.msra.mxu0 %v1859
    %2448 = vmatprep.subr.bf16.mxu0 0
    %2449 = vmatpush1.bf16.msra.mxu0 %v1860
    %2450 = vmatprep.subr.bf16.mxu0 0
    %2451 = vmatpush1.bf16.msra.mxu0 %v1861
    %2452 = vmatprep.subr.bf16.mxu0 0
    %2453 = vmatpush1.bf16.msra.mxu0 %v1862
    %2454 = vmatprep.subr.bf16.mxu0 0
    %2455 = vmatpush1.bf16.msra.mxu0 %v1863
    %2456 = vmatprep.subr.bf16.mxu0 0
    %2457 = vmatpush1.bf16.msra.mxu0 %v1864
    %2458 = vmatprep.subr.bf16.mxu0 0
    %2459 = vmatpush1.bf16.msra.mxu0 %v1865
    %2460 = vmatprep.subr.bf16.mxu0 0
    %2461 = vmatpush1.bf16.msra.mxu0 %v1866
    %2462 = vmatprep.subr.bf16.mxu0 0
    %2463 = vmatpush1.bf16.msra.mxu0 %v1867
    %2464 = vmatprep.subr.bf16.mxu0 0
    %2465 = vmatpush1.bf16.msra.mxu0 %v1868
    %2466 = vmatprep.subr.bf16.mxu0 0
    %2467 = vmatpush1.bf16.msra.mxu0 %v1869
    %2468 = vmatprep.subr.bf16.mxu0 0
    %2469 = vmatpush1.bf16.msra.mxu0 %v1870
    %2470 = vmatprep.subr.bf16.mxu0 0
    %2471 = vmatpush1.bf16.msra.mxu0 %v1871
    %2472 = vmatprep.mubr.bf16.mxu0 %v604
    %2473 = vmatmul.mubr.bf16.gmra.mrb[0].mxu0 %v602
    %v2474 = vpop.f32.mrb[0].mxu0
    %v2475 = vadd.f32 %v2435, %v2474
    %v2476 = vpop.f32.mrb[0].mxu0
    %v2477 = vpop.f32.mrb[0].mxu0
    %v2478 = vpop.f32.mrb[0].mxu0
    %2479 = vdwg.mxu0
    %2480 = vmatprep.subr.bf16.mxu0 0
    %2481 = vmatpush1.bf16.msra.mxu0 %v1872
    %2482 = vmatprep.subr.bf16.mxu0 0
    %2483 = vmatpush1.bf16.msra.mxu0 %v1873
    %2484 = vmatprep.subr.bf16.mxu0 0
    %2485 = vmatpush1.bf16.msra.mxu0 %v1874
    %2486 = vmatprep.subr.bf16.mxu0 0
    %2487 = vmatpush1.bf16.msra.mxu0 %v1875
    %2488 = vmatprep.subr.bf16.mxu0 0
    %2489 = vmatpush1.bf16.msra.mxu0 %v1876
    %2490 = vmatprep.subr.bf16.mxu0 0
    %2491 = vmatpush1.bf16.msra.mxu0 %v1877
    %2492 = vmatprep.subr.bf16.mxu0 0
    %2493 = vmatpush1.bf16.msra.mxu0 %v1878
    %2494 = vmatprep.subr.bf16.mxu0 0
    %2495 = vmatpush1.bf16.msra.mxu0 %v1879
    %2496 = vmatprep.subr.bf16.mxu0 0
    %2497 = vmatpush1.bf16.msra.mxu0 %v1880
    %2498 = vmatprep.subr.bf16.mxu0 0
    %2499 = vmatpush1.bf16.msra.mxu0 %v1881
    %2500 = vmatprep.subr.bf16.mxu0 0
    %2501 = vmatpush1.bf16.msra.mxu0 %v1882
    %2502 = vmatprep.subr.bf16.mxu0 0
    %2503 = vmatpush1.bf16.msra.mxu0 %v1883
    %2504 = vmatprep.subr.bf16.mxu0 0
    %2505 = vmatpush1.bf16.msra.mxu0 %v1884
    %2506 = vmatprep.subr.bf16.mxu0 0
    %2507 = vmatpush1.bf16.msra.mxu0 %v1885
    %2508 = vmatprep.subr.bf16.mxu0 0
    %2509 = vmatpush1.bf16.msra.mxu0 %v1886
    %2510 = vmatprep.subr.bf16.mxu0 0
    %2511 = vmatpush1.bf16.msra.mxu0 %v1887
    %2512 = vmatprep.mubr.bf16.mxu0 %v642
    %2513 = vmatmul.mubr.bf16.gmra.mrb[0].mxu0 %v628
    %v2514 = vpop.f32.mrb[0].mxu0
    %v2515 = vadd.f32 %v2475, %v2514
    %v2516 = vpop.f32.mrb[0].mxu0
    %v2517 = vpop.f32.mrb[0].mxu0
    %v2518 = vpop.f32.mrb[0].mxu0
    %2519 = vdwg.mxu0
    %2520 = vmatprep.subr.bf16.mxu0 0
    %2521 = vmatpush1.bf16.msra.mxu0 %v1888
    %2522 = vmatprep.subr.bf16.mxu0 0
    %2523 = vmatpush1.bf16.msra.mxu0 %v1889
    %2524 = vmatprep.subr.bf16.mxu0 0
    %2525 = vmatpush1.bf16.msra.mxu0 %v1890
    %2526 = vmatprep.subr.bf16.mxu0 0
    %2527 = vmatpush1.bf16.msra.mxu0 %v1891
    %2528 = vmatprep.subr.bf16.mxu0 0
    %2529 = vmatpush1.bf16.msra.mxu0 %v1892
    %2530 = vmatprep.subr.bf16.mxu0 0
    %2531 = vmatpush1.bf16.msra.mxu0 %v1893
    %2532 = vmatprep.subr.bf16.mxu0 0
    %2533 = vmatpush1.bf16.msra.mxu0 %v1894
    %2534 = vmatprep.subr.bf16.mxu0 0
    %2535 = vmatpush1.bf16.msra.mxu0 %v1895
    %2536 = vmatprep.subr.bf16.mxu0 0
    %2537 = vmatpush1.bf16.msra.mxu0 %v1896
    %2538 = vmatprep.subr.bf16.mxu0 0
    %2539 = vmatpush1.bf16.msra.mxu0 %v1897
    %2540 = vmatprep.subr.bf16.mxu0 0
    %2541 = vmatpush1.bf16.msra.mxu0 %v1898
    %2542 = vmatprep.subr.bf16.mxu0 0
    %2543 = vmatpush1.bf16.msra.mxu0 %v1899
    %2544 = vmatprep.subr.bf16.mxu0 0
    %2545 = vmatpush1.bf16.msra.mxu0 %v1900
    %2546 = vmatprep.subr.bf16.mxu0 0
    %2547 = vmatpush1.bf16.msra.mxu0 %v1901
    %2548 = vmatprep.subr.bf16.mxu0 0
    %2549 = vmatpush1.bf16.msra.mxu0 %v1902
    %2550 = vmatprep.subr.bf16.mxu0 0
    %2551 = vmatpush1.bf16.msra.mxu0 %v1903
    %2552 = vmatprep.mubr.bf16.mxu0 %v652
    %2553 = vmatmul.mubr.bf16.gmra.mrb[0].mxu0 %v650
    %v2554 = vpop.f32.mrb[0].mxu0
    %v2555 = vadd.f32 %v2515, %v2554
    %v2556 = vpop.f32.mrb[0].mxu0
    %v2557 = vpop.f32.mrb[0].mxu0
    %v2558 = vpop.f32.mrb[0].mxu0
    %2559 = vdwg.mxu0
    %2560 = vmatprep.subr.bf16.mxu0 0
    %2561 = vmatpush1.bf16.msra.mxu0 %v1904
    %2562 = vmatprep.subr.bf16.mxu0 0
    %2563 = vmatpush1.bf16.msra.mxu0 %v1905
    %2564 = vmatprep.subr.bf16.mxu0 0
    %2565 = vmatpush1.bf16.msra.mxu0 %v1906
    %2566 = vmatprep.subr.bf16.mxu0 0
    %2567 = vmatpush1.bf16.msra.mxu0 %v1907
    %2568 = vmatprep.subr.bf16.mxu0 0
    %2569 = vmatpush1.bf16.msra.mxu0 %v1908
    %2570 = vmatprep.subr.bf16.mxu0 0
    %2571 = vmatpush1.bf16.msra.mxu0 %v1909
    %2572 = vmatprep.subr.bf16.mxu0 0
    %2573 = vmatpush1.bf16.msra.mxu0 %v1910
    %2574 = vmatprep.subr.bf16.mxu0 0
    %2575 = vmatpush1.bf16.msra.mxu0 %v1911
    %2576 = vmatprep.subr.bf16.mxu0 0
    %2577 = vmatpush1.bf16.msra.mxu0 %v1912
    %2578 = vmatprep.subr.bf16.mxu0 0
    %2579 = vmatpush1.bf16.msra.mxu0 %v1913
    %2580 = vmatprep.subr.bf16.mxu0 0
    %2581 = vmatpush1.bf16.msra.mxu0 %v1914
    %2582 = vmatprep.subr.bf16.mxu0 0
    %2583 = vmatpush1.bf16.msra.mxu0 %v1915
    %2584 = vmatprep.subr.bf16.mxu0 0
    %2585 = vmatpush1.bf16.msra.mxu0 %v1916
    %2586 = vmatprep.subr.bf16.mxu0 0
    %2587 = vmatpush1.bf16.msra.mxu0 %v1917
    %2588 = vmatprep.subr.bf16.mxu0 0
    %2589 = vmatpush1.bf16.msra.mxu0 %v1918
    %2590 = vmatprep.subr.bf16.mxu0 0
    %2591 = vmatpush1.bf16.msra.mxu0 %v1919
    %2592 = vmatprep.mubr.bf16.mxu0 %v649
    %2593 = vmatmul.mubr.bf16.gmra.mrb[0].mxu0 %v635
    %v2594 = vpop.f32.mrb[0].mxu0
    %v2595 = vadd.f32 %v2555, %v2594
    %v2596 = vpop.f32.mrb[0].mxu0
    %v2597 = vpop.f32.mrb[0].mxu0
    %v2598 = vpop.f32.mrb[0].mxu0
    %2599 = vdwg.mxu0
    %2600 = vmatprep.subr.bf16.mxu0 0
    %2601 = vmatpush1.bf16.msra.mxu0 %v1920
    %2602 = vmatprep.subr.bf16.mxu0 0
    %2603 = vmatpush1.bf16.msra.mxu0 %v1921
    %2604 = vmatprep.subr.bf16.mxu0 0
    %2605 = vmatpush1.bf16.msra.mxu0 %v1922
    %2606 = vmatprep.subr.bf16.mxu0 0
    %2607 = vmatpush1.bf16.msra.mxu0 %v1923
    %2608 = vmatprep.subr.bf16.mxu0 0
    %2609 = vmatpush1.bf16.msra.mxu0 %v1924
    %2610 = vmatprep.subr.bf16.mxu0 0
    %2611 = vmatpush1.bf16.msra.mxu0 %v1925
    %2612 = vmatprep.subr.bf16.mxu0 0
    %2613 = vmatpush1.bf16.msra.mxu0 %v1926
    %2614 = vmatprep.subr.bf16.mxu0 0
    %2615 = vmatpush1.bf16.msra.mxu0 %v1927
    %2616 = vmatprep.subr.bf16.mxu0 0
    %2617 = vmatpush1.bf16.msra.mxu0 %v1928
    %2618 = vmatprep.subr.bf16.mxu0 0
    %2619 = vmatpush1.bf16.msra.mxu0 %v1929
    %2620 = vmatprep.subr.bf16.mxu0 0
    %2621 = vmatpush1.bf16.msra.mxu0 %v1930
    %2622 = vmatprep.subr.bf16.mxu0 0
    %2623 = vmatpush1.bf16.msra.mxu0 %v1931
    %2624 = vmatprep.subr.bf16.mxu0 0
    %2625 = vmatpush1.bf16.msra.mxu0 %v1932
    %2626 = vmatprep.subr.bf16.mxu0 0
    %2627 = vmatpush1.bf16.msra.mxu0 %v1933
    %2628 = vmatprep.subr.bf16.mxu0 0
    %2629 = vmatpush1.bf16.msra.mxu0 %v1934
    %2630 = vmatprep.subr.bf16.mxu0 0
    %2631 = vmatpush1.bf16.msra.mxu0 %v1935
    %2632 = vmatprep.mubr.bf16.mxu0 %v653
    %2633 = vmatmul.mubr.bf16.gmra.mrb[0].mxu0 %v651
    %v2634 = vpop.f32.mrb[0].mxu0
    %v2635 = vadd.f32 %v2595, %v2634
    %v2636 = vpop.f32.mrb[0].mxu0
    %v2637 = vpop.f32.mrb[0].mxu0
    %v2638 = vpop.f32.mrb[0].mxu0
    %2639 = vdwg.mxu0
    %2640 = vmatprep.subr.bf16.mxu0 0
    %2641 = vmatpush1.bf16.msra.mxu0 %v1936
    %2642 = vmatprep.subr.bf16.mxu0 0
    %2643 = vmatpush1.bf16.msra.mxu0 %v1937
    %2644 = vmatprep.subr.bf16.mxu0 0
    %2645 = vmatpush1.bf16.msra.mxu0 %v1938
    %2646 = vmatprep.subr.bf16.mxu0 0
    %2647 = vmatpush1.bf16.msra.mxu0 %v1939
    %2648 = vmatprep.subr.bf16.mxu0 0
    %2649 = vmatpush1.bf16.msra.mxu0 %v1940
    %2650 = vmatprep.subr.bf16.mxu0 0
    %2651 = vmatpush1.bf16.msra.mxu0 %v1941
    %2652 = vmatprep.subr.bf16.mxu0 0
    %2653 = vmatpush1.bf16.msra.mxu0 %v1942
    %2654 = vmatprep.subr.bf16.mxu0 0
    %2655 = vmatpush1.bf16.msra.mxu0 %v1943
    %2656 = vmatprep.subr.bf16.mxu0 0
    %2657 = vmatpush1.bf16.msra.mxu0 %v1944
    %2658 = vmatprep.subr.bf16.mxu0 0
    %2659 = vmatpush1.bf16.msra.mxu0 %v1945
    %2660 = vmatprep.subr.bf16.mxu0 0
    %2661 = vmatpush1.bf16.msra.mxu0 %v1946
    %2662 = vmatprep.subr.bf16.mxu0 0
    %2663 = vmatpush1.bf16.msra.mxu0 %v1947
    %2664 = vmatprep.subr.bf16.mxu0 0
    %2665 = vmatpush1.bf16.msra.mxu0 %v1948
    %2666 = vmatprep.subr.bf16.mxu0 0
    %2667 = vmatpush1.bf16.msra.mxu0 %v1949
    %2668 = vmatprep.subr.bf16.mxu0 0
    %2669 = vmatpush1.bf16.msra.mxu0 %v1950
    %2670 = vmatprep.subr.bf16.mxu0 0
    %2671 = vmatpush1.bf16.msra.mxu0 %v1951
    %2672 = vmatprep.mubr.bf16.mxu0 %v691
    %2673 = vmatmul.mubr.bf16.gmra.mrb[0].mxu0 %v677
    %v2674 = vpop.f32.mrb[0].mxu0
    %v2675 = vadd.f32 %v2635, %v2674
    %v2676 = vpop.f32.mrb[0].mxu0
    %v2677 = vpop.f32.mrb[0].mxu0
    %v2678 = vpop.f32.mrb[0].mxu0
    %2679 = vdwg.mxu0
    %2680 = vmatprep.subr.bf16.mxu0 0
    %2681 = vmatpush1.bf16.msra.mxu0 %v1952
    %2682 = vmatprep.subr.bf16.mxu0 0
    %2683 = vmatpush1.bf16.msra.mxu0 %v1953
    %2684 = vmatprep.subr.bf16.mxu0 0
    %2685 = vmatpush1.bf16.msra.mxu0 %v1954
    %2686 = vmatprep.subr.bf16.mxu0 0
    %2687 = vmatpush1.bf16.msra.mxu0 %v1955
    %2688 = vmatprep.subr.bf16.mxu0 0
    %2689 = vmatpush1.bf16.msra.mxu0 %v1956
    %2690 = vmatprep.subr.bf16.mxu0 0
    %2691 = vmatpush1.bf16.msra.mxu0 %v1957
    %2692 = vmatprep.subr.bf16.mxu0 0
    %2693 = vmatpush1.bf16.msra.mxu0 %v1958
    %2694 = vmatprep.subr.bf16.mxu0 0
    %2695 = vmatpush1.bf16.msra.mxu0 %v1959
    %2696 = vmatprep.subr.bf16.mxu0 0
    %2697 = vmatpush1.bf16.msra.mxu0 %v1960
    %2698 = vmatprep.subr.bf16.mxu0 0
    %2699 = vmatpush1.bf16.msra.mxu0 %v1961
    %2700 = vmatprep.subr.bf16.mxu0 0
    %2701 = vmatpush1.bf16.msra.mxu0 %v1962
    %2702 = vmatprep.subr.bf16.mxu0 0
    %2703 = vmatpush1.bf16.msra.mxu0 %v1963
    %2704 = vmatprep.subr.bf16.mxu0 0
    %2705 = vmatpush1.bf16.msra.mxu0 %v1964
    %2706 = vmatprep.subr.bf16.mxu0 0
    %2707 = vmatpush1.bf16.msra.mxu0 %v1965
    %2708 = vmatprep.subr.bf16.mxu0 0
    %2709 = vmatpush1.bf16.msra.mxu0 %v1966
    %2710 = vmatprep.subr.bf16.mxu0 0
    %2711 = vmatpush1.bf16.msra.mxu0 %v1967
    %2712 = vmatprep.mubr.bf16.mxu0 %v701
    %2713 = vmatmul.mubr.bf16.gmra.mrb[0].mxu0 %v699
    %v2714 = vpop.f32.mrb[0].mxu0
    %v2715 = vadd.f32 %v2675, %v2714
    %v2716 = vpop.f32.mrb[0].mxu0
    %v2717 = vpop.f32.mrb[0].mxu0
    %v2718 = vpop.f32.mrb[0].mxu0
    %2719 = vdwg.mxu0
    %2720 = vmatprep.subr.bf16.mxu0 0
    %2721 = vmatpush1.bf16.msra.mxu0 %v1968
    %2722 = vmatprep.subr.bf16.mxu0 0
    %2723 = vmatpush1.bf16.msra.mxu0 %v1969
    %2724 = vmatprep.subr.bf16.mxu0 0
    %2725 = vmatpush1.bf16.msra.mxu0 %v1970
    %2726 = vmatprep.subr.bf16.mxu0 0
    %2727 = vmatpush1.bf16.msra.mxu0 %v1971
    %2728 = vmatprep.subr.bf16.mxu0 0
    %2729 = vmatpush1.bf16.msra.mxu0 %v1972
    %2730 = vmatprep.subr.bf16.mxu0 0
    %2731 = vmatpush1.bf16.msra.mxu0 %v1973
    %2732 = vmatprep.subr.bf16.mxu0 0
    %2733 = vmatpush1.bf16.msra.mxu0 %v1974
    %2734 = vmatprep.subr.bf16.mxu0 0
    %2735 = vmatpush1.bf16.msra.mxu0 %v1975
    %2736 = vmatprep.subr.bf16.mxu0 0
    %2737 = vmatpush1.bf16.msra.mxu0 %v1976
    %2738 = vmatprep.subr.bf16.mxu0 0
    %2739 = vmatpush1.bf16.msra.mxu0 %v1977
    %2740 = vmatprep.subr.bf16.mxu0 0
    %2741 = vmatpush1.bf16.msra.mxu0 %v1978
    %2742 = vmatprep.subr.bf16.mxu0 0
    %2743 = vmatpush1.bf16.msra.mxu0 %v1979
    %2744 = vmatprep.subr.bf16.mxu0 0
    %2745 = vmatpush1.bf16.msra.mxu0 %v1980
    %2746 = vmatprep.subr.bf16.mxu0 0
    %2747 = vmatpush1.bf16.msra.mxu0 %v1981
    %2748 = vmatprep.subr.bf16.mxu0 0
    %2749 = vmatpush1.bf16.msra.mxu0 %v1982
    %2750 = vmatprep.subr.bf16.mxu0 0
    %2751 = vmatpush1.bf16.msra.mxu0 %v1983
    %2752 = vmatprep.mubr.bf16.mxu0 %v698
    %2753 = vmatmul.mubr.bf16.gmra.mrb[0].mxu0 %v684
    %v2754 = vpop.f32.mrb[0].mxu0
    %v2755 = vadd.f32 %v2715, %v2754
    %v2756 = vpop.f32.mrb[0].mxu0
    %v2757 = vpop.f32.mrb[0].mxu0
    %v2758 = vpop.f32.mrb[0].mxu0
    %2759 = vdwg.mxu0
    %2760 = vmatprep.subr.bf16.mxu0 0
    %2761 = vmatpush1.bf16.msra.mxu0 %v1984
    %2762 = vmatprep.subr.bf16.mxu0 0
    %2763 = vmatpush1.bf16.msra.mxu0 %v1985
    %2764 = vmatprep.subr.bf16.mxu0 0
    %2765 = vmatpush1.bf16.msra.mxu0 %v1986
    %2766 = vmatprep.subr.bf16.mxu0 0
    %2767 = vmatpush1.bf16.msra.mxu0 %v1987
    %2768 = vmatprep.subr.bf16.mxu0 0
    %2769 = vmatpush1.bf16.msra.mxu0 %v1988
    %2770 = vmatprep.subr.bf16.mxu0 0
    %2771 = vmatpush1.bf16.msra.mxu0 %v1989
    %2772 = vmatprep.subr.bf16.mxu0 0
    %2773 = vmatpush1.bf16.msra.mxu0 %v1990
    %2774 = vmatprep.subr.bf16.mxu0 0
    %2775 = vmatpush1.bf16.msra.mxu0 %v1991
    %2776 = vmatprep.subr.bf16.mxu0 0
    %2777 = vmatpush1.bf16.msra.mxu0 %v1992
    %2778 = vmatprep.subr.bf16.mxu0 0
    %2779 = vmatpush1.bf16.msra.mxu0 %v1993
    %2780 = vmatprep.subr.bf16.mxu0 0
    %2781 = vmatpush1.bf16.msra.mxu0 %v1994
    %2782 = vmatprep.subr.bf16.mxu0 0
    %2783 = vmatpush1.bf16.msra.mxu0 %v1995
    %2784 = vmatprep.subr.bf16.mxu0 0
    %2785 = vmatpush1.bf16.msra.mxu0 %v1996
    %2786 = vmatprep.subr.bf16.mxu0 0
    %2787 = vmatpush1.bf16.msra.mxu0 %v1997
    %2788 = vmatprep.subr.bf16.mxu0 0
    %2789 = vmatpush1.bf16.msra.mxu0 %v1998
    %2790 = vmatprep.subr.bf16.mxu0 0
    %2791 = vmatpush1.bf16.msra.mxu0 %v1999
    %2792 = vmatprep.mubr.bf16.mxu0 %v702
    %2793 = vmatmul.mubr.bf16.gmra.mrb[0].mxu0 %v700
    %v2794 = vpop.f32.mrb[0].mxu0
    %v2795 = vadd.f32 %v2755, %v2794
    %v2796 = vpop.f32.mrb[0].mxu0
    %v2797 = vpop.f32.mrb[0].mxu0
    %v2798 = vpop.f32.mrb[0].mxu0
    %2799 = vdwg.mxu0
    %2800 = vmatprep.subr.bf16.mxu0 0
    %2801 = vmatpush1.bf16.msra.mxu0 %v2000
    %2802 = vmatprep.subr.bf16.mxu0 0
    %2803 = vmatpush1.bf16.msra.mxu0 %v2001
    %2804 = vmatprep.subr.bf16.mxu0 0
    %2805 = vmatpush1.bf16.msra.mxu0 %v2002
    %2806 = vmatprep.subr.bf16.mxu0 0
    %2807 = vmatpush1.bf16.msra.mxu0 %v2003
    %2808 = vmatprep.subr.bf16.mxu0 0
    %2809 = vmatpush1.bf16.msra.mxu0 %v2004
    %2810 = vmatprep.subr.bf16.mxu0 0
    %2811 = vmatpush1.bf16.msra.mxu0 %v2005
    %2812 = vmatprep.subr.bf16.mxu0 0
    %2813 = vmatpush1.bf16.msra.mxu0 %v2006
    %2814 = vmatprep.subr.bf16.mxu0 0
    %2815 = vmatpush1.bf16.msra.mxu0 %v2007
    %2816 = vmatprep.subr.bf16.mxu0 0
    %2817 = vmatpush1.bf16.msra.mxu0 %v2008
    %2818 = vmatprep.subr.bf16.mxu0 0
    %2819 = vmatpush1.bf16.msra.mxu0 %v2009
    %2820 = vmatprep.subr.bf16.mxu0 0
    %2821 = vmatpush1.bf16.msra.mxu0 %v2010
    %2822 = vmatprep.subr.bf16.mxu0 0
    %2823 = vmatpush1.bf16.msra.mxu0 %v2011
    %2824 = vmatprep.subr.bf16.mxu0 0
    %2825 = vmatpush1.bf16.msra.mxu0 %v2012
    %2826 = vmatprep.subr.bf16.mxu0 0
    %2827 = vmatpush1.bf16.msra.mxu0 %v2013
    %2828 = vmatprep.subr.bf16.mxu0 0
    %2829 = vmatpush1.bf16.msra.mxu0 %v2014
    %2830 = vmatprep.subr.bf16.mxu0 0
    %2831 = vmatpush1.bf16.msra.mxu0 %v2015
    %2832 = vmatprep.mubr.bf16.mxu0 %v740
    %2833 = vmatmul.mubr.bf16.gmra.mrb[0].mxu0 %v726
    %v2834 = vpop.f32.mrb[0].mxu0
    %v2835 = vadd.f32 %v2795, %v2834
    %v2836 = vpop.f32.mrb[0].mxu0
    %v2837 = vpop.f32.mrb[0].mxu0
    %v2838 = vpop.f32.mrb[0].mxu0
    %2839 = vdwg.mxu0
    %2840 = vmatprep.subr.bf16.mxu0 0
    %2841 = vmatpush1.bf16.msra.mxu0 %v2016
    %2842 = vmatprep.subr.bf16.mxu0 0
    %2843 = vmatpush1.bf16.msra.mxu0 %v2017
    %2844 = vmatprep.subr.bf16.mxu0 0
    %2845 = vmatpush1.bf16.msra.mxu0 %v2018
    %2846 = vmatprep.subr.bf16.mxu0 0
    %2847 = vmatpush1.bf16.msra.mxu0 %v2019
    %2848 = vmatprep.subr.bf16.mxu0 0
    %2849 = vmatpush1.bf16.msra.mxu0 %v2020
    %2850 = vmatprep.subr.bf16.mxu0 0
    %2851 = vmatpush1.bf16.msra.mxu0 %v2021
    %2852 = vmatprep.subr.bf16.mxu0 0
    %2853 = vmatpush1.bf16.msra.mxu0 %v2022
    %2854 = vmatprep.subr.bf16.mxu0 0
    %2855 = vmatpush1.bf16.msra.mxu0 %v2023
    %2856 = vmatprep.subr.bf16.mxu0 0
    %2857 = vmatpush1.bf16.msra.mxu0 %v2024
    %2858 = vmatprep.subr.bf16.mxu0 0
    %2859 = vmatpush1.bf16.msra.mxu0 %v2025
    %2860 = vmatprep.subr.bf16.mxu0 0
    %2861 = vmatpush1.bf16.msra.mxu0 %v2026
    %2862 = vmatprep.subr.bf16.mxu0 0
    %2863 = vmatpush1.bf16.msra.mxu0 %v2027
    %2864 = vmatprep.subr.bf16.mxu0 0
    %2865 = vmatpush1.bf16.msra.mxu0 %v2028
    %2866 = vmatprep.subr.bf16.mxu0 0
    %2867 = vmatpush1.bf16.msra.mxu0 %v2029
    %2868 = vmatprep.subr.bf16.mxu0 0
    %2869 = vmatpush1.bf16.msra.mxu0 %v2030
    %2870 = vmatprep.subr.bf16.mxu0 0
    %2871 = vmatpush1.bf16.msra.mxu0 %v2031
    %2872 = vmatprep.mubr.bf16.mxu0 %v750
    %2873 = vmatmul.mubr.bf16.gmra.mrb[0].mxu0 %v748
    %v2874 = vpop.f32.mrb[0].mxu0
    %v2875 = vadd.f32 %v2835, %v2874
    %v2876 = vpop.f32.mrb[0].mxu0
    %v2877 = vpop.f32.mrb[0].mxu0
    %v2878 = vpop.f32.mrb[0].mxu0
    %2879 = vdwg.mxu0
    %2880 = vmatprep.subr.bf16.mxu0 0
    %2881 = vmatpush1.bf16.msra.mxu0 %v2032
    %2882 = vmatprep.subr.bf16.mxu0 0
    %2883 = vmatpush1.bf16.msra.mxu0 %v2033
    %2884 = vmatprep.subr.bf16.mxu0 0
    %2885 = vmatpush1.bf16.msra.mxu0 %v2034
    %2886 = vmatprep.subr.bf16.mxu0 0
    %2887 = vmatpush1.bf16.msra.mxu0 %v2035
    %2888 = vmatprep.subr.bf16.mxu0 0
    %2889 = vmatpush1.bf16.msra.mxu0 %v2036
    %2890 = vmatprep.subr.bf16.mxu0 0
    %2891 = vmatpush1.bf16.msra.mxu0 %v2037
    %2892 = vmatprep.subr.bf16.mxu0 0
    %2893 = vmatpush1.bf16.msra.mxu0 %v2038
    %2894 = vmatprep.subr.bf16.mxu0 0
    %2895 = vmatpush1.bf16.msra.mxu0 %v2039
    %2896 = vmatprep.subr.bf16.mxu0 0
    %2897 = vmatpush1.bf16.msra.mxu0 %v2040
    %2898 = vmatprep.subr.bf16.mxu0 0
    %2899 = vmatpush1.bf16.msra.mxu0 %v2041
    %2900 = vmatprep.subr.bf16.mxu0 0
    %2901 = vmatpush1.bf16.msra.mxu0 %v2042
    %2902 = vmatprep.subr.bf16.mxu0 0
    %2903 = vmatpush1.bf16.msra.mxu0 %v2043
    %2904 = vmatprep.subr.bf16.mxu0 0
    %2905 = vmatpush1.bf16.msra.mxu0 %v2044
    %2906 = vmatprep.subr.bf16.mxu0 0
    %2907 = vmatpush1.bf16.msra.mxu0 %v2045
    %2908 = vmatprep.subr.bf16.mxu0 0
    %2909 = vmatpush1.bf16.msra.mxu0 %v2046
    %2910 = vmatprep.subr.bf16.mxu0 0
    %2911 = vmatpush1.bf16.msra.mxu0 %v2047
    %2912 = vmatprep.mubr.bf16.mxu0 %v747
    %2913 = vmatmul.mubr.bf16.gmra.mrb[0].mxu0 %v733
    %v2914 = vpop.f32.mrb[0].mxu0
    %v2915 = vadd.f32 %v2875, %v2914
    %v2916 = vpop.f32.mrb[0].mxu0
    %v2917 = vpop.f32.mrb[0].mxu0
    %v2918 = vpop.f32.mrb[0].mxu0
    %2919 = vdwg.mxu0
    %2920 = vmatprep.subr.bf16.mxu0 0
    %2921 = vmatpush1.bf16.msra.mxu0 %v2048
    %2922 = vmatprep.subr.bf16.mxu0 0
    %2923 = vmatpush1.bf16.msra.mxu0 %v2049
    %2924 = vmatprep.subr.bf16.mxu0 0
    %2925 = vmatpush1.bf16.msra.mxu0 %v2050
    %2926 = vmatprep.subr.bf16.mxu0 0
    %2927 = vmatpush1.bf16.msra.mxu0 %v2051
    %2928 = vmatprep.subr.bf16.mxu0 0
    %2929 = vmatpush1.bf16.msra.mxu0 %v2052
    %2930 = vmatprep.subr.bf16.mxu0 0
    %2931 = vmatpush1.bf16.msra.mxu0 %v2053
    %2932 = vmatprep.subr.bf16.mxu0 0
    %2933 = vmatpush1.bf16.msra.mxu0 %v2054
    %2934 = vmatprep.subr.bf16.mxu0 0
    %2935 = vmatpush1.bf16.msra.mxu0 %v2055
    %2936 = vmatprep.subr.bf16.mxu0 0
    %2937 = vmatpush1.bf16.msra.mxu0 %v2056
    %2938 = vmatprep.subr.bf16.mxu0 0
    %2939 = vmatpush1.bf16.msra.mxu0 %v2057
    %2940 = vmatprep.subr.bf16.mxu0 0
    %2941 = vmatpush1.bf16.msra.mxu0 %v2058
    %2942 = vmatprep.subr.bf16.mxu0 0
    %2943 = vmatpush1.bf16.msra.mxu0 %v2059
    %2944 = vmatprep.subr.bf16.mxu0 0
    %2945 = vmatpush1.bf16.msra.mxu0 %v2060
    %2946 = vmatprep.subr.bf16.mxu0 0
    %2947 = vmatpush1.bf16.msra.mxu0 %v2061
    %2948 = vmatprep.subr.bf16.mxu0 0
    %2949 = vmatpush1.bf16.msra.mxu0 %v2062
    %2950 = vmatprep.subr.bf16.mxu0 0
    %2951 = vmatpush1.bf16.msra.mxu0 %v2063
    %2952 = vmatprep.mubr.bf16.mxu0 %v751
    %2953 = vmatmul.mubr.bf16.gmra.mrb[0].mxu0 %v749
    %v2954 = vpop.f32.mrb[0].mxu0
    %v2955 = vadd.f32 %v2915, %v2954
    %v2956 = vpop.f32.mrb[0].mxu0
    %v2957 = vpop.f32.mrb[0].mxu0
    %v2958 = vpop.f32.mrb[0].mxu0
    %2959 = vdwg.mxu0
    %v2960 = vmax.f32 %v2955, 0.0
    %v2961 = vpack.c.bf16 %v2960, %v2960
    %2962 = vst [vmem:[%s3] sm:$0x1] %v2961
    // Predicated region
    $region18: #{basic_conv_net_forward.8} parent=1 // pred_check
      _
    $region19: #{basic_conv_net_forward.8} parent=1 // pred_check_branch
      %2964 = sbr.rel (0) target = $region21
    $region20: #{basic_conv_net_forward.8} parent=1 // pred_region
      _
    $region21: #{basic_conv_net_forward.8} parent=1 // pred_fallthru
      _
    // Predicated region
    $region22: #{basic_conv_net_forward.8} parent=1 // pred_check
      _
    $region23: #{basic_conv_net_forward.8} parent=1 // pred_check_branch
      %2966 = sbr.rel (0) target = $region25
    $region24: #{basic_conv_net_forward.8} parent=1 // pred_region
      _
    $region25: #{basic_conv_net_forward.8} parent=1 // pred_fallthru
      _
    %2967 = vsyncpa [#allocation3], 1

</llo_original>
